<compile_context>
chip_gen: v6e
topology: v6e:2x2x1
jax: 0.10.0
libtpu: 0.0.40
codegen_flags: <defaults>
</compile_context>

<pallas_src>
import functools

import jax
import jax.numpy as jnp
from jax import lax
from jax.experimental import pallas as pl
from jax.experimental.pallas import tpu as pltpu


def _round_up(x, m):
    return ((x + m - 1) // m) * m


# ----------------------------------------------------------------------------
# Pallas kernel: single-shot transposed matmul + bias + activation.
#   out (Cout_p, tm) = W (Cout_p, K_p) @ P (K_p, tm) + b ; act ; cast
# K fits in one block for every layer of this network, so there is no k-grid,
# no accumulator scratch and no pl.when phases.
# ----------------------------------------------------------------------------
def _convmm_kernel(act, w_ref, p_ref, b_ref, o_ref):
    acc = jnp.dot(w_ref[...], p_ref[...], preferred_element_type=jnp.float32)
    acc = acc + b_ref[...]                       # (Cout_p, 1) broadcast, f32
    if act == "relu":
        acc = jnp.maximum(acc, 0.0)
    elif act == "elu":
        # ELU(alpha=1): x if x>0 else exp(x)-1 (clamp arg to avoid overflow)
        acc = jnp.where(acc > 0.0, acc, jnp.exp(jnp.minimum(acc, 0.0)) - 1.0)
    elif act == "sigmoid":
        acc = 1.0 / (1.0 + jnp.exp(-acc))        # exact sigmoid (final disp)
    o_ref[...] = acc.astype(o_ref.dtype)


def _conv_matmul_t(w_t, b_col, patches_t, act, out_dtype):
    """w_t: (Cout_p, K_p) bf16; b_col: (Cout_p, 1) f32; patches_t: (K_p, M_p) bf16.
    Returns (Cout_p, M_p) in out_dtype."""
    cout_p, k_p = w_t.shape
    k_p2, m_p = patches_t.shape
    assert k_p == k_p2

    # Lane tile over M: prefer >= 2 tiles when possible so v7x's second
    # TensorCore gets work; tiles stay multiples of 128 lanes.
    tm = m_p
    for cand in (512, 384, 256, 128):
        if m_p % cand == 0 and m_p // cand >= 2:
            tm = cand
            break

    return pl.pallas_call(
        functools.partial(_convmm_kernel, act),
        out_shape=jax.ShapeDtypeStruct((cout_p, m_p), out_dtype),
        grid=(m_p // tm,),
        in_specs=[
            pl.BlockSpec((cout_p, k_p), lambda i: (0, 0)),   # whole weight
            pl.BlockSpec((k_p, tm), lambda i: (0, i)),       # M lane-tile
            pl.BlockSpec((cout_p, 1), lambda i: (0, 0)),     # bias column
        ],
        out_specs=pl.BlockSpec((cout_p, tm), lambda i: (0, i)),
        compiler_params=pltpu.CompilerParams(
            dimension_semantics=("parallel",)
        ),
    )(w_t, patches_t, b_col)


# ----------------------------------------------------------------------------
# Conv2d = im2col (XLA glue, inside jit, channel-major) + Pallas matmul^T
# ----------------------------------------------------------------------------
def conv2d(x, w_t, b_col, cout, *, stride=1, act="none", pad_mode="zero",
           out_dtype=jnp.bfloat16):
    """x: (Cin, N, H, W) channel-major; w_t: (Cout_p, K_p) bf16 with K index
    (dh*3+dw)*Cin + ci; b_col: (Cout_p, 1) f32.  3x3 'same' conv.
    Returns (cout, N, Ho, Wo) in out_dtype."""
    cin, n, h, wd = x.shape
    kh = kw = 3
    ph = pw = 1
    k = kh * kw * cin
    cout_p, k_p = w_t.shape
    assert k <= k_p and cout <= cout_p

    mode = "reflect" if pad_mode == "reflect" else "constant"
    xp = jnp.pad(x, ((0, 0), (0, 0), (ph, ph), (pw, pw)), mode=mode)
    ho = (h + 2 * ph - kh) // stride + 1
    wo = (wd + 2 * pw - kw) // stride + 1

    # TODO(synk): im2col is still XLA glue (9 shifted slices); an in-kernel
    #             roll/halo formulation would cut activation HBM reads ~9x at
    #             large img_hw.
    taps = []
    for dh in range(kh):
        for dw in range(kw):
            sl = lax.slice(
                xp,
                (0, 0, dh, dw),
                (cin, n, dh + (ho - 1) * stride + 1, dw + (wo - 1) * stride + 1),
                (1, 1, stride, stride),
            )
            taps.append(sl)                       # (Cin, N, Ho, Wo)
    m = n * ho * wo
    p = jnp.stack(taps, axis=0).reshape(k, m).astype(jnp.bfloat16)
    m_p = _round_up(m, 128)
    p = jnp.pad(p, ((0, k_p - k), (0, m_p - m)))  # zero pad K (sublanes), M (lanes)

    out = _conv_matmul_t(w_t, b_col, p, act, out_dtype)   # (Cout_p, M_p)
    return out[:cout, :m].reshape(cout, n, ho, wo)


def upsample2x(x):
    """Nearest-neighbor x2 (F.interpolate mode='nearest') on (C, N, H, W)."""
    return jnp.repeat(jnp.repeat(x, 2, axis=2), 2, axis=3)


# ----------------------------------------------------------------------------
# Deterministic parameter init: transpose/pad/cast ONCE, outside jit.
# ----------------------------------------------------------------------------
def _init_layer(key, cin, cout):
    k1, k2 = jax.random.split(key)
    fan_in = float(3 * 3 * cin)
    w = jax.random.normal(k1, (3, 3, cin, cout), jnp.float32) / jnp.sqrt(fan_in)
    b = 0.01 * jax.random.normal(k2, (cout,), jnp.float32)
    k = 3 * 3 * cin
    k_p = _round_up(k, 128)
    cout_p = _round_up(cout, 8)
    # (kh,kw,Cin,Cout) -> (Cout, K) with K index = (dh*3+dw)*Cin + ci.
    w_t = jnp.transpose(w, (3, 0, 1, 2)).reshape(cout, k)
    w_t = jnp.pad(w_t, ((0, cout_p - cout), (0, k_p - k))).astype(jnp.bfloat16)
    b_col = jnp.pad(b.reshape(cout, 1), ((0, cout_p - cout), (0, 0)))
    return {"w": w_t, "b": b_col.astype(jnp.float32)}


# ----------------------------------------------------------------------------
# Pure forward (jitted once per input shape)
# ----------------------------------------------------------------------------
def _forward(params, x_nchw, *, num_ch_enc, num_ch_dec, depth_scale):
    # NCHW input -> channel-major (C, N, H, W); bf16 activations, f32 epilogue.
    x = jnp.transpose(x_nchw, (1, 0, 2, 3)).astype(jnp.bfloat16)

    # --- encoder: stride-2 conv + ReLU stages -> multi-scale features ---
    feats = []
    h = x
    for li, cout in enumerate(num_ch_enc):
        lyr = params["enc"][li]
        h = conv2d(h, lyr["w"], lyr["b"], cout,
                   stride=2, act="relu", pad_mode="zero")
        feats.append(h)

    # --- decoder (monodepth2 style, reflection padding) ---
    # TODO(synk): each level still issues separate pallas_calls with XLA
    #             upsample/concat glue (not one fused VMEM-resident kernel).
    outputs = {}
    n_lv = len(num_ch_enc)
    h = feats[-1]
    for i in range(n_lv - 1, -1, -1):
        l0 = params["upconv0"][i]
        h = conv2d(h, l0["w"], l0["b"], num_ch_dec[i],
                   stride=1, act="elu", pad_mode="reflect")
        h = upsample2x(h)
        if i > 0:
            h = jnp.concatenate([h, feats[i - 1]], axis=0)
        l1 = params["upconv1"][i]
        h = conv2d(h, l1["w"], l1["b"], num_ch_dec[i],
                   stride=1, act="elu", pad_mode="reflect")
        if i < depth_scale:
            ld = params["dispconv"][i]
            d = conv2d(h, ld["w"], ld["b"], 1,
                       stride=1, act="sigmoid", pad_mode="reflect",
                       out_dtype=jnp.float32)
            outputs[i] = jnp.transpose(d, (1, 0, 2, 3))   # -> NCHW

    # matches Depth_Model.forward: list of disparities for scales 0..S-1
    return [outputs[i] for i in range(depth_scale)]


# ----------------------------------------------------------------------------
# Depth_Model equivalent
# ----------------------------------------------------------------------------
class DepthModelPallas:
    def __init__(self, key, depth_scale=3, in_chans=3):
        self.depth_scale = depth_scale
        self.num_ch_enc = [8, 16, 32]
        self.num_ch_dec = [8, 16, 32]
        keys = iter(jax.random.split(key, 64))

        enc = []
        cin = in_chans
        for cout in self.num_ch_enc:
            enc.append(_init_layer(next(keys), cin, cout))
            cin = cout

        n = len(self.num_ch_enc)
        upconv0, upconv1, dispconv = {}, {}, {}
        for i in range(n - 1, -1, -1):
            cin0 = self.num_ch_enc[-1] if i == n - 1 else self.num_ch_dec[i + 1]
            cout0 = self.num_ch_dec[i]
            upconv0[i] = _init_layer(next(keys), cin0, cout0)
            cin1 = cout0 + (self.num_ch_enc[i - 1] if i > 0 else 0)
            upconv1[i] = _init_layer(next(keys), cin1, self.num_ch_dec[i])
            if i < self.depth_scale:
                dispconv[i] = _init_layer(next(keys), self.num_ch_dec[i], 1)

        self.params = {"enc": enc, "upconv0": upconv0,
                       "upconv1": upconv1, "dispconv": dispconv}
        # jit the whole forward: one XLA graph, no per-conv host dispatch.
        self._fwd = jax.jit(functools.partial(
            _forward,
            num_ch_enc=tuple(self.num_ch_enc),
            num_ch_dec=tuple(self.num_ch_dec),
            depth_scale=self.depth_scale))

    def __call__(self, x_nchw):
        return self._fwd(self.params, x_nchw)


# ----------------------------------------------------------------------------
if __name__ == "__main__":
    key = jax.random.PRNGKey(0)
    kparam, kx = jax.random.split(key)

    # cfg: depth_scale=3, img_hw=(16,16); input is NCHW (batch=2, 3 channels).
    model = DepthModelPallas(kparam, depth_scale=3, in_chans=3)
    x = jax.random.normal(kx, (2, 3, 16, 16), jnp.float32)

    disp_list = model(x)
    for d in disp_list:
        jax.block_until_ready(d)

    assert disp_list[0].shape == (2, 1, 16, 16)
    assert disp_list[1].shape == (2, 1, 8, 8)
    assert disp_list[2].shape == (2, 1, 4, 4)
    assert all(bool(jnp.all((d >= 0.0) & (d <= 1.0))) for d in disp_list)  # sigmoid range
    print("KERNEL_OK")
</pallas_src>

<mosaic_0001>
module attributes {stable_mosaic.version = 11 : i64} {
  func.func @_convmm_kernel(%arg0: i32, %arg1: memref<8x128xbf16, #tpu.memory_space<vmem>>, %arg2: memref<128x128xbf16, #tpu.memory_space<vmem>>, %arg3: memref<8x1xf32, #tpu.memory_space<vmem>>, %arg4: memref<8x128xbf16, #tpu.memory_space<vmem>>) attributes {dimension_semantics = [#tpu.dimension_semantics<parallel>], iteration_bounds = array<i64: 1>, scalar_prefetch = 0 : i64, scratch_operands = 0 : i64, tpu.core_type = #tpu.core_type<tc>, window_params = [{pipeline_mode = #tpu.pipeline_mode<synchronous>, transform_indices = @transform_0, window_bounds = array<i64: 8, 128>}, {transform_indices = @transform_1, window_bounds = array<i64: 128, 128>}, {pipeline_mode = #tpu.pipeline_mode<synchronous>, transform_indices = @transform_2, window_bounds = array<i64: 8, 1>}, {transform_indices = @transform_3, window_bounds = array<i64: 8, 128>}]} {
    %c0 = arith.constant 0 : index
    %c0_0 = arith.constant 0 : index
    %0 = vector.load %arg1[%c0, %c0_0] : memref<8x128xbf16, #tpu.memory_space<vmem>>, vector<8x128xbf16>
    %c0_1 = arith.constant 0 : index
    %c0_2 = arith.constant 0 : index
    %1 = vector.load %arg2[%c0_1, %c0_2] : memref<128x128xbf16, #tpu.memory_space<vmem>>, vector<128x128xbf16>
    %cst = arith.constant dense<0.000000e+00> : vector<8x128xf32>
    %2 = tpu.matmul %0, %1, %cst {dimension_numbers = #tpu.dot_dimension_numbers<[1], [0], [0], [1], [0, 0, 1, 1], [], []>} : vector<8x128xbf16>, vector<128x128xbf16>, vector<8x128xf32> -> vector<8x128xf32>
    %c0_3 = arith.constant 0 : index
    %c0_4 = arith.constant 0 : index
    %3 = vector.load %arg3[%c0_3, %c0_4] : memref<8x1xf32, #tpu.memory_space<vmem>>, vector<8x1xf32>
    %4 = vector.broadcast %3 : vector<8x1xf32> to vector<8x128xf32>
    %5 = arith.addf %2, %4 : vector<8x128xf32>
    %cst_5 = arith.constant 0.000000e+00 : f32
    %6 = vector.broadcast %cst_5 : f32 to vector<8x128xf32>
    %7 = arith.maximumf %5, %6 : vector<8x128xf32>
    %8 = arith.truncf %7 : vector<8x128xf32> to vector<8x128xbf16>
    %c0_6 = arith.constant 0 : index
    %c0_7 = arith.constant 0 : index
    %9 = vector.load %arg4[%c0_6, %c0_7] : memref<8x128xbf16, #tpu.memory_space<vmem>>, vector<8x128xbf16>
    tpu.vector_store %arg4[%c0_6, %c0_7], %8 {strides = array<i32>} : memref<8x128xbf16, #tpu.memory_space<vmem>>, vector<8x128xbf16>,
    return
  }
  func.func @transform_0(%arg0: i32) -> (i32, i32) {
    %c0_i32 = arith.constant 0 : i32
    %c0_i32_0 = arith.constant 0 : i32
    %c0_i32_1 = arith.constant 0 : i32
    return %c0_i32, %c0_i32_0 : i32, i32
  }
  func.func @transform_1(%arg0: i32) -> (i32, i32) {
    %c0_i32 = arith.constant 0 : i32
    %c0_i32_0 = arith.constant 0 : i32
    return %c0_i32, %arg0 : i32, i32
  }
  func.func @transform_2(%arg0: i32) -> (i32, i32) {
    %c0_i32 = arith.constant 0 : i32
    %c0_i32_0 = arith.constant 0 : i32
    %c0_i32_1 = arith.constant 0 : i32
    return %c0_i32, %c0_i32_0 : i32, i32
  }
  func.func @transform_3(%arg0: i32) -> (i32, i32) {
    %c0_i32 = arith.constant 0 : i32
    %c0_i32_0 = arith.constant 0 : i32
    return %c0_i32, %arg0 : i32, i32
  }
}

module attributes {stable_mosaic.version = 11 : i64} {
  func.func @_convmm_kernel(%arg0: i32, %arg1: memref<16x128xbf16, #tpu.memory_space<vmem>>, %arg2: memref<128x128xbf16, #tpu.memory_space<vmem>>, %arg3: memref<16x1xf32, #tpu.memory_space<vmem>>, %arg4: memref<16x128xbf16, #tpu.memory_space<vmem>>) attributes {dimension_semantics = [#tpu.dimension_semantics<parallel>], iteration_bounds = array<i64: 1>, scalar_prefetch = 0 : i64, scratch_operands = 0 : i64, tpu.core_type = #tpu.core_type<tc>, window_params = [{pipeline_mode = #tpu.pipeline_mode<synchronous>, transform_indices = @transform_0, window_bounds = array<i64: 16, 128>}, {transform_indices = @transform_1, window_bounds = array<i64: 128, 128>}, {pipeline_mode = #tpu.pipeline_mode<synchronous>, transform_indices = @transform_2, window_bounds = array<i64: 16, 1>}, {transform_indices = @transform_3, window_bounds = array<i64: 16, 128>}]} {
    %c0 = arith.constant 0 : index
    %c0_0 = arith.constant 0 : index
    %0 = vector.load %arg1[%c0, %c0_0] : memref<16x128xbf16, #tpu.memory_space<vmem>>, vector<16x128xbf16>
    %c0_1 = arith.constant 0 : index
    %c0_2 = arith.constant 0 : index
    %1 = vector.load %arg2[%c0_1, %c0_2] : memref<128x128xbf16, #tpu.memory_space<vmem>>, vector<128x128xbf16>
    %cst = arith.constant dense<0.000000e+00> : vector<16x128xf32>
    %2 = tpu.matmul %0, %1, %cst {dimension_numbers = #tpu.dot_dimension_numbers<[1], [0], [0], [1], [0, 0, 1, 1], [], []>} : vector<16x128xbf16>, vector<128x128xbf16>, vector<16x128xf32> -> vector<16x128xf32>
    %c0_3 = arith.constant 0 : index
    %c0_4 = arith.constant 0 : index
    %3 = vector.load %arg3[%c0_3, %c0_4] : memref<16x1xf32, #tpu.memory_space<vmem>>, vector<16x1xf32>
    %4 = vector.broadcast %3 : vector<16x1xf32> to vector<16x128xf32>
    %5 = arith.addf %2, %4 : vector<16x128xf32>
    %cst_5 = arith.constant 0.000000e+00 : f32
    %6 = vector.broadcast %cst_5 : f32 to vector<16x128xf32>
    %7 = arith.maximumf %5, %6 : vector<16x128xf32>
    %8 = arith.truncf %7 : vector<16x128xf32> to vector<16x128xbf16>
    %c0_6 = arith.constant 0 : index
    %c0_7 = arith.constant 0 : index
    %9 = vector.load %arg4[%c0_6, %c0_7] : memref<16x128xbf16, #tpu.memory_space<vmem>>, vector<16x128xbf16>
    tpu.vector_store %arg4[%c0_6, %c0_7], %8 {strides = array<i32>} : memref<16x128xbf16, #tpu.memory_space<vmem>>, vector<16x128xbf16>,
    return
  }
  func.func @transform_0(%arg0: i32) -> (i32, i32) {
    %c0_i32 = arith.constant 0 : i32
    %c0_i32_0 = arith.constant 0 : i32
    %c0_i32_1 = arith.constant 0 : i32
    return %c0_i32, %c0_i32_0 : i32, i32
  }
  func.func @transform_1(%arg0: i32) -> (i32, i32) {
    %c0_i32 = arith.constant 0 : i32
    %c0_i32_0 = arith.constant 0 : i32
    return %c0_i32, %arg0 : i32, i32
  }
  func.func @transform_2(%arg0: i32) -> (i32, i32) {
    %c0_i32 = arith.constant 0 : i32
    %c0_i32_0 = arith.constant 0 : i32
    %c0_i32_1 = arith.constant 0 : i32
    return %c0_i32, %c0_i32_0 : i32, i32
  }
  func.func @transform_3(%arg0: i32) -> (i32, i32) {
    %c0_i32 = arith.constant 0 : i32
    %c0_i32_0 = arith.constant 0 : i32
    return %c0_i32, %arg0 : i32, i32
  }
}

module attributes {stable_mosaic.version = 11 : i64} {
  func.func @_convmm_kernel(%arg0: i32, %arg1: memref<32x256xbf16, #tpu.memory_space<vmem>>, %arg2: memref<256x128xbf16, #tpu.memory_space<vmem>>, %arg3: memref<32x1xf32, #tpu.memory_space<vmem>>, %arg4: memref<32x128xbf16, #tpu.memory_space<vmem>>) attributes {dimension_semantics = [#tpu.dimension_semantics<parallel>], iteration_bounds = array<i64: 1>, scalar_prefetch = 0 : i64, scratch_operands = 0 : i64, tpu.core_type = #tpu.core_type<tc>, window_params = [{pipeline_mode = #tpu.pipeline_mode<synchronous>, transform_indices = @transform_0, window_bounds = array<i64: 32, 256>}, {transform_indices = @transform_1, window_bounds = array<i64: 256, 128>}, {pipeline_mode = #tpu.pipeline_mode<synchronous>, transform_indices = @transform_2, window_bounds = array<i64: 32, 1>}, {transform_indices = @transform_3, window_bounds = array<i64: 32, 128>}]} {
    %c0 = arith.constant 0 : index
    %c0_0 = arith.constant 0 : index
    %0 = vector.load %arg1[%c0, %c0_0] : memref<32x256xbf16, #tpu.memory_space<vmem>>, vector<32x256xbf16>
    %c0_1 = arith.constant 0 : index
    %c0_2 = arith.constant 0 : index
    %1 = vector.load %arg2[%c0_1, %c0_2] : memref<256x128xbf16, #tpu.memory_space<vmem>>, vector<256x128xbf16>
    %cst = arith.constant dense<0.000000e+00> : vector<32x128xf32>
    %2 = tpu.matmul %0, %1, %cst {dimension_numbers = #tpu.dot_dimension_numbers<[1], [0], [0], [1], [0, 0, 1, 1], [], []>} : vector<32x256xbf16>, vector<256x128xbf16>, vector<32x128xf32> -> vector<32x128xf32>
    %c0_3 = arith.constant 0 : index
    %c0_4 = arith.constant 0 : index
    %3 = vector.load %arg3[%c0_3, %c0_4] : memref<32x1xf32, #tpu.memory_space<vmem>>, vector<32x1xf32>
    %4 = vector.broadcast %3 : vector<32x1xf32> to vector<32x128xf32>
    %5 = arith.addf %2, %4 : vector<32x128xf32>
    %cst_5 = arith.constant 0.000000e+00 : f32
    %6 = vector.broadcast %cst_5 : f32 to vector<32x128xf32>
    %7 = arith.maximumf %5, %6 : vector<32x128xf32>
    %8 = arith.truncf %7 : vector<32x128xf32> to vector<32x128xbf16>
    %c0_6 = arith.constant 0 : index
    %c0_7 = arith.constant 0 : index
    %9 = vector.load %arg4[%c0_6, %c0_7] : memref<32x128xbf16, #tpu.memory_space<vmem>>, vector<32x128xbf16>
    tpu.vector_store %arg4[%c0_6, %c0_7], %8 {strides = array<i32>} : memref<32x128xbf16, #tpu.memory_space<vmem>>, vector<32x128xbf16>,
    return
  }
  func.func @transform_0(%arg0: i32) -> (i32, i32) {
    %c0_i32 = arith.constant 0 : i32
    %c0_i32_0 = arith.constant 0 : i32
    %c0_i32_1 = arith.constant 0 : i32
    return %c0_i32, %c0_i32_0 : i32, i32
  }
  func.func @transform_1(%arg0: i32) -> (i32, i32) {
    %c0_i32 = arith.constant 0 : i32
    %c0_i32_0 = arith.constant 0 : i32
    return %c0_i32, %arg0 : i32, i32
  }
  func.func @transform_2(%arg0: i32) -> (i32, i32) {
    %c0_i32 = arith.constant 0 : i32
    %c0_i32_0 = arith.constant 0 : i32
    %c0_i32_1 = arith.constant 0 : i32
    return %c0_i32, %c0_i32_0 : i32, i32
  }
  func.func @transform_3(%arg0: i32) -> (i32, i32) {
    %c0_i32 = arith.constant 0 : i32
    %c0_i32_0 = arith.constant 0 : i32
    return %c0_i32, %arg0 : i32, i32
  }
}

module attributes {stable_mosaic.version = 11 : i64} {
  func.func @_convmm_kernel(%arg0: i32, %arg1: memref<32x384xbf16, #tpu.memory_space<vmem>>, %arg2: memref<384x128xbf16, #tpu.memory_space<vmem>>, %arg3: memref<32x1xf32, #tpu.memory_space<vmem>>, %arg4: memref<32x128xbf16, #tpu.memory_space<vmem>>) attributes {dimension_semantics = [#tpu.dimension_semantics<parallel>], iteration_bounds = array<i64: 1>, scalar_prefetch = 0 : i64, scratch_operands = 0 : i64, tpu.core_type = #tpu.core_type<tc>, window_params = [{pipeline_mode = #tpu.pipeline_mode<synchronous>, transform_indices = @transform_0, window_bounds = array<i64: 32, 384>}, {transform_indices = @transform_1, window_bounds = array<i64: 384, 128>}, {pipeline_mode = #tpu.pipeline_mode<synchronous>, transform_indices = @transform_2, window_bounds = array<i64: 32, 1>}, {transform_indices = @transform_3, window_bounds = array<i64: 32, 128>}]} {
    %c0 = arith.constant 0 : index
    %c0_0 = arith.constant 0 : index
    %0 = vector.load %arg1[%c0, %c0_0] : memref<32x384xbf16, #tpu.memory_space<vmem>>, vector<32x384xbf16>
    %c0_1 = arith.constant 0 : index
    %c0_2 = arith.constant 0 : index
    %1 = vector.load %arg2[%c0_1, %c0_2] : memref<384x128xbf16, #tpu.memory_space<vmem>>, vector<384x128xbf16>
    %cst = arith.constant dense<0.000000e+00> : vector<32x128xf32>
    %2 = tpu.matmul %0, %1, %cst {dimension_numbers = #tpu.dot_dimension_numbers<[1], [0], [0], [1], [0, 0, 1, 1], [], []>} : vector<32x384xbf16>, vector<384x128xbf16>, vector<32x128xf32> -> vector<32x128xf32>
    %c0_3 = arith.constant 0 : index
    %c0_4 = arith.constant 0 : index
    %3 = vector.load %arg3[%c0_3, %c0_4] : memref<32x1xf32, #tpu.memory_space<vmem>>, vector<32x1xf32>
    %4 = vector.broadcast %3 : vector<32x1xf32> to vector<32x128xf32>
    %5 = arith.addf %2, %4 : vector<32x128xf32>
    %cst_5 = arith.constant 0.000000e+00 : f32
    %6 = vector.broadcast %cst_5 : f32 to vector<32x128xf32>
    %7 = arith.cmpf ogt, %5, %6 : vector<32x128xf32>
    %cst_6 = arith.constant 0.000000e+00 : f32
    %8 = vector.broadcast %cst_6 : f32 to vector<32x128xf32>
    %9 = arith.minimumf %5, %8 : vector<32x128xf32>
    %10 = math.exp %9 : vector<32x128xf32>
    %cst_7 = arith.constant 1.000000e+00 : f32
    %11 = vector.broadcast %cst_7 : f32 to vector<32x128xf32>
    %12 = arith.subf %10, %11 : vector<32x128xf32>
    %13 = arith.select %7, %5, %12 : vector<32x128xi1>, vector<32x128xf32>
    %14 = arith.truncf %13 : vector<32x128xf32> to vector<32x128xbf16>
    %c0_8 = arith.constant 0 : index
    %c0_9 = arith.constant 0 : index
    %15 = vector.load %arg4[%c0_8, %c0_9] : memref<32x128xbf16, #tpu.memory_space<vmem>>, vector<32x128xbf16>
    tpu.vector_store %arg4[%c0_8, %c0_9], %14 {strides = array<i32>} : memref<32x128xbf16, #tpu.memory_space<vmem>>, vector<32x128xbf16>,
    return
  }
  func.func @transform_0(%arg0: i32) -> (i32, i32) {
    %c0_i32 = arith.constant 0 : i32
    %c0_i32_0 = arith.constant 0 : i32
    %c0_i32_1 = arith.constant 0 : i32
    return %c0_i32, %c0_i32_0 : i32, i32
  }
  func.func @transform_1(%arg0: i32) -> (i32, i32) {
    %c0_i32 = arith.constant 0 : i32
    %c0_i32_0 = arith.constant 0 : i32
    return %c0_i32, %arg0 : i32, i32
  }
  func.func @transform_2(%arg0: i32) -> (i32, i32) {
    %c0_i32 = arith.constant 0 : i32
    %c0_i32_0 = arith.constant 0 : i32
    %c0_i32_1 = arith.constant 0 : i32
    return %c0_i32, %c0_i32_0 : i32, i32
  }
  func.func @transform_3(%arg0: i32) -> (i32, i32) {
    %c0_i32 = arith.constant 0 : i32
    %c0_i32_0 = arith.constant 0 : i32
    return %c0_i32, %arg0 : i32, i32
  }
}

module attributes {stable_mosaic.version = 11 : i64} {
  func.func @_convmm_kernel(%arg0: i32, %arg1: memref<32x512xbf16, #tpu.memory_space<vmem>>, %arg2: memref<512x128xbf16, #tpu.memory_space<vmem>>, %arg3: memref<32x1xf32, #tpu.memory_space<vmem>>, %arg4: memref<32x128xbf16, #tpu.memory_space<vmem>>) attributes {dimension_semantics = [#tpu.dimension_semantics<parallel>], iteration_bounds = array<i64: 1>, scalar_prefetch = 0 : i64, scratch_operands = 0 : i64, tpu.core_type = #tpu.core_type<tc>, window_params = [{pipeline_mode = #tpu.pipeline_mode<synchronous>, transform_indices = @transform_0, window_bounds = array<i64: 32, 512>}, {transform_indices = @transform_1, window_bounds = array<i64: 512, 128>}, {pipeline_mode = #tpu.pipeline_mode<synchronous>, transform_indices = @transform_2, window_bounds = array<i64: 32, 1>}, {transform_indices = @transform_3, window_bounds = array<i64: 32, 128>}]} {
    %c0 = arith.constant 0 : index
    %c0_0 = arith.constant 0 : index
    %0 = vector.load %arg1[%c0, %c0_0] : memref<32x512xbf16, #tpu.memory_space<vmem>>, vector<32x512xbf16>
    %c0_1 = arith.constant 0 : index
    %c0_2 = arith.constant 0 : index
    %1 = vector.load %arg2[%c0_1, %c0_2] : memref<512x128xbf16, #tpu.memory_space<vmem>>, vector<512x128xbf16>
    %cst = arith.constant dense<0.000000e+00> : vector<32x128xf32>
    %2 = tpu.matmul %0, %1, %cst {dimension_numbers = #tpu.dot_dimension_numbers<[1], [0], [0], [1], [0, 0, 1, 1], [], []>} : vector<32x512xbf16>, vector<512x128xbf16>, vector<32x128xf32> -> vector<32x128xf32>
    %c0_3 = arith.constant 0 : index
    %c0_4 = arith.constant 0 : index
    %3 = vector.load %arg3[%c0_3, %c0_4] : memref<32x1xf32, #tpu.memory_space<vmem>>, vector<32x1xf32>
    %4 = vector.broadcast %3 : vector<32x1xf32> to vector<32x128xf32>
    %5 = arith.addf %2, %4 : vector<32x128xf32>
    %cst_5 = arith.constant 0.000000e+00 : f32
    %6 = vector.broadcast %cst_5 : f32 to vector<32x128xf32>
    %7 = arith.cmpf ogt, %5, %6 : vector<32x128xf32>
    %cst_6 = arith.constant 0.000000e+00 : f32
    %8 = vector.broadcast %cst_6 : f32 to vector<32x128xf32>
    %9 = arith.minimumf %5, %8 : vector<32x128xf32>
    %10 = math.exp %9 : vector<32x128xf32>
    %cst_7 = arith.constant 1.000000e+00 : f32
    %11 = vector.broadcast %cst_7 : f32 to vector<32x128xf32>
    %12 = arith.subf %10, %11 : vector<32x128xf32>
    %13 = arith.select %7, %5, %12 : vector<32x128xi1>, vector<32x128xf32>
    %14 = arith.truncf %13 : vector<32x128xf32> to vector<32x128xbf16>
    %c0_8 = arith.constant 0 : index
    %c0_9 = arith.constant 0 : index
    %15 = vector.load %arg4[%c0_8, %c0_9] : memref<32x128xbf16, #tpu.memory_space<vmem>>, vector<32x128xbf16>
    tpu.vector_store %arg4[%c0_8, %c0_9], %14 {strides = array<i32>} : memref<32x128xbf16, #tpu.memory_space<vmem>>, vector<32x128xbf16>,
    return
  }
  func.func @transform_0(%arg0: i32) -> (i32, i32) {
    %c0_i32 = arith.constant 0 : i32
    %c0_i32_0 = arith.constant 0 : i32
    %c0_i32_1 = arith.constant 0 : i32
    return %c0_i32, %c0_i32_0 : i32, i32
  }
  func.func @transform_1(%arg0: i32) -> (i32, i32) {
    %c0_i32 = arith.constant 0 : i32
    %c0_i32_0 = arith.constant 0 : i32
    return %c0_i32, %arg0 : i32, i32
  }
  func.func @transform_2(%arg0: i32) -> (i32, i32) {
    %c0_i32 = arith.constant 0 : i32
    %c0_i32_0 = arith.constant 0 : i32
    %c0_i32_1 = arith.constant 0 : i32
    return %c0_i32, %c0_i32_0 : i32, i32
  }
  func.func @transform_3(%arg0: i32) -> (i32, i32) {
    %c0_i32 = arith.constant 0 : i32
    %c0_i32_0 = arith.constant 0 : i32
    return %c0_i32, %arg0 : i32, i32
  }
}

module attributes {stable_mosaic.version = 11 : i64} {
  func.func @_convmm_kernel(%arg0: i32, %arg1: memref<8x384xbf16, #tpu.memory_space<vmem>>, %arg2: memref<384x128xbf16, #tpu.memory_space<vmem>>, %arg3: memref<8x1xf32, #tpu.memory_space<vmem>>, %arg4: memref<8x128xf32, #tpu.memory_space<vmem>>) attributes {dimension_semantics = [#tpu.dimension_semantics<parallel>], iteration_bounds = array<i64: 1>, scalar_prefetch = 0 : i64, scratch_operands = 0 : i64, tpu.core_type = #tpu.core_type<tc>, window_params = [{pipeline_mode = #tpu.pipeline_mode<synchronous>, transform_indices = @transform_0, window_bounds = array<i64: 8, 384>}, {transform_indices = @transform_1, window_bounds = array<i64: 384, 128>}, {pipeline_mode = #tpu.pipeline_mode<synchronous>, transform_indices = @transform_2, window_bounds = array<i64: 8, 1>}, {transform_indices = @transform_3, window_bounds = array<i64: 8, 128>}]} {
    %c0 = arith.constant 0 : index
    %c0_0 = arith.constant 0 : index
    %0 = vector.load %arg1[%c0, %c0_0] : memref<8x384xbf16, #tpu.memory_space<vmem>>, vector<8x384xbf16>
    %c0_1 = arith.constant 0 : index
    %c0_2 = arith.constant 0 : index
    %1 = vector.load %arg2[%c0_1, %c0_2] : memref<384x128xbf16, #tpu.memory_space<vmem>>, vector<384x128xbf16>
    %cst = arith.constant dense<0.000000e+00> : vector<8x128xf32>
    %2 = tpu.matmul %0, %1, %cst {dimension_numbers = #tpu.dot_dimension_numbers<[1], [0], [0], [1], [0, 0, 1, 1], [], []>} : vector<8x384xbf16>, vector<384x128xbf16>, vector<8x128xf32> -> vector<8x128xf32>
    %c0_3 = arith.constant 0 : index
    %c0_4 = arith.constant 0 : index
    %3 = vector.load %arg3[%c0_3, %c0_4] : memref<8x1xf32, #tpu.memory_space<vmem>>, vector<8x1xf32>
    %4 = vector.broadcast %3 : vector<8x1xf32> to vector<8x128xf32>
    %5 = arith.addf %2, %4 : vector<8x128xf32>
    %cst_5 = arith.constant 0.000000e+00 : f32
    %6 = vector.broadcast %cst_5 : f32 to vector<8x128xf32>
    %7 = arith.subf %6, %5 : vector<8x128xf32>
    %8 = math.exp %7 : vector<8x128xf32>
    %cst_6 = arith.constant 1.000000e+00 : f32
    %9 = vector.broadcast %cst_6 : f32 to vector<8x128xf32>
    %10 = arith.addf %9, %8 : vector<8x128xf32>
    %cst_7 = arith.constant 1.000000e+00 : f32
    %11 = vector.broadcast %cst_7 : f32 to vector<8x128xf32>
    %12 = arith.divf %11, %10 : vector<8x128xf32>
    %c0_8 = arith.constant 0 : index
    %c0_9 = arith.constant 0 : index
    %13 = vector.load %arg4[%c0_8, %c0_9] : memref<8x128xf32, #tpu.memory_space<vmem>>, vector<8x128xf32>
    tpu.vector_store %arg4[%c0_8, %c0_9], %12 {strides = array<i32>} : memref<8x128xf32, #tpu.memory_space<vmem>>, vector<8x128xf32>,
    return
  }
  func.func @transform_0(%arg0: i32) -> (i32, i32) {
    %c0_i32 = arith.constant 0 : i32
    %c0_i32_0 = arith.constant 0 : i32
    %c0_i32_1 = arith.constant 0 : i32
    return %c0_i32, %c0_i32_0 : i32, i32
  }
  func.func @transform_1(%arg0: i32) -> (i32, i32) {
    %c0_i32 = arith.constant 0 : i32
    %c0_i32_0 = arith.constant 0 : i32
    return %c0_i32, %arg0 : i32, i32
  }
  func.func @transform_2(%arg0: i32) -> (i32, i32) {
    %c0_i32 = arith.constant 0 : i32
    %c0_i32_0 = arith.constant 0 : i32
    %c0_i32_1 = arith.constant 0 : i32
    return %c0_i32, %c0_i32_0 : i32, i32
  }
  func.func @transform_3(%arg0: i32) -> (i32, i32) {
    %c0_i32 = arith.constant 0 : i32
    %c0_i32_0 = arith.constant 0 : i32
    return %c0_i32, %arg0 : i32, i32
  }
}

module attributes {stable_mosaic.version = 11 : i64} {
  func.func @_convmm_kernel(%arg0: i32, %arg1: memref<16x384xbf16, #tpu.memory_space<vmem>>, %arg2: memref<384x128xbf16, #tpu.memory_space<vmem>>, %arg3: memref<16x1xf32, #tpu.memory_space<vmem>>, %arg4: memref<16x128xbf16, #tpu.memory_space<vmem>>) attributes {dimension_semantics = [#tpu.dimension_semantics<parallel>], iteration_bounds = array<i64: 1>, scalar_prefetch = 0 : i64, scratch_operands = 0 : i64, tpu.core_type = #tpu.core_type<tc>, window_params = [{pipeline_mode = #tpu.pipeline_mode<synchronous>, transform_indices = @transform_0, window_bounds = array<i64: 16, 384>}, {transform_indices = @transform_1, window_bounds = array<i64: 384, 128>}, {pipeline_mode = #tpu.pipeline_mode<synchronous>, transform_indices = @transform_2, window_bounds = array<i64: 16, 1>}, {transform_indices = @transform_3, window_bounds = array<i64: 16, 128>}]} {
    %c0 = arith.constant 0 : index
    %c0_0 = arith.constant 0 : index
    %0 = vector.load %arg1[%c0, %c0_0] : memref<16x384xbf16, #tpu.memory_space<vmem>>, vector<16x384xbf16>
    %c0_1 = arith.constant 0 : index
    %c0_2 = arith.constant 0 : index
    %1 = vector.load %arg2[%c0_1, %c0_2] : memref<384x128xbf16, #tpu.memory_space<vmem>>, vector<384x128xbf16>
    %cst = arith.constant dense<0.000000e+00> : vector<16x128xf32>
    %2 = tpu.matmul %0, %1, %cst {dimension_numbers = #tpu.dot_dimension_numbers<[1], [0], [0], [1], [0, 0, 1, 1], [], []>} : vector<16x384xbf16>, vector<384x128xbf16>, vector<16x128xf32> -> vector<16x128xf32>
    %c0_3 = arith.constant 0 : index
    %c0_4 = arith.constant 0 : index
    %3 = vector.load %arg3[%c0_3, %c0_4] : memref<16x1xf32, #tpu.memory_space<vmem>>, vector<16x1xf32>
    %4 = vector.broadcast %3 : vector<16x1xf32> to vector<16x128xf32>
    %5 = arith.addf %2, %4 : vector<16x128xf32>
    %cst_5 = arith.constant 0.000000e+00 : f32
    %6 = vector.broadcast %cst_5 : f32 to vector<16x128xf32>
    %7 = arith.cmpf ogt, %5, %6 : vector<16x128xf32>
    %cst_6 = arith.constant 0.000000e+00 : f32
    %8 = vector.broadcast %cst_6 : f32 to vector<16x128xf32>
    %9 = arith.minimumf %5, %8 : vector<16x128xf32>
    %10 = math.exp %9 : vector<16x128xf32>
    %cst_7 = arith.constant 1.000000e+00 : f32
    %11 = vector.broadcast %cst_7 : f32 to vector<16x128xf32>
    %12 = arith.subf %10, %11 : vector<16x128xf32>
    %13 = arith.select %7, %5, %12 : vector<16x128xi1>, vector<16x128xf32>
    %14 = arith.truncf %13 : vector<16x128xf32> to vector<16x128xbf16>
    %c0_8 = arith.constant 0 : index
    %c0_9 = arith.constant 0 : index
    %15 = vector.load %arg4[%c0_8, %c0_9] : memref<16x128xbf16, #tpu.memory_space<vmem>>, vector<16x128xbf16>
    tpu.vector_store %arg4[%c0_8, %c0_9], %14 {strides = array<i32>} : memref<16x128xbf16, #tpu.memory_space<vmem>>, vector<16x128xbf16>,
    return
  }
  func.func @transform_0(%arg0: i32) -> (i32, i32) {
    %c0_i32 = arith.constant 0 : i32
    %c0_i32_0 = arith.constant 0 : i32
    %c0_i32_1 = arith.constant 0 : i32
    return %c0_i32, %c0_i32_0 : i32, i32
  }
  func.func @transform_1(%arg0: i32) -> (i32, i32) {
    %c0_i32 = arith.constant 0 : i32
    %c0_i32_0 = arith.constant 0 : i32
    return %c0_i32, %arg0 : i32, i32
  }
  func.func @transform_2(%arg0: i32) -> (i32, i32) {
    %c0_i32 = arith.constant 0 : i32
    %c0_i32_0 = arith.constant 0 : i32
    %c0_i32_1 = arith.constant 0 : i32
    return %c0_i32, %c0_i32_0 : i32, i32
  }
  func.func @transform_3(%arg0: i32) -> (i32, i32) {
    %c0_i32 = arith.constant 0 : i32
    %c0_i32_0 = arith.constant 0 : i32
    return %c0_i32, %arg0 : i32, i32
  }
}

module attributes {stable_mosaic.version = 11 : i64} {
  func.func @_convmm_kernel(%arg0: i32, %arg1: memref<16x256xbf16, #tpu.memory_space<vmem>>, %arg2: memref<256x128xbf16, #tpu.memory_space<vmem>>, %arg3: memref<16x1xf32, #tpu.memory_space<vmem>>, %arg4: memref<16x128xbf16, #tpu.memory_space<vmem>>) attributes {dimension_semantics = [#tpu.dimension_semantics<parallel>], iteration_bounds = array<i64: 1>, scalar_prefetch = 0 : i64, scratch_operands = 0 : i64, tpu.core_type = #tpu.core_type<tc>, window_params = [{pipeline_mode = #tpu.pipeline_mode<synchronous>, transform_indices = @transform_0, window_bounds = array<i64: 16, 256>}, {transform_indices = @transform_1, window_bounds = array<i64: 256, 128>}, {pipeline_mode = #tpu.pipeline_mode<synchronous>, transform_indices = @transform_2, window_bounds = array<i64: 16, 1>}, {transform_indices = @transform_3, window_bounds = array<i64: 16, 128>}]} {
    %c0 = arith.constant 0 : index
    %c0_0 = arith.constant 0 : index
    %0 = vector.load %arg1[%c0, %c0_0] : memref<16x256xbf16, #tpu.memory_space<vmem>>, vector<16x256xbf16>
    %c0_1 = arith.constant 0 : index
    %c0_2 = arith.constant 0 : index
    %1 = vector.load %arg2[%c0_1, %c0_2] : memref<256x128xbf16, #tpu.memory_space<vmem>>, vector<256x128xbf16>
    %cst = arith.constant dense<0.000000e+00> : vector<16x128xf32>
    %2 = tpu.matmul %0, %1, %cst {dimension_numbers = #tpu.dot_dimension_numbers<[1], [0], [0], [1], [0, 0, 1, 1], [], []>} : vector<16x256xbf16>, vector<256x128xbf16>, vector<16x128xf32> -> vector<16x128xf32>
    %c0_3 = arith.constant 0 : index
    %c0_4 = arith.constant 0 : index
    %3 = vector.load %arg3[%c0_3, %c0_4] : memref<16x1xf32, #tpu.memory_space<vmem>>, vector<16x1xf32>
    %4 = vector.broadcast %3 : vector<16x1xf32> to vector<16x128xf32>
    %5 = arith.addf %2, %4 : vector<16x128xf32>
    %cst_5 = arith.constant 0.000000e+00 : f32
    %6 = vector.broadcast %cst_5 : f32 to vector<16x128xf32>
    %7 = arith.cmpf ogt, %5, %6 : vector<16x128xf32>
    %cst_6 = arith.constant 0.000000e+00 : f32
    %8 = vector.broadcast %cst_6 : f32 to vector<16x128xf32>
    %9 = arith.minimumf %5, %8 : vector<16x128xf32>
    %10 = math.exp %9 : vector<16x128xf32>
    %cst_7 = arith.constant 1.000000e+00 : f32
    %11 = vector.broadcast %cst_7 : f32 to vector<16x128xf32>
    %12 = arith.subf %10, %11 : vector<16x128xf32>
    %13 = arith.select %7, %5, %12 : vector<16x128xi1>, vector<16x128xf32>
    %14 = arith.truncf %13 : vector<16x128xf32> to vector<16x128xbf16>
    %c0_8 = arith.constant 0 : index
    %c0_9 = arith.constant 0 : index
    %15 = vector.load %arg4[%c0_8, %c0_9] : memref<16x128xbf16, #tpu.memory_space<vmem>>, vector<16x128xbf16>
    tpu.vector_store %arg4[%c0_8, %c0_9], %14 {strides = array<i32>} : memref<16x128xbf16, #tpu.memory_space<vmem>>, vector<16x128xbf16>,
    return
  }
  func.func @transform_0(%arg0: i32) -> (i32, i32) {
    %c0_i32 = arith.constant 0 : i32
    %c0_i32_0 = arith.constant 0 : i32
    %c0_i32_1 = arith.constant 0 : i32
    return %c0_i32, %c0_i32_0 : i32, i32
  }
  func.func @transform_1(%arg0: i32) -> (i32, i32) {
    %c0_i32 = arith.constant 0 : i32
    %c0_i32_0 = arith.constant 0 : i32
    return %c0_i32, %arg0 : i32, i32
  }
  func.func @transform_2(%arg0: i32) -> (i32, i32) {
    %c0_i32 = arith.constant 0 : i32
    %c0_i32_0 = arith.constant 0 : i32
    %c0_i32_1 = arith.constant 0 : i32
    return %c0_i32, %c0_i32_0 : i32, i32
  }
  func.func @transform_3(%arg0: i32) -> (i32, i32) {
    %c0_i32 = arith.constant 0 : i32
    %c0_i32_0 = arith.constant 0 : i32
    return %c0_i32, %arg0 : i32, i32
  }
}

module attributes {stable_mosaic.version = 11 : i64} {
  func.func @_convmm_kernel(%arg0: i32, %arg1: memref<8x256xbf16, #tpu.memory_space<vmem>>, %arg2: memref<256x128xbf16, #tpu.memory_space<vmem>>, %arg3: memref<8x1xf32, #tpu.memory_space<vmem>>, %arg4: memref<8x128xbf16, #tpu.memory_space<vmem>>) attributes {dimension_semantics = [#tpu.dimension_semantics<parallel>], iteration_bounds = array<i64: 1>, scalar_prefetch = 0 : i64, scratch_operands = 0 : i64, tpu.core_type = #tpu.core_type<tc>, window_params = [{pipeline_mode = #tpu.pipeline_mode<synchronous>, transform_indices = @transform_0, window_bounds = array<i64: 8, 256>}, {transform_indices = @transform_1, window_bounds = array<i64: 256, 128>}, {pipeline_mode = #tpu.pipeline_mode<synchronous>, transform_indices = @transform_2, window_bounds = array<i64: 8, 1>}, {transform_indices = @transform_3, window_bounds = array<i64: 8, 128>}]} {
    %c0 = arith.constant 0 : index
    %c0_0 = arith.constant 0 : index
    %0 = vector.load %arg1[%c0, %c0_0] : memref<8x256xbf16, #tpu.memory_space<vmem>>, vector<8x256xbf16>
    %c0_1 = arith.constant 0 : index
    %c0_2 = arith.constant 0 : index
    %1 = vector.load %arg2[%c0_1, %c0_2] : memref<256x128xbf16, #tpu.memory_space<vmem>>, vector<256x128xbf16>
    %cst = arith.constant dense<0.000000e+00> : vector<8x128xf32>
    %2 = tpu.matmul %0, %1, %cst {dimension_numbers = #tpu.dot_dimension_numbers<[1], [0], [0], [1], [0, 0, 1, 1], [], []>} : vector<8x256xbf16>, vector<256x128xbf16>, vector<8x128xf32> -> vector<8x128xf32>
    %c0_3 = arith.constant 0 : index
    %c0_4 = arith.constant 0 : index
    %3 = vector.load %arg3[%c0_3, %c0_4] : memref<8x1xf32, #tpu.memory_space<vmem>>, vector<8x1xf32>
    %4 = vector.broadcast %3 : vector<8x1xf32> to vector<8x128xf32>
    %5 = arith.addf %2, %4 : vector<8x128xf32>
    %cst_5 = arith.constant 0.000000e+00 : f32
    %6 = vector.broadcast %cst_5 : f32 to vector<8x128xf32>
    %7 = arith.cmpf ogt, %5, %6 : vector<8x128xf32>
    %cst_6 = arith.constant 0.000000e+00 : f32
    %8 = vector.broadcast %cst_6 : f32 to vector<8x128xf32>
    %9 = arith.minimumf %5, %8 : vector<8x128xf32>
    %10 = math.exp %9 : vector<8x128xf32>
    %cst_7 = arith.constant 1.000000e+00 : f32
    %11 = vector.broadcast %cst_7 : f32 to vector<8x128xf32>
    %12 = arith.subf %10, %11 : vector<8x128xf32>
    %13 = arith.select %7, %5, %12 : vector<8x128xi1>, vector<8x128xf32>
    %14 = arith.truncf %13 : vector<8x128xf32> to vector<8x128xbf16>
    %c0_8 = arith.constant 0 : index
    %c0_9 = arith.constant 0 : index
    %15 = vector.load %arg4[%c0_8, %c0_9] : memref<8x128xbf16, #tpu.memory_space<vmem>>, vector<8x128xbf16>
    tpu.vector_store %arg4[%c0_8, %c0_9], %14 {strides = array<i32>} : memref<8x128xbf16, #tpu.memory_space<vmem>>, vector<8x128xbf16>,
    return
  }
  func.func @transform_0(%arg0: i32) -> (i32, i32) {
    %c0_i32 = arith.constant 0 : i32
    %c0_i32_0 = arith.constant 0 : i32
    %c0_i32_1 = arith.constant 0 : i32
    return %c0_i32, %c0_i32_0 : i32, i32
  }
  func.func @transform_1(%arg0: i32) -> (i32, i32) {
    %c0_i32 = arith.constant 0 : i32
    %c0_i32_0 = arith.constant 0 : i32
    return %c0_i32, %arg0 : i32, i32
  }
  func.func @transform_2(%arg0: i32) -> (i32, i32) {
    %c0_i32 = arith.constant 0 : i32
    %c0_i32_0 = arith.constant 0 : i32
    %c0_i32_1 = arith.constant 0 : i32
    return %c0_i32, %c0_i32_0 : i32, i32
  }
  func.func @transform_3(%arg0: i32) -> (i32, i32) {
    %c0_i32 = arith.constant 0 : i32
    %c0_i32_0 = arith.constant 0 : i32
    return %c0_i32, %arg0 : i32, i32
  }
}

module attributes {stable_mosaic.version = 11 : i64} {
  func.func @_convmm_kernel(%arg0: i32, %arg1: memref<8x256xbf16, #tpu.memory_space<vmem>>, %arg2: memref<256x128xbf16, #tpu.memory_space<vmem>>, %arg3: memref<8x1xf32, #tpu.memory_space<vmem>>, %arg4: memref<8x128xf32, #tpu.memory_space<vmem>>) attributes {dimension_semantics = [#tpu.dimension_semantics<parallel>], iteration_bounds = array<i64: 1>, scalar_prefetch = 0 : i64, scratch_operands = 0 : i64, tpu.core_type = #tpu.core_type<tc>, window_params = [{pipeline_mode = #tpu.pipeline_mode<synchronous>, transform_indices = @transform_0, window_bounds = array<i64: 8, 256>}, {transform_indices = @transform_1, window_bounds = array<i64: 256, 128>}, {pipeline_mode = #tpu.pipeline_mode<synchronous>, transform_indices = @transform_2, window_bounds = array<i64: 8, 1>}, {transform_indices = @transform_3, window_bounds = array<i64: 8, 128>}]} {
    %c0 = arith.constant 0 : index
    %c0_0 = arith.constant 0 : index
    %0 = vector.load %arg1[%c0, %c0_0] : memref<8x256xbf16, #tpu.memory_space<vmem>>, vector<8x256xbf16>
    %c0_1 = arith.constant 0 : index
    %c0_2 = arith.constant 0 : index
    %1 = vector.load %arg2[%c0_1, %c0_2] : memref<256x128xbf16, #tpu.memory_space<vmem>>, vector<256x128xbf16>
    %cst = arith.constant dense<0.000000e+00> : vector<8x128xf32>
    %2 = tpu.matmul %0, %1, %cst {dimension_numbers = #tpu.dot_dimension_numbers<[1], [0], [0], [1], [0, 0, 1, 1], [], []>} : vector<8x256xbf16>, vector<256x128xbf16>, vector<8x128xf32> -> vector<8x128xf32>
    %c0_3 = arith.constant 0 : index
    %c0_4 = arith.constant 0 : index
    %3 = vector.load %arg3[%c0_3, %c0_4] : memref<8x1xf32, #tpu.memory_space<vmem>>, vector<8x1xf32>
    %4 = vector.broadcast %3 : vector<8x1xf32> to vector<8x128xf32>
    %5 = arith.addf %2, %4 : vector<8x128xf32>
    %cst_5 = arith.constant 0.000000e+00 : f32
    %6 = vector.broadcast %cst_5 : f32 to vector<8x128xf32>
    %7 = arith.subf %6, %5 : vector<8x128xf32>
    %8 = math.exp %7 : vector<8x128xf32>
    %cst_6 = arith.constant 1.000000e+00 : f32
    %9 = vector.broadcast %cst_6 : f32 to vector<8x128xf32>
    %10 = arith.addf %9, %8 : vector<8x128xf32>
    %cst_7 = arith.constant 1.000000e+00 : f32
    %11 = vector.broadcast %cst_7 : f32 to vector<8x128xf32>
    %12 = arith.divf %11, %10 : vector<8x128xf32>
    %c0_8 = arith.constant 0 : index
    %c0_9 = arith.constant 0 : index
    %13 = vector.load %arg4[%c0_8, %c0_9] : memref<8x128xf32, #tpu.memory_space<vmem>>, vector<8x128xf32>
    tpu.vector_store %arg4[%c0_8, %c0_9], %12 {strides = array<i32>} : memref<8x128xf32, #tpu.memory_space<vmem>>, vector<8x128xf32>,
    return
  }
  func.func @transform_0(%arg0: i32) -> (i32, i32) {
    %c0_i32 = arith.constant 0 : i32
    %c0_i32_0 = arith.constant 0 : i32
    %c0_i32_1 = arith.constant 0 : i32
    return %c0_i32, %c0_i32_0 : i32, i32
  }
  func.func @transform_1(%arg0: i32) -> (i32, i32) {
    %c0_i32 = arith.constant 0 : i32
    %c0_i32_0 = arith.constant 0 : i32
    return %c0_i32, %arg0 : i32, i32
  }
  func.func @transform_2(%arg0: i32) -> (i32, i32) {
    %c0_i32 = arith.constant 0 : i32
    %c0_i32_0 = arith.constant 0 : i32
    %c0_i32_1 = arith.constant 0 : i32
    return %c0_i32, %c0_i32_0 : i32, i32
  }
  func.func @transform_3(%arg0: i32) -> (i32, i32) {
    %c0_i32 = arith.constant 0 : i32
    %c0_i32_0 = arith.constant 0 : i32
    return %c0_i32, %arg0 : i32, i32
  }
}

module attributes {stable_mosaic.version = 11 : i64} {
  func.func @_convmm_kernel(%arg0: i32, %arg1: memref<8x128xbf16, #tpu.memory_space<vmem>>, %arg2: memref<128x256xbf16, #tpu.memory_space<vmem>>, %arg3: memref<8x1xf32, #tpu.memory_space<vmem>>, %arg4: memref<8x256xbf16, #tpu.memory_space<vmem>>) attributes {dimension_semantics = [#tpu.dimension_semantics<parallel>], iteration_bounds = array<i64: 2>, scalar_prefetch = 0 : i64, scratch_operands = 0 : i64, tpu.core_type = #tpu.core_type<tc>, window_params = [{pipeline_mode = #tpu.pipeline_mode<synchronous>, transform_indices = @transform_0, window_bounds = array<i64: 8, 128>}, {transform_indices = @transform_1, window_bounds = array<i64: 128, 256>}, {pipeline_mode = #tpu.pipeline_mode<synchronous>, transform_indices = @transform_2, window_bounds = array<i64: 8, 1>}, {transform_indices = @transform_3, window_bounds = array<i64: 8, 256>}]} {
    %c0 = arith.constant 0 : index
    %c0_0 = arith.constant 0 : index
    %0 = vector.load %arg1[%c0, %c0_0] : memref<8x128xbf16, #tpu.memory_space<vmem>>, vector<8x128xbf16>
    %c0_1 = arith.constant 0 : index
    %c0_2 = arith.constant 0 : index
    %1 = vector.load %arg2[%c0_1, %c0_2] : memref<128x256xbf16, #tpu.memory_space<vmem>>, vector<128x256xbf16>
    %cst = arith.constant dense<0.000000e+00> : vector<8x256xf32>
    %2 = tpu.matmul %0, %1, %cst {dimension_numbers = #tpu.dot_dimension_numbers<[1], [0], [0], [1], [0, 0, 1, 1], [], []>} : vector<8x128xbf16>, vector<128x256xbf16>, vector<8x256xf32> -> vector<8x256xf32>
    %c0_3 = arith.constant 0 : index
    %c0_4 = arith.constant 0 : index
    %3 = vector.load %arg3[%c0_3, %c0_4] : memref<8x1xf32, #tpu.memory_space<vmem>>, vector<8x1xf32>
    %4 = vector.broadcast %3 : vector<8x1xf32> to vector<8x256xf32>
    %5 = arith.addf %2, %4 : vector<8x256xf32>
    %cst_5 = arith.constant 0.000000e+00 : f32
    %6 = vector.broadcast %cst_5 : f32 to vector<8x256xf32>
    %7 = arith.cmpf ogt, %5, %6 : vector<8x256xf32>
    %cst_6 = arith.constant 0.000000e+00 : f32
    %8 = vector.broadcast %cst_6 : f32 to vector<8x256xf32>
    %9 = arith.minimumf %5, %8 : vector<8x256xf32>
    %10 = math.exp %9 : vector<8x256xf32>
    %cst_7 = arith.constant 1.000000e+00 : f32
    %11 = vector.broadcast %cst_7 : f32 to vector<8x256xf32>
    %12 = arith.subf %10, %11 : vector<8x256xf32>
    %13 = arith.select %7, %5, %12 : vector<8x256xi1>, vector<8x256xf32>
    %14 = arith.truncf %13 : vector<8x256xf32> to vector<8x256xbf16>
    %c0_8 = arith.constant 0 : index
    %c0_9 = arith.constant 0 : index
    %15 = vector.load %arg4[%c0_8, %c0_9] : memref<8x256xbf16, #tpu.memory_space<vmem>>, vector<8x256xbf16>
    tpu.vector_store %arg4[%c0_8, %c0_9], %14 {strides = array<i32>} : memref<8x256xbf16, #tpu.memory_space<vmem>>, vector<8x256xbf16>,
    return
  }
  func.func @transform_0(%arg0: i32) -> (i32, i32) {
    %c0_i32 = arith.constant 0 : i32
    %c0_i32_0 = arith.constant 0 : i32
    %c0_i32_1 = arith.constant 0 : i32
    return %c0_i32, %c0_i32_0 : i32, i32
  }
  func.func @transform_1(%arg0: i32) -> (i32, i32) {
    %c0_i32 = arith.constant 0 : i32
    %c0_i32_0 = arith.constant 0 : i32
    return %c0_i32, %arg0 : i32, i32
  }
  func.func @transform_2(%arg0: i32) -> (i32, i32) {
    %c0_i32 = arith.constant 0 : i32
    %c0_i32_0 = arith.constant 0 : i32
    %c0_i32_1 = arith.constant 0 : i32
    return %c0_i32, %c0_i32_0 : i32, i32
  }
  func.func @transform_3(%arg0: i32) -> (i32, i32) {
    %c0_i32 = arith.constant 0 : i32
    %c0_i32_0 = arith.constant 0 : i32
    return %c0_i32, %arg0 : i32, i32
  }
}

module attributes {stable_mosaic.version = 11 : i64} {
  func.func @_convmm_kernel(%arg0: i32, %arg1: memref<8x128xbf16, #tpu.memory_space<vmem>>, %arg2: memref<128x256xbf16, #tpu.memory_space<vmem>>, %arg3: memref<8x1xf32, #tpu.memory_space<vmem>>, %arg4: memref<8x256xf32, #tpu.memory_space<vmem>>) attributes {dimension_semantics = [#tpu.dimension_semantics<parallel>], iteration_bounds = array<i64: 2>, scalar_prefetch = 0 : i64, scratch_operands = 0 : i64, tpu.core_type = #tpu.core_type<tc>, window_params = [{pipeline_mode = #tpu.pipeline_mode<synchronous>, transform_indices = @transform_0, window_bounds = array<i64: 8, 128>}, {transform_indices = @transform_1, window_bounds = array<i64: 128, 256>}, {pipeline_mode = #tpu.pipeline_mode<synchronous>, transform_indices = @transform_2, window_bounds = array<i64: 8, 1>}, {transform_indices = @transform_3, window_bounds = array<i64: 8, 256>}]} {
    %c0 = arith.constant 0 : index
    %c0_0 = arith.constant 0 : index
    %0 = vector.load %arg1[%c0, %c0_0] : memref<8x128xbf16, #tpu.memory_space<vmem>>, vector<8x128xbf16>
    %c0_1 = arith.constant 0 : index
    %c0_2 = arith.constant 0 : index
    %1 = vector.load %arg2[%c0_1, %c0_2] : memref<128x256xbf16, #tpu.memory_space<vmem>>, vector<128x256xbf16>
    %cst = arith.constant dense<0.000000e+00> : vector<8x256xf32>
    %2 = tpu.matmul %0, %1, %cst {dimension_numbers = #tpu.dot_dimension_numbers<[1], [0], [0], [1], [0, 0, 1, 1], [], []>} : vector<8x128xbf16>, vector<128x256xbf16>, vector<8x256xf32> -> vector<8x256xf32>
    %c0_3 = arith.constant 0 : index
    %c0_4 = arith.constant 0 : index
    %3 = vector.load %arg3[%c0_3, %c0_4] : memref<8x1xf32, #tpu.memory_space<vmem>>, vector<8x1xf32>
    %4 = vector.broadcast %3 : vector<8x1xf32> to vector<8x256xf32>
    %5 = arith.addf %2, %4 : vector<8x256xf32>
    %cst_5 = arith.constant 0.000000e+00 : f32
    %6 = vector.broadcast %cst_5 : f32 to vector<8x256xf32>
    %7 = arith.subf %6, %5 : vector<8x256xf32>
    %8 = math.exp %7 : vector<8x256xf32>
    %cst_6 = arith.constant 1.000000e+00 : f32
    %9 = vector.broadcast %cst_6 : f32 to vector<8x256xf32>
    %10 = arith.addf %9, %8 : vector<8x256xf32>
    %cst_7 = arith.constant 1.000000e+00 : f32
    %11 = vector.broadcast %cst_7 : f32 to vector<8x256xf32>
    %12 = arith.divf %11, %10 : vector<8x256xf32>
    %c0_8 = arith.constant 0 : index
    %c0_9 = arith.constant 0 : index
    %13 = vector.load %arg4[%c0_8, %c0_9] : memref<8x256xf32, #tpu.memory_space<vmem>>, vector<8x256xf32>
    tpu.vector_store %arg4[%c0_8, %c0_9], %12 {strides = array<i32>} : memref<8x256xf32, #tpu.memory_space<vmem>>, vector<8x256xf32>,
    return
  }
  func.func @transform_0(%arg0: i32) -> (i32, i32) {
    %c0_i32 = arith.constant 0 : i32
    %c0_i32_0 = arith.constant 0 : i32
    %c0_i32_1 = arith.constant 0 : i32
    return %c0_i32, %c0_i32_0 : i32, i32
  }
  func.func @transform_1(%arg0: i32) -> (i32, i32) {
    %c0_i32 = arith.constant 0 : i32
    %c0_i32_0 = arith.constant 0 : i32
    return %c0_i32, %arg0 : i32, i32
  }
  func.func @transform_2(%arg0: i32) -> (i32, i32) {
    %c0_i32 = arith.constant 0 : i32
    %c0_i32_0 = arith.constant 0 : i32
    %c0_i32_1 = arith.constant 0 : i32
    return %c0_i32, %c0_i32_0 : i32, i32
  }
  func.func @transform_3(%arg0: i32) -> (i32, i32) {
    %c0_i32 = arith.constant 0 : i32
    %c0_i32_0 = arith.constant 0 : i32
    return %c0_i32, %arg0 : i32, i32
  }
}

</mosaic_0001>

<llo_original>
// kernel: _forward.12
$region0: #{_forward.12}
  #allocation0 [shape = 'u32[]', space=smem, size = 0x4, offset = 0x4, fixed_abs, tag = 'smem constant byte address 0x4 - core index']
  #allocation1 [shape = 'u32[144,128]{1,0:T(1,128)}', space=vmem, size = 0x12000, scoped, tag = 'internal scratch']
  %s0 = inlined_call_operand.vmem [shape: bf16[8,128], index: 0, kind: input, shape index: {}]
  %s1 = inlined_call_operand.vmem [shape: bf16[128,128], index: 1, kind: input, shape index: {}]
  %s2 = inlined_call_operand.vmem [shape: f32[8,1], index: 2, kind: input, shape index: {}]
  %s3 = inlined_call_operand.vmem [shape: bf16[8,128], index: 3, kind: output, shape index: {}]
  %s4 = sld [smem:[#allocation0]]
  $region22: #{_forward.12} parent=0
    _
  %s6 = ssub.s32 1, %s4
  %s7 = scalar_select 0, %s6, %s4
  // Predicated region
  $region2: #{_forward.12} parent=0 // pred_check
    _
  $region3: #{_forward.12} parent=0 // pred_check_branch
    %9 = sbr.rel (0) target = $region5
  $region4: #{_forward.12} parent=0 // pred_region
    _
  $region5: #{_forward.12} parent=0 // pred_fallthru
    _
  // Predicated region
  $region6: #{_forward.12} parent=0 // pred_check
    _
  $region7: #{_forward.12} parent=0 // pred_check_branch
    %11 = sbr.rel (0) target = $region9
  $region8: #{_forward.12} parent=0 // pred_region
    _
  $region9: #{_forward.12} parent=0 // pred_fallthru
    _
  // Predicated region
  $region10: #{_forward.12} parent=0 // pred_check
    _
  $region11: #{_forward.12} parent=0 // pred_check_branch
    %13 = sbr.rel (0) target = $region13
  $region12: #{_forward.12} parent=0 // pred_region
    _
  $region13: #{_forward.12} parent=0 // pred_fallthru
    _
  %v15 = vld [vmem:[%s0] sm:$0xf]
  %v16 = vld [vmem:[%s1] sm:$0xf]
  %v17 = vld [vmem:[%s1 + $0x4] sm:$0xf]
  %v18 = vld [vmem:[%s1 + $0x8] sm:$0xf]
  %v19 = vld [vmem:[%s1 + $0xc] sm:$0xf]
  %v20 = vld [vmem:[%s1 + $0x10] sm:$0xf]
  %v21 = vld [vmem:[%s1 + $0x14] sm:$0xf]
  %v22 = vld [vmem:[%s1 + $0x18] sm:$0xf]
  %v23 = vld [vmem:[%s1 + $0x1c] sm:$0xf]
  %v24 = vld [vmem:[%s1 + $0x20] sm:$0xf]
  %v25 = vld [vmem:[%s1 + $0x24] sm:$0xf]
  %v26 = vld [vmem:[%s1 + $0x28] sm:$0xf]
  %v27 = vld [vmem:[%s1 + $0x2c] sm:$0xf]
  %v28 = vld [vmem:[%s1 + $0x30] sm:$0xf]
  %v29 = vld [vmem:[%s1 + $0x34] sm:$0xf]
  %v30 = vld [vmem:[%s1 + $0x38] sm:$0xf]
  %v31 = vld [vmem:[%s1 + $0x3c] sm:$0xf]
  %v32 = vld [vmem:[%s2] sm:$0xff]
  %34 = vset.pattern.permute.xlu0 0
  %35 = vperm.xlu0 %34, %v32
  %v36 = vpop.permute.xlu0 %35
  %v54 = vunpack.c.l.b16 %v16
  %v55 = vunpack.c.l.b16 %v17
  %v56 = vunpack.c.l.b16 %v18
  %v57 = vunpack.c.l.b16 %v19
  %v58 = vunpack.c.l.b16 %v20
  %v59 = vunpack.c.l.b16 %v21
  %v60 = vunpack.c.l.b16 %v22
  %v61 = vunpack.c.l.b16 %v23
  %v62 = vunpack.c.l.b16 %v24
  %v63 = vunpack.c.l.b16 %v25
  %v64 = vunpack.c.l.b16 %v26
  %v65 = vunpack.c.l.b16 %v27
  %v66 = vunpack.c.l.b16 %v28
  %v67 = vunpack.c.l.b16 %v29
  %v68 = vunpack.c.l.b16 %v30
  %v69 = vunpack.c.l.b16 %v31
  %v70 = vpack.c.b16 %v55, %v54
  %v71 = vpack.c.b16 %v57, %v56
  %v72 = vpack.c.b16 %v59, %v58
  %v73 = vpack.c.b16 %v61, %v60
  %v74 = vpack.c.b16 %v63, %v62
  %v75 = vpack.c.b16 %v65, %v64
  %v76 = vpack.c.b16 %v67, %v66
  %v77 = vpack.c.b16 %v69, %v68
  %86 = vmatprep.subr.bf16.mxu0 0
  %87 = vmatpush1.bf16.msra.mxu0 %v77
  %88 = vmatprep.subr.bf16.mxu0 0
  %89 = vmatpush1.bf16.msra.mxu0 %v76
  %90 = vmatprep.subr.bf16.mxu0 0
  %91 = vmatpush1.bf16.msra.mxu0 %v75
  %92 = vmatprep.subr.bf16.mxu0 0
  %93 = vmatpush1.bf16.msra.mxu0 %v74
  %94 = vmatprep.subr.bf16.mxu0 0
  %95 = vmatpush1.bf16.msra.mxu0 %v73
  %96 = vmatprep.subr.bf16.mxu0 0
  %97 = vmatpush1.bf16.msra.mxu0 %v72
  %98 = vmatprep.subr.bf16.mxu0 0
  %99 = vmatpush1.bf16.msra.mxu0 %v71
  %100 = vmatprep.subr.bf16.mxu0 0
  %101 = vmatpush1.bf16.msra.mxu0 %v70
  %102 = vmatprep.subr.bf16.mxu0 0
  %103 = vmatpush2.bf16.msra.mxu0 0
  %104 = vmatprep.subr.bf16.mxu0 0
  %105 = vmatpush2.bf16.msra.mxu0 0
  %106 = vmatprep.subr.bf16.mxu0 0
  %107 = vmatpush2.bf16.msra.mxu0 0
  %108 = vmatprep.subr.bf16.mxu0 0
  %109 = vmatpush2.bf16.msra.mxu0 0
  %110 = vmatprep.subr.bf16.mxu0 0
  %111 = vmatpush2.bf16.msra.mxu0 0
  %112 = vmatprep.subr.bf16.mxu0 0
  %113 = vmatpush2.bf16.msra.mxu0 0
  %114 = vmatprep.subr.bf16.mxu0 0
  %115 = vmatpush2.bf16.msra.mxu0 0
  %116 = vmatprep.subr.bf16.mxu0 0
  %117 = vmatpush2.bf16.msra.mxu0 0
  %118 = vmatprep.mubr.bf16.mxu0 0
  %119 = vmatmul.mubr.bf16.gmra.mxu0 %v15
  %v120 = vpop.f32.mrf.mxu0
  %v121 = vadd.f32 %v36, %v120
  %v122 = vpop.f32.mrf.mxu0
  %v123 = vpop.f32.mrf.mxu0
  %v124 = vpop.f32.mrf.mxu0
  %125 = vdwg.mxu0
  %v126 = vmax.f32 %v121, 0.0
  %v127 = vpack.c.bf16 %v126, %v126
  %128 = vst [vmem:[%s3] sm:$0xf] %v127
  // Predicated region
  $region14: #{_forward.12} parent=0 // pred_check
    _
  $region15: #{_forward.12} parent=0 // pred_check_branch
    %130 = sbr.rel (0) target = $region17
  $region16: #{_forward.12} parent=0 // pred_region
    _
  $region17: #{_forward.12} parent=0 // pred_fallthru
    _
  // Predicated region
  $region18: #{_forward.12} parent=0 // pred_check
    _
  $region19: #{_forward.12} parent=0 // pred_check_branch
    %132 = sbr.rel (0) target = $region21
  $region20: #{_forward.12} parent=0 // pred_region
    _
  $region21: #{_forward.12} parent=0 // pred_fallthru
    _

// kernel: _forward.13
$region0: #{_forward.13}
  #allocation0 [shape = 'u32[]', space=smem, size = 0x4, offset = 0x4, fixed_abs, tag = 'smem constant byte address 0x4 - core index']
  #allocation1 [shape = 'u32[144,128]{1,0:T(1,128)}', space=vmem, size = 0x12000, scoped, tag = 'internal scratch']
  %s0 = inlined_call_operand.vmem [shape: bf16[16,128], index: 0, kind: input, shape index: {}]
  %s1 = inlined_call_operand.vmem [shape: bf16[128,128], index: 1, kind: input, shape index: {}]
  %s2 = inlined_call_operand.vmem [shape: f32[16,1], index: 2, kind: input, shape index: {}]
  %s3 = inlined_call_operand.vmem [shape: bf16[16,128], index: 3, kind: output, shape index: {}]
  %s4 = sld [smem:[#allocation0]]
  $region22: #{_forward.13} parent=0
    _
  %s6 = ssub.s32 1, %s4
  %s7 = scalar_select 0, %s6, %s4
  // Predicated region
  $region2: #{_forward.13} parent=0 // pred_check
    _
  $region3: #{_forward.13} parent=0 // pred_check_branch
    %9 = sbr.rel (0) target = $region5
  $region4: #{_forward.13} parent=0 // pred_region
    _
  $region5: #{_forward.13} parent=0 // pred_fallthru
    _
  // Predicated region
  $region6: #{_forward.13} parent=0 // pred_check
    _
  $region7: #{_forward.13} parent=0 // pred_check_branch
    %11 = sbr.rel (0) target = $region9
  $region8: #{_forward.13} parent=0 // pred_region
    _
  $region9: #{_forward.13} parent=0 // pred_fallthru
    _
  // Predicated region
  $region10: #{_forward.13} parent=0 // pred_check
    _
  $region11: #{_forward.13} parent=0 // pred_check_branch
    %13 = sbr.rel (0) target = $region13
  $region12: #{_forward.13} parent=0 // pred_region
    _
  $region13: #{_forward.13} parent=0 // pred_fallthru
    _
  %v15 = vld [vmem:[%s0] sm:$0xf]
  %v16 = vld [vmem:[%s0 + $0x4] sm:$0xf]
  %v17 = vld [vmem:[%s1] sm:$0xf]
  %v18 = vld [vmem:[%s1 + $0x4] sm:$0xf]
  %v19 = vld [vmem:[%s1 + $0x8] sm:$0xf]
  %v20 = vld [vmem:[%s1 + $0xc] sm:$0xf]
  %v21 = vld [vmem:[%s1 + $0x10] sm:$0xf]
  %v22 = vld [vmem:[%s1 + $0x14] sm:$0xf]
  %v23 = vld [vmem:[%s1 + $0x18] sm:$0xf]
  %v24 = vld [vmem:[%s1 + $0x1c] sm:$0xf]
  %v25 = vld [vmem:[%s1 + $0x20] sm:$0xf]
  %v26 = vld [vmem:[%s1 + $0x24] sm:$0xf]
  %v27 = vld [vmem:[%s1 + $0x28] sm:$0xf]
  %v28 = vld [vmem:[%s1 + $0x2c] sm:$0xf]
  %v29 = vld [vmem:[%s1 + $0x30] sm:$0xf]
  %v30 = vld [vmem:[%s1 + $0x34] sm:$0xf]
  %v31 = vld [vmem:[%s1 + $0x38] sm:$0xf]
  %v32 = vld [vmem:[%s1 + $0x3c] sm:$0xf]
  %v33 = vld [vmem:[%s2] sm:$0xff]
  %v34 = vld [vmem:[%s2 + $0x8] sm:$0xff]
  %36 = vset.pattern.permute.xlu0 0
  %37 = vperm.xlu0 %36, %v33
  %v38 = vpop.permute.xlu0 %37
  %41 = vset.pattern.permute.xlu0 0
  %42 = vperm.xlu0 %41, %v34
  %v43 = vpop.permute.xlu0 %42
  %v47 = vunpack.c.l.b16 %v15
  %v48 = vunpack.c.l.b16 %v16
  %v49 = vpack.c.b16 %v48, %v47
  %v67 = vunpack.c.l.b16 %v17
  %v68 = vunpack.c.l.b16 %v18
  %v69 = vunpack.c.l.b16 %v19
  %v70 = vunpack.c.l.b16 %v20
  %v71 = vunpack.c.l.b16 %v21
  %v72 = vunpack.c.l.b16 %v22
  %v73 = vunpack.c.l.b16 %v23
  %v74 = vunpack.c.l.b16 %v24
  %v75 = vunpack.c.l.b16 %v25
  %v76 = vunpack.c.l.b16 %v26
  %v77 = vunpack.c.l.b16 %v27
  %v78 = vunpack.c.l.b16 %v28
  %v79 = vunpack.c.l.b16 %v29
  %v80 = vunpack.c.l.b16 %v30
  %v81 = vunpack.c.l.b16 %v31
  %v82 = vunpack.c.l.b16 %v32
  %v83 = vpack.c.b16 %v68, %v67
  %v84 = vpack.c.b16 %v70, %v69
  %v85 = vpack.c.b16 %v72, %v71
  %v86 = vpack.c.b16 %v74, %v73
  %v87 = vpack.c.b16 %v76, %v75
  %v88 = vpack.c.b16 %v78, %v77
  %v89 = vpack.c.b16 %v80, %v79
  %v90 = vpack.c.b16 %v82, %v81
  %99 = vmatprep.subr.bf16.mxu0 0
  %100 = vmatpush1.bf16.msra.mxu0 %v90
  %101 = vmatprep.subr.bf16.mxu0 0
  %102 = vmatpush1.bf16.msra.mxu0 %v89
  %103 = vmatprep.subr.bf16.mxu0 0
  %104 = vmatpush1.bf16.msra.mxu0 %v88
  %105 = vmatprep.subr.bf16.mxu0 0
  %106 = vmatpush1.bf16.msra.mxu0 %v87
  %107 = vmatprep.subr.bf16.mxu0 0
  %108 = vmatpush1.bf16.msra.mxu0 %v86
  %109 = vmatprep.subr.bf16.mxu0 0
  %110 = vmatpush1.bf16.msra.mxu0 %v85
  %111 = vmatprep.subr.bf16.mxu0 0
  %112 = vmatpush1.bf16.msra.mxu0 %v84
  %113 = vmatprep.subr.bf16.mxu0 0
  %114 = vmatpush1.bf16.msra.mxu0 %v83
  %115 = vmatprep.subr.bf16.mxu0 0
  %116 = vmatpush2.bf16.msra.mxu0 0
  %117 = vmatprep.subr.bf16.mxu0 0
  %118 = vmatpush2.bf16.msra.mxu0 0
  %119 = vmatprep.subr.bf16.mxu0 0
  %120 = vmatpush2.bf16.msra.mxu0 0
  %121 = vmatprep.subr.bf16.mxu0 0
  %122 = vmatpush2.bf16.msra.mxu0 0
  %123 = vmatprep.subr.bf16.mxu0 0
  %124 = vmatpush2.bf16.msra.mxu0 0
  %125 = vmatprep.subr.bf16.mxu0 0
  %126 = vmatpush2.bf16.msra.mxu0 0
  %127 = vmatprep.subr.bf16.mxu0 0
  %128 = vmatpush2.bf16.msra.mxu0 0
  %129 = vmatprep.subr.bf16.mxu0 0
  %130 = vmatpush2.bf16.msra.mxu0 0
  %131 = vmatprep.mubr.bf16.mxu0 0
  %132 = vmatmul.mubr.bf16.gmra.mxu0 %v49
  %v133 = vpop.f32.mrf.mxu0
  %v134 = vadd.f32 %v38, %v133
  %v135 = vpop.f32.mrf.mxu0
  %v136 = vpop.f32.mrf.mxu0
  %v137 = vadd.f32 %v43, %v136
  %v138 = vpop.f32.mrf.mxu0
  %139 = vdwg.mxu0
  %v140 = vmax.f32 %v134, 0.0
  %v141 = vmax.f32 %v137, 0.0
  %v142 = vpack.c.bf16 %v141, %v140
  %v144 = vunpack.c.l.b16 %v142
  %v145 = vunpack.c.h.b16 %v142
  %v146 = vpack.c.b16 %v144, %v144
  %v147 = vpack.c.b16 %v145, %v145
  %150 = vst [vmem:[%s3] sm:$0xf] %v146
  %151 = vst [vmem:[%s3 + $0x4] sm:$0xf] %v147
  // Predicated region
  $region14: #{_forward.13} parent=0 // pred_check
    _
  $region15: #{_forward.13} parent=0 // pred_check_branch
    %153 = sbr.rel (0) target = $region17
  $region16: #{_forward.13} parent=0 // pred_region
    _
  $region17: #{_forward.13} parent=0 // pred_fallthru
    _
  // Predicated region
  $region18: #{_forward.13} parent=0 // pred_check
    _
  $region19: #{_forward.13} parent=0 // pred_check_branch
    %155 = sbr.rel (0) target = $region21
  $region20: #{_forward.13} parent=0 // pred_region
    _
  $region21: #{_forward.13} parent=0 // pred_fallthru
    _

// kernel: _forward.14
$region0: #{_forward.14}
  #allocation0 [shape = 'u32[]', space=smem, size = 0x4, offset = 0x4, fixed_abs, tag = 'smem constant byte address 0x4 - core index']
  #allocation1 [shape = 'u32[144,128]{1,0:T(1,128)}', space=vmem, size = 0x12000, scoped, tag = 'internal scratch']
  %s0 = inlined_call_operand.vmem [shape: bf16[32,256], index: 0, kind: input, shape index: {}]
  %s1 = inlined_call_operand.vmem [shape: bf16[256,128], index: 1, kind: input, shape index: {}]
  %s2 = inlined_call_operand.vmem [shape: f32[32,1], index: 2, kind: input, shape index: {}]
  %s3 = inlined_call_operand.vmem [shape: bf16[32,128], index: 3, kind: output, shape index: {}]
  %s4 = sld [smem:[#allocation0]]
  $region22: #{_forward.14} parent=0
    _
  %s6 = ssub.s32 1, %s4
  %s7 = scalar_select 0, %s6, %s4
  // Predicated region
  $region2: #{_forward.14} parent=0 // pred_check
    _
  $region3: #{_forward.14} parent=0 // pred_check_branch
    %9 = sbr.rel (0) target = $region5
  $region4: #{_forward.14} parent=0 // pred_region
    _
  $region5: #{_forward.14} parent=0 // pred_fallthru
    _
  // Predicated region
  $region6: #{_forward.14} parent=0 // pred_check
    _
  $region7: #{_forward.14} parent=0 // pred_check_branch
    %11 = sbr.rel (0) target = $region9
  $region8: #{_forward.14} parent=0 // pred_region
    _
  $region9: #{_forward.14} parent=0 // pred_fallthru
    _
  // Predicated region
  $region10: #{_forward.14} parent=0 // pred_check
    _
  $region11: #{_forward.14} parent=0 // pred_check_branch
    %13 = sbr.rel (0) target = $region13
  $region12: #{_forward.14} parent=0 // pred_region
    _
  $region13: #{_forward.14} parent=0 // pred_fallthru
    _
  %v15 = vld [vmem:[%s0] sm:$0xff]
  %v16 = vld [vmem:[%s0 + $0x8] sm:$0xff]
  %v17 = vld [vmem:[%s0 + $0x10] sm:$0xff]
  %v18 = vld [vmem:[%s0 + $0x18] sm:$0xff]
  %v19 = vld [vmem:[%s1] sm:$0xf]
  %v20 = vld [vmem:[%s1 + $0x4] sm:$0xf]
  %v21 = vld [vmem:[%s1 + $0x8] sm:$0xf]
  %v22 = vld [vmem:[%s1 + $0xc] sm:$0xf]
  %v23 = vld [vmem:[%s1 + $0x10] sm:$0xf]
  %v24 = vld [vmem:[%s1 + $0x14] sm:$0xf]
  %v25 = vld [vmem:[%s1 + $0x18] sm:$0xf]
  %v26 = vld [vmem:[%s1 + $0x1c] sm:$0xf]
  %v27 = vld [vmem:[%s1 + $0x20] sm:$0xf]
  %v28 = vld [vmem:[%s1 + $0x24] sm:$0xf]
  %v29 = vld [vmem:[%s1 + $0x28] sm:$0xf]
  %v30 = vld [vmem:[%s1 + $0x2c] sm:$0xf]
  %v31 = vld [vmem:[%s1 + $0x30] sm:$0xf]
  %v32 = vld [vmem:[%s1 + $0x34] sm:$0xf]
  %v33 = vld [vmem:[%s1 + $0x38] sm:$0xf]
  %v34 = vld [vmem:[%s1 + $0x3c] sm:$0xf]
  %v35 = vld [vmem:[%s1 + $0x40] sm:$0xf]
  %v36 = vld [vmem:[%s1 + $0x44] sm:$0xf]
  %v37 = vld [vmem:[%s1 + $0x48] sm:$0xf]
  %v38 = vld [vmem:[%s1 + $0x4c] sm:$0xf]
  %v39 = vld [vmem:[%s1 + $0x50] sm:$0xf]
  %v40 = vld [vmem:[%s1 + $0x54] sm:$0xf]
  %v41 = vld [vmem:[%s1 + $0x58] sm:$0xf]
  %v42 = vld [vmem:[%s1 + $0x5c] sm:$0xf]
  %v43 = vld [vmem:[%s1 + $0x60] sm:$0xf]
  %v44 = vld [vmem:[%s1 + $0x64] sm:$0xf]
  %v45 = vld [vmem:[%s1 + $0x68] sm:$0xf]
  %v46 = vld [vmem:[%s1 + $0x6c] sm:$0xf]
  %v47 = vld [vmem:[%s1 + $0x70] sm:$0xf]
  %v48 = vld [vmem:[%s1 + $0x74] sm:$0xf]
  %v49 = vld [vmem:[%s1 + $0x78] sm:$0xf]
  %v50 = vld [vmem:[%s1 + $0x7c] sm:$0xf]
  %v51 = vld [vmem:[%s2] sm:$0xff]
  %v52 = vld [vmem:[%s2 + $0x8] sm:$0xff]
  %v53 = vld [vmem:[%s2 + $0x10] sm:$0xff]
  %v54 = vld [vmem:[%s2 + $0x18] sm:$0xff]
  %56 = vset.pattern.permute.xlu0 0
  %57 = vperm.xlu0 %56, %v51
  %v58 = vpop.permute.xlu0 %57
  %61 = vset.pattern.permute.xlu0 0
  %62 = vperm.xlu0 %61, %v52
  %v63 = vpop.permute.xlu0 %62
  %66 = vset.pattern.permute.xlu0 0
  %67 = vperm.xlu0 %66, %v53
  %v68 = vpop.permute.xlu0 %67
  %71 = vset.pattern.permute.xlu0 0
  %72 = vperm.xlu0 %71, %v54
  %v73 = vpop.permute.xlu0 %72
  %v79 = vunpack.c.l.b16 %v15
  %v80 = vunpack.c.h.b16 %v15
  %v81 = vunpack.c.l.b16 %v16
  %v82 = vunpack.c.h.b16 %v16
  %v83 = vunpack.c.l.b16 %v17
  %v84 = vunpack.c.h.b16 %v17
  %v85 = vunpack.c.l.b16 %v18
  %v86 = vunpack.c.h.b16 %v18
  %v87 = vpack.c.b16 %v81, %v79
  %v88 = vpack.c.b16 %v82, %v80
  %v89 = vpack.c.b16 %v85, %v83
  %v90 = vpack.c.b16 %v86, %v84
  %v127 = vunpack.c.l.b16 %v19
  %v128 = vunpack.c.l.b16 %v20
  %v129 = vunpack.c.l.b16 %v21
  %v130 = vunpack.c.l.b16 %v22
  %v131 = vunpack.c.l.b16 %v23
  %v132 = vunpack.c.l.b16 %v24
  %v133 = vunpack.c.l.b16 %v25
  %v134 = vunpack.c.l.b16 %v26
  %v135 = vunpack.c.l.b16 %v27
  %v136 = vunpack.c.l.b16 %v28
  %v137 = vunpack.c.l.b16 %v29
  %v138 = vunpack.c.l.b16 %v30
  %v139 = vunpack.c.l.b16 %v31
  %v140 = vunpack.c.l.b16 %v32
  %v141 = vunpack.c.l.b16 %v33
  %v142 = vunpack.c.l.b16 %v34
  %v143 = vunpack.c.l.b16 %v35
  %v144 = vunpack.c.l.b16 %v36
  %v145 = vunpack.c.l.b16 %v37
  %v146 = vunpack.c.l.b16 %v38
  %v147 = vunpack.c.l.b16 %v39
  %v148 = vunpack.c.l.b16 %v40
  %v149 = vunpack.c.l.b16 %v41
  %v150 = vunpack.c.l.b16 %v42
  %v151 = vunpack.c.l.b16 %v43
  %v152 = vunpack.c.l.b16 %v44
  %v153 = vunpack.c.l.b16 %v45
  %v154 = vunpack.c.l.b16 %v46
  %v155 = vunpack.c.l.b16 %v47
  %v156 = vunpack.c.l.b16 %v48
  %v157 = vunpack.c.l.b16 %v49
  %v158 = vunpack.c.l.b16 %v50
  %v159 = vpack.c.b16 %v128, %v127
  %v160 = vpack.c.b16 %v130, %v129
  %v161 = vpack.c.b16 %v132, %v131
  %v162 = vpack.c.b16 %v134, %v133
  %v163 = vpack.c.b16 %v136, %v135
  %v164 = vpack.c.b16 %v138, %v137
  %v165 = vpack.c.b16 %v140, %v139
  %v166 = vpack.c.b16 %v142, %v141
  %v167 = vpack.c.b16 %v144, %v143
  %v168 = vpack.c.b16 %v146, %v145
  %v169 = vpack.c.b16 %v148, %v147
  %v170 = vpack.c.b16 %v150, %v149
  %v171 = vpack.c.b16 %v152, %v151
  %v172 = vpack.c.b16 %v154, %v153
  %v173 = vpack.c.b16 %v156, %v155
  %v174 = vpack.c.b16 %v158, %v157
  %191 = vmatprep.subr.bf16.mxu0 0
  %192 = vmatpush1.bf16.msra.mxu0 %v166
  %193 = vmatprep.subr.bf16.mxu0 0
  %194 = vmatpush1.bf16.msra.mxu0 %v165
  %195 = vmatprep.subr.bf16.mxu0 0
  %196 = vmatpush1.bf16.msra.mxu0 %v164
  %197 = vmatprep.subr.bf16.mxu0 0
  %198 = vmatpush1.bf16.msra.mxu0 %v163
  %199 = vmatprep.subr.bf16.mxu0 0
  %200 = vmatpush1.bf16.msra.mxu0 %v162
  %201 = vmatprep.subr.bf16.mxu0 0
  %202 = vmatpush1.bf16.msra.mxu0 %v161
  %203 = vmatprep.subr.bf16.mxu0 0
  %204 = vmatpush1.bf16.msra.mxu0 %v160
  %205 = vmatprep.subr.bf16.mxu0 0
  %206 = vmatpush1.bf16.msra.mxu0 %v159
  %207 = vmatprep.subr.bf16.mxu0 0
  %208 = vmatpush2.bf16.msra.mxu0 %v174
  %209 = vmatprep.subr.bf16.mxu0 0
  %210 = vmatpush2.bf16.msra.mxu0 %v173
  %211 = vmatprep.subr.bf16.mxu0 0
  %212 = vmatpush2.bf16.msra.mxu0 %v172
  %213 = vmatprep.subr.bf16.mxu0 0
  %214 = vmatpush2.bf16.msra.mxu0 %v171
  %215 = vmatprep.subr.bf16.mxu0 0
  %216 = vmatpush2.bf16.msra.mxu0 %v170
  %217 = vmatprep.subr.bf16.mxu0 0
  %218 = vmatpush2.bf16.msra.mxu0 %v169
  %219 = vmatprep.subr.bf16.mxu0 0
  %220 = vmatpush2.bf16.msra.mxu0 %v168
  %221 = vmatprep.subr.bf16.mxu0 0
  %222 = vmatpush2.bf16.msra.mxu0 %v167
  %223 = vmatprep.mubr.bf16.mxu0 %v88
  %224 = vmatmul.mubr.bf16.gmra.mxu0 %v87
  %v225 = vpop.f32.mrf.mxu0
  %v226 = vadd.f32 %v58, %v225
  %v227 = vpop.f32.mrf.mxu0
  %v228 = vpop.f32.mrf.mxu0
  %v229 = vadd.f32 %v63, %v228
  %v230 = vpop.f32.mrf.mxu0
  %231 = vmatprep.mubr.bf16.mxu0 %v90
  %232 = vmatmul.mubr.bf16.gmra.mxu0 %v89
  %v233 = vpop.f32.mrf.mxu0
  %v234 = vadd.f32 %v68, %v233
  %v235 = vpop.f32.mrf.mxu0
  %v236 = vpop.f32.mrf.mxu0
  %v237 = vadd.f32 %v73, %v236
  %v238 = vpop.f32.mrf.mxu0
  %239 = vdwg.mxu0
  %v240 = vmax.f32 %v226, 0.0
  %v241 = vmax.f32 %v229, 0.0
  %v242 = vmax.f32 %v234, 0.0
  %v243 = vmax.f32 %v237, 0.0
  %v244 = vpack.c.bf16 %v241, %v240
  %v245 = vpack.c.bf16 %v243, %v242
  %v248 = vunpack.c.l.b16 %v244
  %v249 = vunpack.c.h.b16 %v244
  %v250 = vunpack.c.l.b16 %v245
  %v251 = vunpack.c.h.b16 %v245
  %v252 = vpack.c.b16 %v248, %v248
  %v253 = vpack.c.b16 %v249, %v249
  %v254 = vpack.c.b16 %v250, %v250
  %v255 = vpack.c.b16 %v251, %v251
  %260 = vst [vmem:[%s3] sm:$0xf] %v252
  %261 = vst [vmem:[%s3 + $0x4] sm:$0xf] %v253
  %262 = vst [vmem:[%s3 + $0x8] sm:$0xf] %v254
  %263 = vst [vmem:[%s3 + $0xc] sm:$0xf] %v255
  // Predicated region
  $region14: #{_forward.14} parent=0 // pred_check
    _
  $region15: #{_forward.14} parent=0 // pred_check_branch
    %265 = sbr.rel (0) target = $region17
  $region16: #{_forward.14} parent=0 // pred_region
    _
  $region17: #{_forward.14} parent=0 // pred_fallthru
    _
  // Predicated region
  $region18: #{_forward.14} parent=0 // pred_check
    _
  $region19: #{_forward.14} parent=0 // pred_check_branch
    %267 = sbr.rel (0) target = $region21
  $region20: #{_forward.14} parent=0 // pred_region
    _
  $region21: #{_forward.14} parent=0 // pred_fallthru
    _

// kernel: _forward.15
$region0: #{_forward.15}
  #allocation0 [shape = 'u32[]', space=smem, size = 0x4, offset = 0x4, fixed_abs, tag = 'smem constant byte address 0x4 - core index']
  #allocation1 [shape = 'u32[144,128]{1,0:T(1,128)}', space=vmem, size = 0x12000, scoped, tag = 'internal scratch']
  %s0 = inlined_call_operand.vmem [shape: bf16[32,384], index: 0, kind: input, shape index: {}]
  %s1 = inlined_call_operand.vmem [shape: bf16[384,128], index: 1, kind: input, shape index: {}]
  %s2 = inlined_call_operand.vmem [shape: f32[32,1], index: 2, kind: input, shape index: {}]
  %s3 = inlined_call_operand.vmem [shape: bf16[32,128], index: 3, kind: output, shape index: {}]
  %s4 = sld [smem:[#allocation0]]
  $region22: #{_forward.15} parent=0
    _
  %s6 = ssub.s32 1, %s4
  %s7 = scalar_select 0, %s6, %s4
  // Predicated region
  $region2: #{_forward.15} parent=0 // pred_check
    _
  $region3: #{_forward.15} parent=0 // pred_check_branch
    %9 = sbr.rel (0) target = $region5
  $region4: #{_forward.15} parent=0 // pred_region
    _
  $region5: #{_forward.15} parent=0 // pred_fallthru
    _
  // Predicated region
  $region6: #{_forward.15} parent=0 // pred_check
    _
  $region7: #{_forward.15} parent=0 // pred_check_branch
    %11 = sbr.rel (0) target = $region9
  $region8: #{_forward.15} parent=0 // pred_region
    _
  $region9: #{_forward.15} parent=0 // pred_fallthru
    _
  // Predicated region
  $region10: #{_forward.15} parent=0 // pred_check
    _
  $region11: #{_forward.15} parent=0 // pred_check_branch
    %13 = sbr.rel (0) target = $region13
  $region12: #{_forward.15} parent=0 // pred_region
    _
  $region13: #{_forward.15} parent=0 // pred_fallthru
    _
  %v15 = vld [vmem:[%s0] sm:$0xff]
  %v16 = vld [vmem:[%s0 + $0x8] sm:$0xf]
  %v17 = vld [vmem:[%s0 + $0xc] sm:$0xff]
  %v18 = vld [vmem:[%s0 + $0x14] sm:$0xf]
  %v19 = vld [vmem:[%s0 + $0x18] sm:$0xff]
  %v20 = vld [vmem:[%s0 + $0x20] sm:$0xf]
  %v21 = vld [vmem:[%s0 + $0x24] sm:$0xff]
  %v22 = vld [vmem:[%s0 + $0x2c] sm:$0xf]
  %v23 = vld [vmem:[%s1] sm:$0xf]
  %v24 = vld [vmem:[%s1 + $0x4] sm:$0xf]
  %v25 = vld [vmem:[%s1 + $0x8] sm:$0xf]
  %v26 = vld [vmem:[%s1 + $0xc] sm:$0xf]
  %v27 = vld [vmem:[%s1 + $0x10] sm:$0xf]
  %v28 = vld [vmem:[%s1 + $0x14] sm:$0xf]
  %v29 = vld [vmem:[%s1 + $0x18] sm:$0xf]
  %v30 = vld [vmem:[%s1 + $0x1c] sm:$0xf]
  %v31 = vld [vmem:[%s1 + $0x20] sm:$0xf]
  %v32 = vld [vmem:[%s1 + $0x24] sm:$0xf]
  %v33 = vld [vmem:[%s1 + $0x28] sm:$0xf]
  %v34 = vld [vmem:[%s1 + $0x2c] sm:$0xf]
  %v35 = vld [vmem:[%s1 + $0x30] sm:$0xf]
  %v36 = vld [vmem:[%s1 + $0x34] sm:$0xf]
  %v37 = vld [vmem:[%s1 + $0x38] sm:$0xf]
  %v38 = vld [vmem:[%s1 + $0x3c] sm:$0xf]
  %v39 = vld [vmem:[%s1 + $0x40] sm:$0xf]
  %v40 = vld [vmem:[%s1 + $0x44] sm:$0xf]
  %v41 = vld [vmem:[%s1 + $0x48] sm:$0xf]
  %v42 = vld [vmem:[%s1 + $0x4c] sm:$0xf]
  %v43 = vld [vmem:[%s1 + $0x50] sm:$0xf]
  %v44 = vld [vmem:[%s1 + $0x54] sm:$0xf]
  %v45 = vld [vmem:[%s1 + $0x58] sm:$0xf]
  %v46 = vld [vmem:[%s1 + $0x5c] sm:$0xf]
  %v47 = vld [vmem:[%s1 + $0x60] sm:$0xf]
  %v48 = vld [vmem:[%s1 + $0x64] sm:$0xf]
  %v49 = vld [vmem:[%s1 + $0x68] sm:$0xf]
  %v50 = vld [vmem:[%s1 + $0x6c] sm:$0xf]
  %v51 = vld [vmem:[%s1 + $0x70] sm:$0xf]
  %v52 = vld [vmem:[%s1 + $0x74] sm:$0xf]
  %v53 = vld [vmem:[%s1 + $0x78] sm:$0xf]
  %v54 = vld [vmem:[%s1 + $0x7c] sm:$0xf]
  %v55 = vld [vmem:[%s1 + $0x80] sm:$0xf]
  %v56 = vld [vmem:[%s1 + $0x84] sm:$0xf]
  %v57 = vld [vmem:[%s1 + $0x88] sm:$0xf]
  %v58 = vld [vmem:[%s1 + $0x8c] sm:$0xf]
  %v59 = vld [vmem:[%s1 + $0x90] sm:$0xf]
  %v60 = vld [vmem:[%s1 + $0x94] sm:$0xf]
  %v61 = vld [vmem:[%s1 + $0x98] sm:$0xf]
  %v62 = vld [vmem:[%s1 + $0x9c] sm:$0xf]
  %v63 = vld [vmem:[%s1 + $0xa0] sm:$0xf]
  %v64 = vld [vmem:[%s1 + $0xa4] sm:$0xf]
  %v65 = vld [vmem:[%s1 + $0xa8] sm:$0xf]
  %v66 = vld [vmem:[%s1 + $0xac] sm:$0xf]
  %v67 = vld [vmem:[%s1 + $0xb0] sm:$0xf]
  %v68 = vld [vmem:[%s1 + $0xb4] sm:$0xf]
  %v69 = vld [vmem:[%s1 + $0xb8] sm:$0xf]
  %v70 = vld [vmem:[%s1 + $0xbc] sm:$0xf]
  %v71 = vld [vmem:[%s2] sm:$0xff]
  %v72 = vld [vmem:[%s2 + $0x8] sm:$0xff]
  %v73 = vld [vmem:[%s2 + $0x10] sm:$0xff]
  %v74 = vld [vmem:[%s2 + $0x18] sm:$0xff]
  %76 = vset.pattern.permute.xlu0 0
  %77 = vperm.xlu0 %76, %v71
  %v78 = vpop.permute.xlu0 %77
  %81 = vset.pattern.permute.xlu0 0
  %82 = vperm.xlu0 %81, %v72
  %v83 = vpop.permute.xlu0 %82
  %86 = vset.pattern.permute.xlu0 0
  %87 = vperm.xlu0 %86, %v73
  %v88 = vpop.permute.xlu0 %87
  %91 = vset.pattern.permute.xlu0 0
  %92 = vperm.xlu0 %91, %v74
  %v93 = vpop.permute.xlu0 %92
  %v103 = vunpack.c.l.b16 %v15
  %v104 = vunpack.c.h.b16 %v15
  %v105 = vunpack.c.l.b16 %v16
  %v106 = vunpack.c.l.b16 %v17
  %v107 = vunpack.c.h.b16 %v17
  %v108 = vunpack.c.l.b16 %v18
  %v109 = vunpack.c.l.b16 %v19
  %v110 = vunpack.c.h.b16 %v19
  %v111 = vunpack.c.l.b16 %v20
  %v112 = vunpack.c.l.b16 %v21
  %v113 = vunpack.c.h.b16 %v21
  %v114 = vunpack.c.l.b16 %v22
  %v115 = vpack.c.b16 %v106, %v103
  %v116 = vpack.c.b16 %v107, %v104
  %v117 = vpack.c.b16 %v108, %v105
  %v118 = vpack.c.b16 %v112, %v109
  %v119 = vpack.c.b16 %v113, %v110
  %v120 = vpack.c.b16 %v114, %v111
  %v175 = vunpack.c.l.b16 %v23
  %v176 = vunpack.c.l.b16 %v24
  %v177 = vunpack.c.l.b16 %v25
  %v178 = vunpack.c.l.b16 %v26
  %v179 = vunpack.c.l.b16 %v27
  %v180 = vunpack.c.l.b16 %v28
  %v181 = vunpack.c.l.b16 %v29
  %v182 = vunpack.c.l.b16 %v30
  %v183 = vunpack.c.l.b16 %v31
  %v184 = vunpack.c.l.b16 %v32
  %v185 = vunpack.c.l.b16 %v33
  %v186 = vunpack.c.l.b16 %v34
  %v187 = vunpack.c.l.b16 %v35
  %v188 = vunpack.c.l.b16 %v36
  %v189 = vunpack.c.l.b16 %v37
  %v190 = vunpack.c.l.b16 %v38
  %v191 = vunpack.c.l.b16 %v39
  %v192 = vunpack.c.l.b16 %v40
  %v193 = vunpack.c.l.b16 %v41
  %v194 = vunpack.c.l.b16 %v42
  %v195 = vunpack.c.l.b16 %v43
  %v196 = vunpack.c.l.b16 %v44
  %v197 = vunpack.c.l.b16 %v45
  %v198 = vunpack.c.l.b16 %v46
  %v199 = vunpack.c.l.b16 %v47
  %v200 = vunpack.c.l.b16 %v48
  %v201 = vunpack.c.l.b16 %v49
  %v202 = vunpack.c.l.b16 %v50
  %v203 = vunpack.c.l.b16 %v51
  %v204 = vunpack.c.l.b16 %v52
  %v205 = vunpack.c.l.b16 %v53
  %v206 = vunpack.c.l.b16 %v54
  %v207 = vunpack.c.l.b16 %v55
  %v208 = vunpack.c.l.b16 %v56
  %v209 = vunpack.c.l.b16 %v57
  %v210 = vunpack.c.l.b16 %v58
  %v211 = vunpack.c.l.b16 %v59
  %v212 = vunpack.c.l.b16 %v60
  %v213 = vunpack.c.l.b16 %v61
  %v214 = vunpack.c.l.b16 %v62
  %v215 = vunpack.c.l.b16 %v63
  %v216 = vunpack.c.l.b16 %v64
  %v217 = vunpack.c.l.b16 %v65
  %v218 = vunpack.c.l.b16 %v66
  %v219 = vunpack.c.l.b16 %v67
  %v220 = vunpack.c.l.b16 %v68
  %v221 = vunpack.c.l.b16 %v69
  %v222 = vunpack.c.l.b16 %v70
  %v223 = vpack.c.b16 %v176, %v175
  %v224 = vpack.c.b16 %v178, %v177
  %v225 = vpack.c.b16 %v180, %v179
  %v226 = vpack.c.b16 %v182, %v181
  %v227 = vpack.c.b16 %v184, %v183
  %v228 = vpack.c.b16 %v186, %v185
  %v229 = vpack.c.b16 %v188, %v187
  %v230 = vpack.c.b16 %v190, %v189
  %v231 = vpack.c.b16 %v192, %v191
  %v232 = vpack.c.b16 %v194, %v193
  %v233 = vpack.c.b16 %v196, %v195
  %v234 = vpack.c.b16 %v198, %v197
  %v235 = vpack.c.b16 %v200, %v199
  %v236 = vpack.c.b16 %v202, %v201
  %v237 = vpack.c.b16 %v204, %v203
  %v238 = vpack.c.b16 %v206, %v205
  %v239 = vpack.c.b16 %v208, %v207
  %v240 = vpack.c.b16 %v210, %v209
  %v241 = vpack.c.b16 %v212, %v211
  %v242 = vpack.c.b16 %v214, %v213
  %v243 = vpack.c.b16 %v216, %v215
  %v244 = vpack.c.b16 %v218, %v217
  %v245 = vpack.c.b16 %v220, %v219
  %v246 = vpack.c.b16 %v222, %v221
  %271 = vmatprep.subr.bf16.mxu0 0
  %272 = vmatpush1.bf16.msra.mxu0 %v230
  %273 = vmatprep.subr.bf16.mxu0 0
  %274 = vmatpush1.bf16.msra.mxu0 %v229
  %275 = vmatprep.subr.bf16.mxu0 0
  %276 = vmatpush1.bf16.msra.mxu0 %v228
  %277 = vmatprep.subr.bf16.mxu0 0
  %278 = vmatpush1.bf16.msra.mxu0 %v227
  %279 = vmatprep.subr.bf16.mxu0 0
  %280 = vmatpush1.bf16.msra.mxu0 %v226
  %281 = vmatprep.subr.bf16.mxu0 0
  %282 = vmatpush1.bf16.msra.mxu0 %v225
  %283 = vmatprep.subr.bf16.mxu0 0
  %284 = vmatpush1.bf16.msra.mxu0 %v224
  %285 = vmatprep.subr.bf16.mxu0 0
  %286 = vmatpush1.bf16.msra.mxu0 %v223
  %287 = vmatprep.subr.bf16.mxu0 0
  %288 = vmatpush2.bf16.msra.mxu0 %v238
  %289 = vmatprep.subr.bf16.mxu0 0
  %290 = vmatpush2.bf16.msra.mxu0 %v237
  %291 = vmatprep.subr.bf16.mxu0 0
  %292 = vmatpush2.bf16.msra.mxu0 %v236
  %293 = vmatprep.subr.bf16.mxu0 0
  %294 = vmatpush2.bf16.msra.mxu0 %v235
  %295 = vmatprep.subr.bf16.mxu0 0
  %296 = vmatpush2.bf16.msra.mxu0 %v234
  %297 = vmatprep.subr.bf16.mxu0 0
  %298 = vmatpush2.bf16.msra.mxu0 %v233
  %299 = vmatprep.subr.bf16.mxu0 0
  %300 = vmatpush2.bf16.msra.mxu0 %v232
  %301 = vmatprep.subr.bf16.mxu0 0
  %302 = vmatpush2.bf16.msra.mxu0 %v231
  %303 = vmatprep.mubr.bf16.mxu0 %v116
  %304 = vmatmul.mubr.bf16.gmra.mxu0 %v115
  %v305 = vpop.f32.mrf.mxu0
  %v306 = vadd.f32 %v78, %v305
  %v307 = vpop.f32.mrf.mxu0
  %v308 = vpop.f32.mrf.mxu0
  %v309 = vadd.f32 %v83, %v308
  %v310 = vpop.f32.mrf.mxu0
  %311 = vmatprep.mubr.bf16.mxu0 %v119
  %312 = vmatmul.mubr.bf16.gmra.mxu0 %v118
  %v313 = vpop.f32.mrf.mxu0
  %v314 = vadd.f32 %v88, %v313
  %v315 = vpop.f32.mrf.mxu0
  %v316 = vpop.f32.mrf.mxu0
  %v317 = vadd.f32 %v93, %v316
  %v318 = vpop.f32.mrf.mxu0
  %319 = vdwg.mxu0
  %320 = vmatprep.subr.bf16.mxu0 0
  %321 = vmatpush1.bf16.msra.mxu0 %v246
  %322 = vmatprep.subr.bf16.mxu0 0
  %323 = vmatpush1.bf16.msra.mxu0 %v245
  %324 = vmatprep.subr.bf16.mxu0 0
  %325 = vmatpush1.bf16.msra.mxu0 %v244
  %326 = vmatprep.subr.bf16.mxu0 0
  %327 = vmatpush1.bf16.msra.mxu0 %v243
  %328 = vmatprep.subr.bf16.mxu0 0
  %329 = vmatpush1.bf16.msra.mxu0 %v242
  %330 = vmatprep.subr.bf16.mxu0 0
  %331 = vmatpush1.bf16.msra.mxu0 %v241
  %332 = vmatprep.subr.bf16.mxu0 0
  %333 = vmatpush1.bf16.msra.mxu0 %v240
  %334 = vmatprep.subr.bf16.mxu0 0
  %335 = vmatpush1.bf16.msra.mxu0 %v239
  %336 = vmatprep.subr.bf16.mxu0 0
  %337 = vmatpush2.bf16.msra.mxu0 0
  %338 = vmatprep.subr.bf16.mxu0 0
  %339 = vmatpush2.bf16.msra.mxu0 0
  %340 = vmatprep.subr.bf16.mxu0 0
  %341 = vmatpush2.bf16.msra.mxu0 0
  %342 = vmatprep.subr.bf16.mxu0 0
  %343 = vmatpush2.bf16.msra.mxu0 0
  %344 = vmatprep.subr.bf16.mxu0 0
  %345 = vmatpush2.bf16.msra.mxu0 0
  %346 = vmatprep.subr.bf16.mxu0 0
  %347 = vmatpush2.bf16.msra.mxu0 0
  %348 = vmatprep.subr.bf16.mxu0 0
  %349 = vmatpush2.bf16.msra.mxu0 0
  %350 = vmatprep.subr.bf16.mxu0 0
  %351 = vmatpush2.bf16.msra.mxu0 0
  %352 = vmatprep.mubr.bf16.mxu0 0
  %353 = vmatmul.mubr.bf16.gmra.mxu0 %v117
  %v354 = vpop.f32.mrf.mxu0
  %v355 = vadd.f32 %v306, %v354
  %v356 = vpop.f32.mrf.mxu0
  %v357 = vpop.f32.mrf.mxu0
  %v358 = vadd.f32 %v309, %v357
  %v359 = vpop.f32.mrf.mxu0
  %360 = vmatprep.mubr.bf16.mxu0 0
  %361 = vmatmul.mubr.bf16.gmra.mxu0 %v120
  %v362 = vpop.f32.mrf.mxu0
  %v363 = vadd.f32 %v314, %v362
  %v364 = vpop.f32.mrf.mxu0
  %v365 = vpop.f32.mrf.mxu0
  %v366 = vadd.f32 %v317, %v365
  %v367 = vpop.f32.mrf.mxu0
  %368 = vdwg.mxu0
  %vm369 = vcmp.gt.f32.partialorder %v355, 0.0
  %vm370 = vcmp.gt.f32.partialorder %v358, 0.0
  %vm371 = vcmp.gt.f32.partialorder %v363, 0.0
  %vm372 = vcmp.gt.f32.partialorder %v366, 0.0
  %v373 = vmin.f32 %v355, 0.0
  %v374 = vmin.f32 %v358, 0.0
  %v375 = vmin.f32 %v363, 0.0
  %v376 = vmin.f32 %v366, 0.0
  %v377 = vmul.f32 %v373, 1.442695
  %v378 = vpow.pop %v377
  %v379 = vmul.f32 %v374, 1.442695
  %v380 = vpow.pop %v379
  %v381 = vmul.f32 %v375, 1.442695
  %v382 = vpow.pop %v381
  %v383 = vmul.f32 %v376, 1.442695
  %v384 = vpow.pop %v383
  %v385 = vsub.f32 %v378, 1.0
  %v386 = vsub.f32 %v380, 1.0
  %v387 = vsub.f32 %v382, 1.0
  %v388 = vsub.f32 %v384, 1.0
  %v389 = vsel %vm369, %v355, %v385
  %v390 = vsel %vm370, %v358, %v386
  %v391 = vsel %vm371, %v363, %v387
  %v392 = vsel %vm372, %v366, %v388
  %v393 = vpack.c.bf16 %v390, %v389
  %v394 = vpack.c.bf16 %v392, %v391
  %v397 = vunpack.c.l.b16 %v393
  %v398 = vunpack.c.h.b16 %v393
  %v399 = vunpack.c.l.b16 %v394
  %v400 = vunpack.c.h.b16 %v394
  %v401 = vpack.c.b16 %v397, %v397
  %v402 = vpack.c.b16 %v398, %v398
  %v403 = vpack.c.b16 %v399, %v399
  %v404 = vpack.c.b16 %v400, %v400
  %409 = vst [vmem:[%s3] sm:$0xf] %v401
  %410 = vst [vmem:[%s3 + $0x4] sm:$0xf] %v402
  %411 = vst [vmem:[%s3 + $0x8] sm:$0xf] %v403
  %412 = vst [vmem:[%s3 + $0xc] sm:$0xf] %v404
  // Predicated region
  $region14: #{_forward.15} parent=0 // pred_check
    _
  $region15: #{_forward.15} parent=0 // pred_check_branch
    %414 = sbr.rel (0) target = $region17
  $region16: #{_forward.15} parent=0 // pred_region
    _
  $region17: #{_forward.15} parent=0 // pred_fallthru
    _
  // Predicated region
  $region18: #{_forward.15} parent=0 // pred_check
    _
  $region19: #{_forward.15} parent=0 // pred_check_branch
    %416 = sbr.rel (0) target = $region21
  $region20: #{_forward.15} parent=0 // pred_region
    _
  $region21: #{_forward.15} parent=0 // pred_fallthru
    _

// kernel: _forward.16
$region0: #{_forward.16}
  #allocation0 [shape = 'u32[]', space=smem, size = 0x4, offset = 0x4, fixed_abs, tag = 'smem constant byte address 0x4 - core index']
  #allocation1 [shape = 'u32[144,128]{1,0:T(1,128)}', space=vmem, size = 0x12000, scoped, tag = 'internal scratch']
  %s0 = inlined_call_operand.vmem [shape: bf16[32,512], index: 0, kind: input, shape index: {}]
  %s1 = inlined_call_operand.vmem [shape: bf16[512,128], index: 1, kind: input, shape index: {}]
  %s2 = inlined_call_operand.vmem [shape: f32[32,1], index: 2, kind: input, shape index: {}]
  %s3 = inlined_call_operand.vmem [shape: bf16[32,128], index: 3, kind: output, shape index: {}]
  %s4 = sld [smem:[#allocation0]]
  $region22: #{_forward.16} parent=0
    _
  %s6 = ssub.s32 1, %s4
  %s7 = scalar_select 0, %s6, %s4
  // Predicated region
  $region2: #{_forward.16} parent=0 // pred_check
    _
  $region3: #{_forward.16} parent=0 // pred_check_branch
    %9 = sbr.rel (0) target = $region5
  $region4: #{_forward.16} parent=0 // pred_region
    _
  $region5: #{_forward.16} parent=0 // pred_fallthru
    _
  // Predicated region
  $region6: #{_forward.16} parent=0 // pred_check
    _
  $region7: #{_forward.16} parent=0 // pred_check_branch
    %11 = sbr.rel (0) target = $region9
  $region8: #{_forward.16} parent=0 // pred_region
    _
  $region9: #{_forward.16} parent=0 // pred_fallthru
    _
  // Predicated region
  $region10: #{_forward.16} parent=0 // pred_check
    _
  $region11: #{_forward.16} parent=0 // pred_check_branch
    %13 = sbr.rel (0) target = $region13
  $region12: #{_forward.16} parent=0 // pred_region
    _
  $region13: #{_forward.16} parent=0 // pred_fallthru
    _
  %v15 = vld [vmem:[%s0] sm:$0xff]
  %v16 = vld [vmem:[%s0 + $0x8] sm:$0xff]
  %v17 = vld [vmem:[%s0 + $0x10] sm:$0xff]
  %v18 = vld [vmem:[%s0 + $0x18] sm:$0xff]
  %v19 = vld [vmem:[%s0 + $0x20] sm:$0xff]
  %v20 = vld [vmem:[%s0 + $0x28] sm:$0xff]
  %v21 = vld [vmem:[%s0 + $0x30] sm:$0xff]
  %v22 = vld [vmem:[%s0 + $0x38] sm:$0xff]
  %v23 = vld [vmem:[%s1] sm:$0xf]
  %v24 = vld [vmem:[%s1 + $0x4] sm:$0xf]
  %v25 = vld [vmem:[%s1 + $0x8] sm:$0xf]
  %v26 = vld [vmem:[%s1 + $0xc] sm:$0xf]
  %v27 = vld [vmem:[%s1 + $0x10] sm:$0xf]
  %v28 = vld [vmem:[%s1 + $0x14] sm:$0xf]
  %v29 = vld [vmem:[%s1 + $0x18] sm:$0xf]
  %v30 = vld [vmem:[%s1 + $0x1c] sm:$0xf]
  %v31 = vld [vmem:[%s1 + $0x20] sm:$0xf]
  %v32 = vld [vmem:[%s1 + $0x24] sm:$0xf]
  %v33 = vld [vmem:[%s1 + $0x28] sm:$0xf]
  %v34 = vld [vmem:[%s1 + $0x2c] sm:$0xf]
  %v35 = vld [vmem:[%s1 + $0x30] sm:$0xf]
  %v36 = vld [vmem:[%s1 + $0x34] sm:$0xf]
  %v37 = vld [vmem:[%s1 + $0x38] sm:$0xf]
  %v38 = vld [vmem:[%s1 + $0x3c] sm:$0xf]
  %v39 = vld [vmem:[%s1 + $0x40] sm:$0xf]
  %v40 = vld [vmem:[%s1 + $0x44] sm:$0xf]
  %v41 = vld [vmem:[%s1 + $0x48] sm:$0xf]
  %v42 = vld [vmem:[%s1 + $0x4c] sm:$0xf]
  %v43 = vld [vmem:[%s1 + $0x50] sm:$0xf]
  %v44 = vld [vmem:[%s1 + $0x54] sm:$0xf]
  %v45 = vld [vmem:[%s1 + $0x58] sm:$0xf]
  %v46 = vld [vmem:[%s1 + $0x5c] sm:$0xf]
  %v47 = vld [vmem:[%s1 + $0x60] sm:$0xf]
  %v48 = vld [vmem:[%s1 + $0x64] sm:$0xf]
  %v49 = vld [vmem:[%s1 + $0x68] sm:$0xf]
  %v50 = vld [vmem:[%s1 + $0x6c] sm:$0xf]
  %v51 = vld [vmem:[%s1 + $0x70] sm:$0xf]
  %v52 = vld [vmem:[%s1 + $0x74] sm:$0xf]
  %v53 = vld [vmem:[%s1 + $0x78] sm:$0xf]
  %v54 = vld [vmem:[%s1 + $0x7c] sm:$0xf]
  %v55 = vld [vmem:[%s1 + $0x80] sm:$0xf]
  %v56 = vld [vmem:[%s1 + $0x84] sm:$0xf]
  %v57 = vld [vmem:[%s1 + $0x88] sm:$0xf]
  %v58 = vld [vmem:[%s1 + $0x8c] sm:$0xf]
  %v59 = vld [vmem:[%s1 + $0x90] sm:$0xf]
  %v60 = vld [vmem:[%s1 + $0x94] sm:$0xf]
  %v61 = vld [vmem:[%s1 + $0x98] sm:$0xf]
  %v62 = vld [vmem:[%s1 + $0x9c] sm:$0xf]
  %v63 = vld [vmem:[%s1 + $0xa0] sm:$0xf]
  %v64 = vld [vmem:[%s1 + $0xa4] sm:$0xf]
  %v65 = vld [vmem:[%s1 + $0xa8] sm:$0xf]
  %v66 = vld [vmem:[%s1 + $0xac] sm:$0xf]
  %v67 = vld [vmem:[%s1 + $0xb0] sm:$0xf]
  %v68 = vld [vmem:[%s1 + $0xb4] sm:$0xf]
  %v69 = vld [vmem:[%s1 + $0xb8] sm:$0xf]
  %v70 = vld [vmem:[%s1 + $0xbc] sm:$0xf]
  %v71 = vld [vmem:[%s1 + $0xc0] sm:$0xf]
  %v72 = vld [vmem:[%s1 + $0xc4] sm:$0xf]
  %v73 = vld [vmem:[%s1 + $0xc8] sm:$0xf]
  %v74 = vld [vmem:[%s1 + $0xcc] sm:$0xf]
  %v75 = vld [vmem:[%s1 + $0xd0] sm:$0xf]
  %v76 = vld [vmem:[%s1 + $0xd4] sm:$0xf]
  %v77 = vld [vmem:[%s1 + $0xd8] sm:$0xf]
  %v78 = vld [vmem:[%s1 + $0xdc] sm:$0xf]
  %v79 = vld [vmem:[%s1 + $0xe0] sm:$0xf]
  %v80 = vld [vmem:[%s1 + $0xe4] sm:$0xf]
  %v81 = vld [vmem:[%s1 + $0xe8] sm:$0xf]
  %v82 = vld [vmem:[%s1 + $0xec] sm:$0xf]
  %v83 = vld [vmem:[%s1 + $0xf0] sm:$0xf]
  %v84 = vld [vmem:[%s1 + $0xf4] sm:$0xf]
  %v85 = vld [vmem:[%s1 + $0xf8] sm:$0xf]
  %v86 = vld [vmem:[%s1 + $0xfc] sm:$0xf]
  %v87 = vld [vmem:[%s2] sm:$0xff]
  %v88 = vld [vmem:[%s2 + $0x8] sm:$0xff]
  %v89 = vld [vmem:[%s2 + $0x10] sm:$0xff]
  %v90 = vld [vmem:[%s2 + $0x18] sm:$0xff]
  %92 = vset.pattern.permute.xlu0 0
  %93 = vperm.xlu0 %92, %v87
  %v94 = vpop.permute.xlu0 %93
  %97 = vset.pattern.permute.xlu0 0
  %98 = vperm.xlu0 %97, %v88
  %v99 = vpop.permute.xlu0 %98
  %102 = vset.pattern.permute.xlu0 0
  %103 = vperm.xlu0 %102, %v89
  %v104 = vpop.permute.xlu0 %103
  %107 = vset.pattern.permute.xlu0 0
  %108 = vperm.xlu0 %107, %v90
  %v109 = vpop.permute.xlu0 %108
  %v119 = vunpack.c.l.b16 %v15
  %v120 = vunpack.c.h.b16 %v15
  %v121 = vunpack.c.l.b16 %v16
  %v122 = vunpack.c.h.b16 %v16
  %v123 = vunpack.c.l.b16 %v17
  %v124 = vunpack.c.h.b16 %v17
  %v125 = vunpack.c.l.b16 %v18
  %v126 = vunpack.c.h.b16 %v18
  %v127 = vunpack.c.l.b16 %v19
  %v128 = vunpack.c.h.b16 %v19
  %v129 = vunpack.c.l.b16 %v20
  %v130 = vunpack.c.h.b16 %v20
  %v131 = vunpack.c.l.b16 %v21
  %v132 = vunpack.c.h.b16 %v21
  %v133 = vunpack.c.l.b16 %v22
  %v134 = vunpack.c.h.b16 %v22
  %v135 = vpack.c.b16 %v123, %v119
  %v136 = vpack.c.b16 %v124, %v120
  %v137 = vpack.c.b16 %v125, %v121
  %v138 = vpack.c.b16 %v126, %v122
  %v139 = vpack.c.b16 %v131, %v127
  %v140 = vpack.c.b16 %v132, %v128
  %v141 = vpack.c.b16 %v133, %v129
  %v142 = vpack.c.b16 %v134, %v130
  %v215 = vunpack.c.l.b16 %v23
  %v216 = vunpack.c.l.b16 %v24
  %v217 = vunpack.c.l.b16 %v25
  %v218 = vunpack.c.l.b16 %v26
  %v219 = vunpack.c.l.b16 %v27
  %v220 = vunpack.c.l.b16 %v28
  %v221 = vunpack.c.l.b16 %v29
  %v222 = vunpack.c.l.b16 %v30
  %v223 = vunpack.c.l.b16 %v31
  %v224 = vunpack.c.l.b16 %v32
  %v225 = vunpack.c.l.b16 %v33
  %v226 = vunpack.c.l.b16 %v34
  %v227 = vunpack.c.l.b16 %v35
  %v228 = vunpack.c.l.b16 %v36
  %v229 = vunpack.c.l.b16 %v37
  %v230 = vunpack.c.l.b16 %v38
  %v231 = vunpack.c.l.b16 %v39
  %v232 = vunpack.c.l.b16 %v40
  %v233 = vunpack.c.l.b16 %v41
  %v234 = vunpack.c.l.b16 %v42
  %v235 = vunpack.c.l.b16 %v43
  %v236 = vunpack.c.l.b16 %v44
  %v237 = vunpack.c.l.b16 %v45
  %v238 = vunpack.c.l.b16 %v46
  %v239 = vunpack.c.l.b16 %v47
  %v240 = vunpack.c.l.b16 %v48
  %v241 = vunpack.c.l.b16 %v49
  %v242 = vunpack.c.l.b16 %v50
  %v243 = vunpack.c.l.b16 %v51
  %v244 = vunpack.c.l.b16 %v52
  %v245 = vunpack.c.l.b16 %v53
  %v246 = vunpack.c.l.b16 %v54
  %v247 = vunpack.c.l.b16 %v55
  %v248 = vunpack.c.l.b16 %v56
  %v249 = vunpack.c.l.b16 %v57
  %v250 = vunpack.c.l.b16 %v58
  %v251 = vunpack.c.l.b16 %v59
  %v252 = vunpack.c.l.b16 %v60
  %v253 = vunpack.c.l.b16 %v61
  %v254 = vunpack.c.l.b16 %v62
  %v255 = vunpack.c.l.b16 %v63
  %v256 = vunpack.c.l.b16 %v64
  %v257 = vunpack.c.l.b16 %v65
  %v258 = vunpack.c.l.b16 %v66
  %v259 = vunpack.c.l.b16 %v67
  %v260 = vunpack.c.l.b16 %v68
  %v261 = vunpack.c.l.b16 %v69
  %v262 = vunpack.c.l.b16 %v70
  %v263 = vunpack.c.l.b16 %v71
  %v264 = vunpack.c.l.b16 %v72
  %v265 = vunpack.c.l.b16 %v73
  %v266 = vunpack.c.l.b16 %v74
  %v267 = vunpack.c.l.b16 %v75
  %v268 = vunpack.c.l.b16 %v76
  %v269 = vunpack.c.l.b16 %v77
  %v270 = vunpack.c.l.b16 %v78
  %v271 = vunpack.c.l.b16 %v79
  %v272 = vunpack.c.l.b16 %v80
  %v273 = vunpack.c.l.b16 %v81
  %v274 = vunpack.c.l.b16 %v82
  %v275 = vunpack.c.l.b16 %v83
  %v276 = vunpack.c.l.b16 %v84
  %v277 = vunpack.c.l.b16 %v85
  %v278 = vunpack.c.l.b16 %v86
  %v279 = vpack.c.b16 %v216, %v215
  %v280 = vpack.c.b16 %v218, %v217
  %v281 = vpack.c.b16 %v220, %v219
  %v282 = vpack.c.b16 %v222, %v221
  %v283 = vpack.c.b16 %v224, %v223
  %v284 = vpack.c.b16 %v226, %v225
  %v285 = vpack.c.b16 %v228, %v227
  %v286 = vpack.c.b16 %v230, %v229
  %v287 = vpack.c.b16 %v232, %v231
  %v288 = vpack.c.b16 %v234, %v233
  %v289 = vpack.c.b16 %v236, %v235
  %v290 = vpack.c.b16 %v238, %v237
  %v291 = vpack.c.b16 %v240, %v239
  %v292 = vpack.c.b16 %v242, %v241
  %v293 = vpack.c.b16 %v244, %v243
  %v294 = vpack.c.b16 %v246, %v245
  %v295 = vpack.c.b16 %v248, %v247
  %v296 = vpack.c.b16 %v250, %v249
  %v297 = vpack.c.b16 %v252, %v251
  %v298 = vpack.c.b16 %v254, %v253
  %v299 = vpack.c.b16 %v256, %v255
  %v300 = vpack.c.b16 %v258, %v257
  %v301 = vpack.c.b16 %v260, %v259
  %v302 = vpack.c.b16 %v262, %v261
  %v303 = vpack.c.b16 %v264, %v263
  %v304 = vpack.c.b16 %v266, %v265
  %v305 = vpack.c.b16 %v268, %v267
  %v306 = vpack.c.b16 %v270, %v269
  %v307 = vpack.c.b16 %v272, %v271
  %v308 = vpack.c.b16 %v274, %v273
  %v309 = vpack.c.b16 %v276, %v275
  %v310 = vpack.c.b16 %v278, %v277
  %343 = vmatprep.subr.bf16.mxu0 0
  %344 = vmatpush1.bf16.msra.mxu0 %v286
  %345 = vmatprep.subr.bf16.mxu0 0
  %346 = vmatpush1.bf16.msra.mxu0 %v285
  %347 = vmatprep.subr.bf16.mxu0 0
  %348 = vmatpush1.bf16.msra.mxu0 %v284
  %349 = vmatprep.subr.bf16.mxu0 0
  %350 = vmatpush1.bf16.msra.mxu0 %v283
  %351 = vmatprep.subr.bf16.mxu0 0
  %352 = vmatpush1.bf16.msra.mxu0 %v282
  %353 = vmatprep.subr.bf16.mxu0 0
  %354 = vmatpush1.bf16.msra.mxu0 %v281
  %355 = vmatprep.subr.bf16.mxu0 0
  %356 = vmatpush1.bf16.msra.mxu0 %v280
  %357 = vmatprep.subr.bf16.mxu0 0
  %358 = vmatpush1.bf16.msra.mxu0 %v279
  %359 = vmatprep.subr.bf16.mxu0 0
  %360 = vmatpush2.bf16.msra.mxu0 %v294
  %361 = vmatprep.subr.bf16.mxu0 0
  %362 = vmatpush2.bf16.msra.mxu0 %v293
  %363 = vmatprep.subr.bf16.mxu0 0
  %364 = vmatpush2.bf16.msra.mxu0 %v292
  %365 = vmatprep.subr.bf16.mxu0 0
  %366 = vmatpush2.bf16.msra.mxu0 %v291
  %367 = vmatprep.subr.bf16.mxu0 0
  %368 = vmatpush2.bf16.msra.mxu0 %v290
  %369 = vmatprep.subr.bf16.mxu0 0
  %370 = vmatpush2.bf16.msra.mxu0 %v289
  %371 = vmatprep.subr.bf16.mxu0 0
  %372 = vmatpush2.bf16.msra.mxu0 %v288
  %373 = vmatprep.subr.bf16.mxu0 0
  %374 = vmatpush2.bf16.msra.mxu0 %v287
  %375 = vmatprep.mubr.bf16.mxu0 %v136
  %376 = vmatmul.mubr.bf16.gmra.mxu0 %v135
  %v377 = vpop.f32.mrf.mxu0
  %v378 = vadd.f32 %v94, %v377
  %v379 = vpop.f32.mrf.mxu0
  %v380 = vpop.f32.mrf.mxu0
  %v381 = vadd.f32 %v99, %v380
  %v382 = vpop.f32.mrf.mxu0
  %383 = vmatprep.mubr.bf16.mxu0 %v140
  %384 = vmatmul.mubr.bf16.gmra.mxu0 %v139
  %v385 = vpop.f32.mrf.mxu0
  %v386 = vadd.f32 %v104, %v385
  %v387 = vpop.f32.mrf.mxu0
  %v388 = vpop.f32.mrf.mxu0
  %v389 = vadd.f32 %v109, %v388
  %v390 = vpop.f32.mrf.mxu0
  %391 = vdwg.mxu0
  %392 = vmatprep.subr.bf16.mxu0 0
  %393 = vmatpush1.bf16.msra.mxu0 %v302
  %394 = vmatprep.subr.bf16.mxu0 0
  %395 = vmatpush1.bf16.msra.mxu0 %v301
  %396 = vmatprep.subr.bf16.mxu0 0
  %397 = vmatpush1.bf16.msra.mxu0 %v300
  %398 = vmatprep.subr.bf16.mxu0 0
  %399 = vmatpush1.bf16.msra.mxu0 %v299
  %400 = vmatprep.subr.bf16.mxu0 0
  %401 = vmatpush1.bf16.msra.mxu0 %v298
  %402 = vmatprep.subr.bf16.mxu0 0
  %403 = vmatpush1.bf16.msra.mxu0 %v297
  %404 = vmatprep.subr.bf16.mxu0 0
  %405 = vmatpush1.bf16.msra.mxu0 %v296
  %406 = vmatprep.subr.bf16.mxu0 0
  %407 = vmatpush1.bf16.msra.mxu0 %v295
  %408 = vmatprep.subr.bf16.mxu0 0
  %409 = vmatpush2.bf16.msra.mxu0 %v310
  %410 = vmatprep.subr.bf16.mxu0 0
  %411 = vmatpush2.bf16.msra.mxu0 %v309
  %412 = vmatprep.subr.bf16.mxu0 0
  %413 = vmatpush2.bf16.msra.mxu0 %v308
  %414 = vmatprep.subr.bf16.mxu0 0
  %415 = vmatpush2.bf16.msra.mxu0 %v307
  %416 = vmatprep.subr.bf16.mxu0 0
  %417 = vmatpush2.bf16.msra.mxu0 %v306
  %418 = vmatprep.subr.bf16.mxu0 0
  %419 = vmatpush2.bf16.msra.mxu0 %v305
  %420 = vmatprep.subr.bf16.mxu0 0
  %421 = vmatpush2.bf16.msra.mxu0 %v304
  %422 = vmatprep.subr.bf16.mxu0 0
  %423 = vmatpush2.bf16.msra.mxu0 %v303
  %424 = vmatprep.mubr.bf16.mxu0 %v138
  %425 = vmatmul.mubr.bf16.gmra.mxu0 %v137
  %v426 = vpop.f32.mrf.mxu0
  %v427 = vadd.f32 %v378, %v426
  %v428 = vpop.f32.mrf.mxu0
  %v429 = vpop.f32.mrf.mxu0
  %v430 = vadd.f32 %v381, %v429
  %v431 = vpop.f32.mrf.mxu0
  %432 = vmatprep.mubr.bf16.mxu0 %v142
  %433 = vmatmul.mubr.bf16.gmra.mxu0 %v141
  %v434 = vpop.f32.mrf.mxu0
  %v435 = vadd.f32 %v386, %v434
  %v436 = vpop.f32.mrf.mxu0
  %v437 = vpop.f32.mrf.mxu0
  %v438 = vadd.f32 %v389, %v437
  %v439 = vpop.f32.mrf.mxu0
  %440 = vdwg.mxu0
  %vm441 = vcmp.gt.f32.partialorder %v427, 0.0
  %vm442 = vcmp.gt.f32.partialorder %v430, 0.0
  %vm443 = vcmp.gt.f32.partialorder %v435, 0.0
  %vm444 = vcmp.gt.f32.partialorder %v438, 0.0
  %v445 = vmin.f32 %v427, 0.0
  %v446 = vmin.f32 %v430, 0.0
  %v447 = vmin.f32 %v435, 0.0
  %v448 = vmin.f32 %v438, 0.0
  %v449 = vmul.f32 %v445, 1.442695
  %v450 = vpow.pop %v449
  %v451 = vmul.f32 %v446, 1.442695
  %v452 = vpow.pop %v451
  %v453 = vmul.f32 %v447, 1.442695
  %v454 = vpow.pop %v453
  %v455 = vmul.f32 %v448, 1.442695
  %v456 = vpow.pop %v455
  %v457 = vsub.f32 %v450, 1.0
  %v458 = vsub.f32 %v452, 1.0
  %v459 = vsub.f32 %v454, 1.0
  %v460 = vsub.f32 %v456, 1.0
  %v461 = vsel %vm441, %v427, %v457
  %v462 = vsel %vm442, %v430, %v458
  %v463 = vsel %vm443, %v435, %v459
  %v464 = vsel %vm444, %v438, %v460
  %v465 = vpack.c.bf16 %v462, %v461
  %v466 = vpack.c.bf16 %v464, %v463
  %v469 = vunpack.c.l.b16 %v465
  %v470 = vunpack.c.h.b16 %v465
  %v471 = vunpack.c.l.b16 %v466
  %v472 = vunpack.c.h.b16 %v466
  %v473 = vpack.c.b16 %v469, %v469
  %v474 = vpack.c.b16 %v470, %v470
  %v475 = vpack.c.b16 %v471, %v471
  %v476 = vpack.c.b16 %v472, %v472
  %481 = vst [vmem:[%s3] sm:$0xf] %v473
  %482 = vst [vmem:[%s3 + $0x4] sm:$0xf] %v474
  %483 = vst [vmem:[%s3 + $0x8] sm:$0xf] %v475
  %484 = vst [vmem:[%s3 + $0xc] sm:$0xf] %v476
  // Predicated region
  $region14: #{_forward.16} parent=0 // pred_check
    _
  $region15: #{_forward.16} parent=0 // pred_check_branch
    %486 = sbr.rel (0) target = $region17
  $region16: #{_forward.16} parent=0 // pred_region
    _
  $region17: #{_forward.16} parent=0 // pred_fallthru
    _
  // Predicated region
  $region18: #{_forward.16} parent=0 // pred_check
    _
  $region19: #{_forward.16} parent=0 // pred_check_branch
    %488 = sbr.rel (0) target = $region21
  $region20: #{_forward.16} parent=0 // pred_region
    _
  $region21: #{_forward.16} parent=0 // pred_fallthru
    _

// kernel: _forward.17
$region0: #{_forward.17}
  #allocation0 [shape = 'u32[]', space=smem, size = 0x4, offset = 0x4, fixed_abs, tag = 'smem constant byte address 0x4 - core index']
  #allocation1 [shape = 'u32[144,128]{1,0:T(1,128)}', space=vmem, size = 0x12000, scoped, tag = 'internal scratch']
  %s0 = inlined_call_operand.vmem [shape: bf16[8,384], index: 0, kind: input, shape index: {}]
  %s1 = inlined_call_operand.vmem [shape: bf16[384,128], index: 1, kind: input, shape index: {}]
  %s2 = inlined_call_operand.vmem [shape: f32[8,1], index: 2, kind: input, shape index: {}]
  %s3 = inlined_call_operand.vmem [shape: f32[8,128], index: 3, kind: output, shape index: {}]
  %s4 = sld [smem:[#allocation0]]
  $region22: #{_forward.17} parent=0
    _
  %s6 = ssub.s32 1, %s4
  %s7 = scalar_select 0, %s6, %s4
  // Predicated region
  $region2: #{_forward.17} parent=0 // pred_check
    _
  $region3: #{_forward.17} parent=0 // pred_check_branch
    %9 = sbr.rel (0) target = $region5
  $region4: #{_forward.17} parent=0 // pred_region
    _
  $region5: #{_forward.17} parent=0 // pred_fallthru
    _
  // Predicated region
  $region6: #{_forward.17} parent=0 // pred_check
    _
  $region7: #{_forward.17} parent=0 // pred_check_branch
    %11 = sbr.rel (0) target = $region9
  $region8: #{_forward.17} parent=0 // pred_region
    _
  $region9: #{_forward.17} parent=0 // pred_fallthru
    _
  // Predicated region
  $region10: #{_forward.17} parent=0 // pred_check
    _
  $region11: #{_forward.17} parent=0 // pred_check_branch
    %13 = sbr.rel (0) target = $region13
  $region12: #{_forward.17} parent=0 // pred_region
    _
  $region13: #{_forward.17} parent=0 // pred_fallthru
    _
  %v15 = vld [vmem:[%s0] sm:$0xff]
  %v16 = vld [vmem:[%s0 + $0x8] sm:$0xf]
  %v17 = vld [vmem:[%s1] sm:$0xf]
  %v18 = vld [vmem:[%s1 + $0x4] sm:$0xf]
  %v19 = vld [vmem:[%s1 + $0x8] sm:$0xf]
  %v20 = vld [vmem:[%s1 + $0xc] sm:$0xf]
  %v21 = vld [vmem:[%s1 + $0x10] sm:$0xf]
  %v22 = vld [vmem:[%s1 + $0x14] sm:$0xf]
  %v23 = vld [vmem:[%s1 + $0x18] sm:$0xf]
  %v24 = vld [vmem:[%s1 + $0x1c] sm:$0xf]
  %v25 = vld [vmem:[%s1 + $0x20] sm:$0xf]
  %v26 = vld [vmem:[%s1 + $0x24] sm:$0xf]
  %v27 = vld [vmem:[%s1 + $0x28] sm:$0xf]
  %v28 = vld [vmem:[%s1 + $0x2c] sm:$0xf]
  %v29 = vld [vmem:[%s1 + $0x30] sm:$0xf]
  %v30 = vld [vmem:[%s1 + $0x34] sm:$0xf]
  %v31 = vld [vmem:[%s1 + $0x38] sm:$0xf]
  %v32 = vld [vmem:[%s1 + $0x3c] sm:$0xf]
  %v33 = vld [vmem:[%s1 + $0x40] sm:$0xf]
  %v34 = vld [vmem:[%s1 + $0x44] sm:$0xf]
  %v35 = vld [vmem:[%s1 + $0x48] sm:$0xf]
  %v36 = vld [vmem:[%s1 + $0x4c] sm:$0xf]
  %v37 = vld [vmem:[%s1 + $0x50] sm:$0xf]
  %v38 = vld [vmem:[%s1 + $0x54] sm:$0xf]
  %v39 = vld [vmem:[%s1 + $0x58] sm:$0xf]
  %v40 = vld [vmem:[%s1 + $0x5c] sm:$0xf]
  %v41 = vld [vmem:[%s1 + $0x60] sm:$0xf]
  %v42 = vld [vmem:[%s1 + $0x64] sm:$0xf]
  %v43 = vld [vmem:[%s1 + $0x68] sm:$0xf]
  %v44 = vld [vmem:[%s1 + $0x6c] sm:$0xf]
  %v45 = vld [vmem:[%s1 + $0x70] sm:$0xf]
  %v46 = vld [vmem:[%s1 + $0x74] sm:$0xf]
  %v47 = vld [vmem:[%s1 + $0x78] sm:$0xf]
  %v48 = vld [vmem:[%s1 + $0x7c] sm:$0xf]
  %v49 = vld [vmem:[%s1 + $0x80] sm:$0xf]
  %v50 = vld [vmem:[%s1 + $0x84] sm:$0xf]
  %v51 = vld [vmem:[%s1 + $0x88] sm:$0xf]
  %v52 = vld [vmem:[%s1 + $0x8c] sm:$0xf]
  %v53 = vld [vmem:[%s1 + $0x90] sm:$0xf]
  %v54 = vld [vmem:[%s1 + $0x94] sm:$0xf]
  %v55 = vld [vmem:[%s1 + $0x98] sm:$0xf]
  %v56 = vld [vmem:[%s1 + $0x9c] sm:$0xf]
  %v57 = vld [vmem:[%s1 + $0xa0] sm:$0xf]
  %v58 = vld [vmem:[%s1 + $0xa4] sm:$0xf]
  %v59 = vld [vmem:[%s1 + $0xa8] sm:$0xf]
  %v60 = vld [vmem:[%s1 + $0xac] sm:$0xf]
  %v61 = vld [vmem:[%s1 + $0xb0] sm:$0xf]
  %v62 = vld [vmem:[%s1 + $0xb4] sm:$0xf]
  %v63 = vld [vmem:[%s1 + $0xb8] sm:$0xf]
  %v64 = vld [vmem:[%s1 + $0xbc] sm:$0xf]
  %v65 = vld [vmem:[%s2] sm:$0xff]
  %67 = vset.pattern.permute.xlu0 0
  %68 = vperm.xlu0 %67, %v65
  %v69 = vpop.permute.xlu0 %68
  %v73 = vunpack.c.l.b16 %v15
  %v74 = vunpack.c.h.b16 %v15
  %v75 = vunpack.c.l.b16 %v16
  %v76 = vpack.c.b16 %v73, %v73
  %v77 = vpack.c.b16 %v74, %v74
  %v78 = vpack.c.b16 %v75, %v75
  %v130 = vunpack.c.l.b16 %v17
  %v131 = vunpack.c.l.b16 %v18
  %v132 = vunpack.c.l.b16 %v19
  %v133 = vunpack.c.l.b16 %v20
  %v134 = vunpack.c.l.b16 %v21
  %v135 = vunpack.c.l.b16 %v22
  %v136 = vunpack.c.l.b16 %v23
  %v137 = vunpack.c.l.b16 %v24
  %v138 = vunpack.c.l.b16 %v25
  %v139 = vunpack.c.l.b16 %v26
  %v140 = vunpack.c.l.b16 %v27
  %v141 = vunpack.c.l.b16 %v28
  %v142 = vunpack.c.l.b16 %v29
  %v143 = vunpack.c.l.b16 %v30
  %v144 = vunpack.c.l.b16 %v31
  %v145 = vunpack.c.l.b16 %v32
  %v146 = vunpack.c.l.b16 %v33
  %v147 = vunpack.c.l.b16 %v34
  %v148 = vunpack.c.l.b16 %v35
  %v149 = vunpack.c.l.b16 %v36
  %v150 = vunpack.c.l.b16 %v37
  %v151 = vunpack.c.l.b16 %v38
  %v152 = vunpack.c.l.b16 %v39
  %v153 = vunpack.c.l.b16 %v40
  %v154 = vunpack.c.l.b16 %v41
  %v155 = vunpack.c.l.b16 %v42
  %v156 = vunpack.c.l.b16 %v43
  %v157 = vunpack.c.l.b16 %v44
  %v158 = vunpack.c.l.b16 %v45
  %v159 = vunpack.c.l.b16 %v46
  %v160 = vunpack.c.l.b16 %v47
  %v161 = vunpack.c.l.b16 %v48
  %v162 = vunpack.c.l.b16 %v49
  %v163 = vunpack.c.l.b16 %v50
  %v164 = vunpack.c.l.b16 %v51
  %v165 = vunpack.c.l.b16 %v52
  %v166 = vunpack.c.l.b16 %v53
  %v167 = vunpack.c.l.b16 %v54
  %v168 = vunpack.c.l.b16 %v55
  %v169 = vunpack.c.l.b16 %v56
  %v170 = vunpack.c.l.b16 %v57
  %v171 = vunpack.c.l.b16 %v58
  %v172 = vunpack.c.l.b16 %v59
  %v173 = vunpack.c.l.b16 %v60
  %v174 = vunpack.c.l.b16 %v61
  %v175 = vunpack.c.l.b16 %v62
  %v176 = vunpack.c.l.b16 %v63
  %v177 = vunpack.c.l.b16 %v64
  %v178 = vpack.c.b16 %v131, %v130
  %v179 = vpack.c.b16 %v133, %v132
  %v180 = vpack.c.b16 %v135, %v134
  %v181 = vpack.c.b16 %v137, %v136
  %v182 = vpack.c.b16 %v139, %v138
  %v183 = vpack.c.b16 %v141, %v140
  %v184 = vpack.c.b16 %v143, %v142
  %v185 = vpack.c.b16 %v145, %v144
  %v186 = vpack.c.b16 %v147, %v146
  %v187 = vpack.c.b16 %v149, %v148
  %v188 = vpack.c.b16 %v151, %v150
  %v189 = vpack.c.b16 %v153, %v152
  %v190 = vpack.c.b16 %v155, %v154
  %v191 = vpack.c.b16 %v157, %v156
  %v192 = vpack.c.b16 %v159, %v158
  %v193 = vpack.c.b16 %v161, %v160
  %v194 = vpack.c.b16 %v163, %v162
  %v195 = vpack.c.b16 %v165, %v164
  %v196 = vpack.c.b16 %v167, %v166
  %v197 = vpack.c.b16 %v169, %v168
  %v198 = vpack.c.b16 %v171, %v170
  %v199 = vpack.c.b16 %v173, %v172
  %v200 = vpack.c.b16 %v175, %v174
  %v201 = vpack.c.b16 %v177, %v176
  %226 = vmatprep.subr.bf16.mxu0 0
  %227 = vmatpush1.bf16.msra.mxu0 %v185
  %228 = vmatprep.subr.bf16.mxu0 0
  %229 = vmatpush1.bf16.msra.mxu0 %v184
  %230 = vmatprep.subr.bf16.mxu0 0
  %231 = vmatpush1.bf16.msra.mxu0 %v183
  %232 = vmatprep.subr.bf16.mxu0 0
  %233 = vmatpush1.bf16.msra.mxu0 %v182
  %234 = vmatprep.subr.bf16.mxu0 0
  %235 = vmatpush1.bf16.msra.mxu0 %v181
  %236 = vmatprep.subr.bf16.mxu0 0
  %237 = vmatpush1.bf16.msra.mxu0 %v180
  %238 = vmatprep.subr.bf16.mxu0 0
  %239 = vmatpush1.bf16.msra.mxu0 %v179
  %240 = vmatprep.subr.bf16.mxu0 0
  %241 = vmatpush1.bf16.msra.mxu0 %v178
  %242 = vmatprep.subr.bf16.mxu0 0
  %243 = vmatpush2.bf16.msra.mxu0 %v193
  %244 = vmatprep.subr.bf16.mxu0 0
  %245 = vmatpush2.bf16.msra.mxu0 %v192
  %246 = vmatprep.subr.bf16.mxu0 0
  %247 = vmatpush2.bf16.msra.mxu0 %v191
  %248 = vmatprep.subr.bf16.mxu0 0
  %249 = vmatpush2.bf16.msra.mxu0 %v190
  %250 = vmatprep.subr.bf16.mxu0 0
  %251 = vmatpush2.bf16.msra.mxu0 %v189
  %252 = vmatprep.subr.bf16.mxu0 0
  %253 = vmatpush2.bf16.msra.mxu0 %v188
  %254 = vmatprep.subr.bf16.mxu0 0
  %255 = vmatpush2.bf16.msra.mxu0 %v187
  %256 = vmatprep.subr.bf16.mxu0 0
  %257 = vmatpush2.bf16.msra.mxu0 %v186
  %258 = vmatprep.mubr.bf16.mxu0 %v77
  %259 = vmatmul.mubr.bf16.gmra.mxu0 %v76
  %v260 = vpop.f32.mrf.mxu0
  %v261 = vadd.f32 %v69, %v260
  %v262 = vpop.f32.mrf.mxu0
  %v263 = vpop.f32.mrf.mxu0
  %v264 = vpop.f32.mrf.mxu0
  %265 = vdwg.mxu0
  %266 = vmatprep.subr.bf16.mxu0 0
  %267 = vmatpush1.bf16.msra.mxu0 %v201
  %268 = vmatprep.subr.bf16.mxu0 0
  %269 = vmatpush1.bf16.msra.mxu0 %v200
  %270 = vmatprep.subr.bf16.mxu0 0
  %271 = vmatpush1.bf16.msra.mxu0 %v199
  %272 = vmatprep.subr.bf16.mxu0 0
  %273 = vmatpush1.bf16.msra.mxu0 %v198
  %274 = vmatprep.subr.bf16.mxu0 0
  %275 = vmatpush1.bf16.msra.mxu0 %v197
  %276 = vmatprep.subr.bf16.mxu0 0
  %277 = vmatpush1.bf16.msra.mxu0 %v196
  %278 = vmatprep.subr.bf16.mxu0 0
  %279 = vmatpush1.bf16.msra.mxu0 %v195
  %280 = vmatprep.subr.bf16.mxu0 0
  %281 = vmatpush1.bf16.msra.mxu0 %v194
  %282 = vmatprep.subr.bf16.mxu0 0
  %283 = vmatpush2.bf16.msra.mxu0 0
  %284 = vmatprep.subr.bf16.mxu0 0
  %285 = vmatpush2.bf16.msra.mxu0 0
  %286 = vmatprep.subr.bf16.mxu0 0
  %287 = vmatpush2.bf16.msra.mxu0 0
  %288 = vmatprep.subr.bf16.mxu0 0
  %289 = vmatpush2.bf16.msra.mxu0 0
  %290 = vmatprep.subr.bf16.mxu0 0
  %291 = vmatpush2.bf16.msra.mxu0 0
  %292 = vmatprep.subr.bf16.mxu0 0
  %293 = vmatpush2.bf16.msra.mxu0 0
  %294 = vmatprep.subr.bf16.mxu0 0
  %295 = vmatpush2.bf16.msra.mxu0 0
  %296 = vmatprep.subr.bf16.mxu0 0
  %297 = vmatpush2.bf16.msra.mxu0 0
  %298 = vmatprep.mubr.bf16.mxu0 0
  %299 = vmatmul.mubr.bf16.gmra.mxu0 %v78
  %v300 = vpop.f32.mrf.mxu0
  %v301 = vadd.f32 %v261, %v300
  %v302 = vpop.f32.mrf.mxu0
  %v303 = vpop.f32.mrf.mxu0
  %v304 = vpop.f32.mrf.mxu0
  %305 = vdwg.mxu0
  %v306 = vsub.f32 0.0, %v301
  %v307 = vmul.f32 %v306, 1.442695
  %v308 = vpow.pop %v307
  %v309 = vadd.f32 %v308, 1.0
  %v310 = vrcp.pop %v309
  %v311 = vmul.f32 1.0, %v310
  %312 = vst [vmem:[%s3] sm:$0xff] %v311
  // Predicated region
  $region14: #{_forward.17} parent=0 // pred_check
    _
  $region15: #{_forward.17} parent=0 // pred_check_branch
    %314 = sbr.rel (0) target = $region17
  $region16: #{_forward.17} parent=0 // pred_region
    _
  $region17: #{_forward.17} parent=0 // pred_fallthru
    _
  // Predicated region
  $region18: #{_forward.17} parent=0 // pred_check
    _
  $region19: #{_forward.17} parent=0 // pred_check_branch
    %316 = sbr.rel (0) target = $region21
  $region20: #{_forward.17} parent=0 // pred_region
    _
  $region21: #{_forward.17} parent=0 // pred_fallthru
    _

// kernel: _forward.18
$region0: #{_forward.18}
  #allocation0 [shape = 'u32[]', space=smem, size = 0x4, offset = 0x4, fixed_abs, tag = 'smem constant byte address 0x4 - core index']
  #allocation1 [shape = 'u32[144,128]{1,0:T(1,128)}', space=vmem, size = 0x12000, scoped, tag = 'internal scratch']
  %s0 = inlined_call_operand.vmem [shape: bf16[16,384], index: 0, kind: input, shape index: {}]
  %s1 = inlined_call_operand.vmem [shape: bf16[384,128], index: 1, kind: input, shape index: {}]
  %s2 = inlined_call_operand.vmem [shape: f32[16,1], index: 2, kind: input, shape index: {}]
  %s3 = inlined_call_operand.vmem [shape: bf16[16,128], index: 3, kind: output, shape index: {}]
  %s4 = sld [smem:[#allocation0]]
  $region22: #{_forward.18} parent=0
    _
  %s6 = ssub.s32 1, %s4
  %s7 = scalar_select 0, %s6, %s4
  // Predicated region
  $region2: #{_forward.18} parent=0 // pred_check
    _
  $region3: #{_forward.18} parent=0 // pred_check_branch
    %9 = sbr.rel (0) target = $region5
  $region4: #{_forward.18} parent=0 // pred_region
    _
  $region5: #{_forward.18} parent=0 // pred_fallthru
    _
  // Predicated region
  $region6: #{_forward.18} parent=0 // pred_check
    _
  $region7: #{_forward.18} parent=0 // pred_check_branch
    %11 = sbr.rel (0) target = $region9
  $region8: #{_forward.18} parent=0 // pred_region
    _
  $region9: #{_forward.18} parent=0 // pred_fallthru
    _
  // Predicated region
  $region10: #{_forward.18} parent=0 // pred_check
    _
  $region11: #{_forward.18} parent=0 // pred_check_branch
    %13 = sbr.rel (0) target = $region13
  $region12: #{_forward.18} parent=0 // pred_region
    _
  $region13: #{_forward.18} parent=0 // pred_fallthru
    _
  %v15 = vld [vmem:[%s0] sm:$0xff]
  %v16 = vld [vmem:[%s0 + $0x8] sm:$0xf]
  %v17 = vld [vmem:[%s0 + $0xc] sm:$0xff]
  %v18 = vld [vmem:[%s0 + $0x14] sm:$0xf]
  %v19 = vld [vmem:[%s1] sm:$0xf]
  %v20 = vld [vmem:[%s1 + $0x4] sm:$0xf]
  %v21 = vld [vmem:[%s1 + $0x8] sm:$0xf]
  %v22 = vld [vmem:[%s1 + $0xc] sm:$0xf]
  %v23 = vld [vmem:[%s1 + $0x10] sm:$0xf]
  %v24 = vld [vmem:[%s1 + $0x14] sm:$0xf]
  %v25 = vld [vmem:[%s1 + $0x18] sm:$0xf]
  %v26 = vld [vmem:[%s1 + $0x1c] sm:$0xf]
  %v27 = vld [vmem:[%s1 + $0x20] sm:$0xf]
  %v28 = vld [vmem:[%s1 + $0x24] sm:$0xf]
  %v29 = vld [vmem:[%s1 + $0x28] sm:$0xf]
  %v30 = vld [vmem:[%s1 + $0x2c] sm:$0xf]
  %v31 = vld [vmem:[%s1 + $0x30] sm:$0xf]
  %v32 = vld [vmem:[%s1 + $0x34] sm:$0xf]
  %v33 = vld [vmem:[%s1 + $0x38] sm:$0xf]
  %v34 = vld [vmem:[%s1 + $0x3c] sm:$0xf]
  %v35 = vld [vmem:[%s1 + $0x40] sm:$0xf]
  %v36 = vld [vmem:[%s1 + $0x44] sm:$0xf]
  %v37 = vld [vmem:[%s1 + $0x48] sm:$0xf]
  %v38 = vld [vmem:[%s1 + $0x4c] sm:$0xf]
  %v39 = vld [vmem:[%s1 + $0x50] sm:$0xf]
  %v40 = vld [vmem:[%s1 + $0x54] sm:$0xf]
  %v41 = vld [vmem:[%s1 + $0x58] sm:$0xf]
  %v42 = vld [vmem:[%s1 + $0x5c] sm:$0xf]
  %v43 = vld [vmem:[%s1 + $0x60] sm:$0xf]
  %v44 = vld [vmem:[%s1 + $0x64] sm:$0xf]
  %v45 = vld [vmem:[%s1 + $0x68] sm:$0xf]
  %v46 = vld [vmem:[%s1 + $0x6c] sm:$0xf]
  %v47 = vld [vmem:[%s1 + $0x70] sm:$0xf]
  %v48 = vld [vmem:[%s1 + $0x74] sm:$0xf]
  %v49 = vld [vmem:[%s1 + $0x78] sm:$0xf]
  %v50 = vld [vmem:[%s1 + $0x7c] sm:$0xf]
  %v51 = vld [vmem:[%s1 + $0x80] sm:$0xf]
  %v52 = vld [vmem:[%s1 + $0x84] sm:$0xf]
  %v53 = vld [vmem:[%s1 + $0x88] sm:$0xf]
  %v54 = vld [vmem:[%s1 + $0x8c] sm:$0xf]
  %v55 = vld [vmem:[%s1 + $0x90] sm:$0xf]
  %v56 = vld [vmem:[%s1 + $0x94] sm:$0xf]
  %v57 = vld [vmem:[%s1 + $0x98] sm:$0xf]
  %v58 = vld [vmem:[%s1 + $0x9c] sm:$0xf]
  %v59 = vld [vmem:[%s1 + $0xa0] sm:$0xf]
  %v60 = vld [vmem:[%s1 + $0xa4] sm:$0xf]
  %v61 = vld [vmem:[%s1 + $0xa8] sm:$0xf]
  %v62 = vld [vmem:[%s1 + $0xac] sm:$0xf]
  %v63 = vld [vmem:[%s1 + $0xb0] sm:$0xf]
  %v64 = vld [vmem:[%s1 + $0xb4] sm:$0xf]
  %v65 = vld [vmem:[%s1 + $0xb8] sm:$0xf]
  %v66 = vld [vmem:[%s1 + $0xbc] sm:$0xf]
  %v67 = vld [vmem:[%s2] sm:$0xff]
  %v68 = vld [vmem:[%s2 + $0x8] sm:$0xff]
  %70 = vset.pattern.permute.xlu0 0
  %71 = vperm.xlu0 %70, %v67
  %v72 = vpop.permute.xlu0 %71
  %75 = vset.pattern.permute.xlu0 0
  %76 = vperm.xlu0 %75, %v68
  %v77 = vpop.permute.xlu0 %76
  %v83 = vunpack.c.l.b16 %v15
  %v84 = vunpack.c.h.b16 %v15
  %v85 = vunpack.c.l.b16 %v16
  %v86 = vunpack.c.l.b16 %v17
  %v87 = vunpack.c.h.b16 %v17
  %v88 = vunpack.c.l.b16 %v18
  %v89 = vpack.c.b16 %v86, %v83
  %v90 = vpack.c.b16 %v87, %v84
  %v91 = vpack.c.b16 %v88, %v85
  %v143 = vunpack.c.l.b16 %v19
  %v144 = vunpack.c.l.b16 %v20
  %v145 = vunpack.c.l.b16 %v21
  %v146 = vunpack.c.l.b16 %v22
  %v147 = vunpack.c.l.b16 %v23
  %v148 = vunpack.c.l.b16 %v24
  %v149 = vunpack.c.l.b16 %v25
  %v150 = vunpack.c.l.b16 %v26
  %v151 = vunpack.c.l.b16 %v27
  %v152 = vunpack.c.l.b16 %v28
  %v153 = vunpack.c.l.b16 %v29
  %v154 = vunpack.c.l.b16 %v30
  %v155 = vunpack.c.l.b16 %v31
  %v156 = vunpack.c.l.b16 %v32
  %v157 = vunpack.c.l.b16 %v33
  %v158 = vunpack.c.l.b16 %v34
  %v159 = vunpack.c.l.b16 %v35
  %v160 = vunpack.c.l.b16 %v36
  %v161 = vunpack.c.l.b16 %v37
  %v162 = vunpack.c.l.b16 %v38
  %v163 = vunpack.c.l.b16 %v39
  %v164 = vunpack.c.l.b16 %v40
  %v165 = vunpack.c.l.b16 %v41
  %v166 = vunpack.c.l.b16 %v42
  %v167 = vunpack.c.l.b16 %v43
  %v168 = vunpack.c.l.b16 %v44
  %v169 = vunpack.c.l.b16 %v45
  %v170 = vunpack.c.l.b16 %v46
  %v171 = vunpack.c.l.b16 %v47
  %v172 = vunpack.c.l.b16 %v48
  %v173 = vunpack.c.l.b16 %v49
  %v174 = vunpack.c.l.b16 %v50
  %v175 = vunpack.c.l.b16 %v51
  %v176 = vunpack.c.l.b16 %v52
  %v177 = vunpack.c.l.b16 %v53
  %v178 = vunpack.c.l.b16 %v54
  %v179 = vunpack.c.l.b16 %v55
  %v180 = vunpack.c.l.b16 %v56
  %v181 = vunpack.c.l.b16 %v57
  %v182 = vunpack.c.l.b16 %v58
  %v183 = vunpack.c.l.b16 %v59
  %v184 = vunpack.c.l.b16 %v60
  %v185 = vunpack.c.l.b16 %v61
  %v186 = vunpack.c.l.b16 %v62
  %v187 = vunpack.c.l.b16 %v63
  %v188 = vunpack.c.l.b16 %v64
  %v189 = vunpack.c.l.b16 %v65
  %v190 = vunpack.c.l.b16 %v66
  %v191 = vpack.c.b16 %v144, %v143
  %v192 = vpack.c.b16 %v146, %v145
  %v193 = vpack.c.b16 %v148, %v147
  %v194 = vpack.c.b16 %v150, %v149
  %v195 = vpack.c.b16 %v152, %v151
  %v196 = vpack.c.b16 %v154, %v153
  %v197 = vpack.c.b16 %v156, %v155
  %v198 = vpack.c.b16 %v158, %v157
  %v199 = vpack.c.b16 %v160, %v159
  %v200 = vpack.c.b16 %v162, %v161
  %v201 = vpack.c.b16 %v164, %v163
  %v202 = vpack.c.b16 %v166, %v165
  %v203 = vpack.c.b16 %v168, %v167
  %v204 = vpack.c.b16 %v170, %v169
  %v205 = vpack.c.b16 %v172, %v171
  %v206 = vpack.c.b16 %v174, %v173
  %v207 = vpack.c.b16 %v176, %v175
  %v208 = vpack.c.b16 %v178, %v177
  %v209 = vpack.c.b16 %v180, %v179
  %v210 = vpack.c.b16 %v182, %v181
  %v211 = vpack.c.b16 %v184, %v183
  %v212 = vpack.c.b16 %v186, %v185
  %v213 = vpack.c.b16 %v188, %v187
  %v214 = vpack.c.b16 %v190, %v189
  %239 = vmatprep.subr.bf16.mxu0 0
  %240 = vmatpush1.bf16.msra.mxu0 %v198
  %241 = vmatprep.subr.bf16.mxu0 0
  %242 = vmatpush1.bf16.msra.mxu0 %v197
  %243 = vmatprep.subr.bf16.mxu0 0
  %244 = vmatpush1.bf16.msra.mxu0 %v196
  %245 = vmatprep.subr.bf16.mxu0 0
  %246 = vmatpush1.bf16.msra.mxu0 %v195
  %247 = vmatprep.subr.bf16.mxu0 0
  %248 = vmatpush1.bf16.msra.mxu0 %v194
  %249 = vmatprep.subr.bf16.mxu0 0
  %250 = vmatpush1.bf16.msra.mxu0 %v193
  %251 = vmatprep.subr.bf16.mxu0 0
  %252 = vmatpush1.bf16.msra.mxu0 %v192
  %253 = vmatprep.subr.bf16.mxu0 0
  %254 = vmatpush1.bf16.msra.mxu0 %v191
  %255 = vmatprep.subr.bf16.mxu0 0
  %256 = vmatpush2.bf16.msra.mxu0 %v206
  %257 = vmatprep.subr.bf16.mxu0 0
  %258 = vmatpush2.bf16.msra.mxu0 %v205
  %259 = vmatprep.subr.bf16.mxu0 0
  %260 = vmatpush2.bf16.msra.mxu0 %v204
  %261 = vmatprep.subr.bf16.mxu0 0
  %262 = vmatpush2.bf16.msra.mxu0 %v203
  %263 = vmatprep.subr.bf16.mxu0 0
  %264 = vmatpush2.bf16.msra.mxu0 %v202
  %265 = vmatprep.subr.bf16.mxu0 0
  %266 = vmatpush2.bf16.msra.mxu0 %v201
  %267 = vmatprep.subr.bf16.mxu0 0
  %268 = vmatpush2.bf16.msra.mxu0 %v200
  %269 = vmatprep.subr.bf16.mxu0 0
  %270 = vmatpush2.bf16.msra.mxu0 %v199
  %271 = vmatprep.mubr.bf16.mxu0 %v90
  %272 = vmatmul.mubr.bf16.gmra.mxu0 %v89
  %v273 = vpop.f32.mrf.mxu0
  %v274 = vadd.f32 %v72, %v273
  %v275 = vpop.f32.mrf.mxu0
  %v276 = vpop.f32.mrf.mxu0
  %v277 = vadd.f32 %v77, %v276
  %v278 = vpop.f32.mrf.mxu0
  %279 = vdwg.mxu0
  %280 = vmatprep.subr.bf16.mxu0 0
  %281 = vmatpush1.bf16.msra.mxu0 %v214
  %282 = vmatprep.subr.bf16.mxu0 0
  %283 = vmatpush1.bf16.msra.mxu0 %v213
  %284 = vmatprep.subr.bf16.mxu0 0
  %285 = vmatpush1.bf16.msra.mxu0 %v212
  %286 = vmatprep.subr.bf16.mxu0 0
  %287 = vmatpush1.bf16.msra.mxu0 %v211
  %288 = vmatprep.subr.bf16.mxu0 0
  %289 = vmatpush1.bf16.msra.mxu0 %v210
  %290 = vmatprep.subr.bf16.mxu0 0
  %291 = vmatpush1.bf16.msra.mxu0 %v209
  %292 = vmatprep.subr.bf16.mxu0 0
  %293 = vmatpush1.bf16.msra.mxu0 %v208
  %294 = vmatprep.subr.bf16.mxu0 0
  %295 = vmatpush1.bf16.msra.mxu0 %v207
  %296 = vmatprep.subr.bf16.mxu0 0
  %297 = vmatpush2.bf16.msra.mxu0 0
  %298 = vmatprep.subr.bf16.mxu0 0
  %299 = vmatpush2.bf16.msra.mxu0 0
  %300 = vmatprep.subr.bf16.mxu0 0
  %301 = vmatpush2.bf16.msra.mxu0 0
  %302 = vmatprep.subr.bf16.mxu0 0
  %303 = vmatpush2.bf16.msra.mxu0 0
  %304 = vmatprep.subr.bf16.mxu0 0
  %305 = vmatpush2.bf16.msra.mxu0 0
  %306 = vmatprep.subr.bf16.mxu0 0
  %307 = vmatpush2.bf16.msra.mxu0 0
  %308 = vmatprep.subr.bf16.mxu0 0
  %309 = vmatpush2.bf16.msra.mxu0 0
  %310 = vmatprep.subr.bf16.mxu0 0
  %311 = vmatpush2.bf16.msra.mxu0 0
  %312 = vmatprep.mubr.bf16.mxu0 0
  %313 = vmatmul.mubr.bf16.gmra.mxu0 %v91
  %v314 = vpop.f32.mrf.mxu0
  %v315 = vadd.f32 %v274, %v314
  %v316 = vpop.f32.mrf.mxu0
  %v317 = vpop.f32.mrf.mxu0
  %v318 = vadd.f32 %v277, %v317
  %v319 = vpop.f32.mrf.mxu0
  %320 = vdwg.mxu0
  %vm321 = vcmp.gt.f32.partialorder %v315, 0.0
  %vm322 = vcmp.gt.f32.partialorder %v318, 0.0
  %v323 = vmin.f32 %v315, 0.0
  %v324 = vmin.f32 %v318, 0.0
  %v325 = vmul.f32 %v323, 1.442695
  %v326 = vpow.pop %v325
  %v327 = vmul.f32 %v324, 1.442695
  %v328 = vpow.pop %v327
  %v329 = vsub.f32 %v326, 1.0
  %v330 = vsub.f32 %v328, 1.0
  %v331 = vsel %vm321, %v315, %v329
  %v332 = vsel %vm322, %v318, %v330
  %v333 = vpack.c.bf16 %v332, %v331
  %v335 = vunpack.c.l.b16 %v333
  %v336 = vunpack.c.h.b16 %v333
  %v337 = vpack.c.b16 %v335, %v335
  %v338 = vpack.c.b16 %v336, %v336
  %341 = vst [vmem:[%s3] sm:$0xf] %v337
  %342 = vst [vmem:[%s3 + $0x4] sm:$0xf] %v338
  // Predicated region
  $region14: #{_forward.18} parent=0 // pred_check
    _
  $region15: #{_forward.18} parent=0 // pred_check_branch
    %344 = sbr.rel (0) target = $region17
  $region16: #{_forward.18} parent=0 // pred_region
    _
  $region17: #{_forward.18} parent=0 // pred_fallthru
    _
  // Predicated region
  $region18: #{_forward.18} parent=0 // pred_check
    _
  $region19: #{_forward.18} parent=0 // pred_check_branch
    %346 = sbr.rel (0) target = $region21
  $region20: #{_forward.18} parent=0 // pred_region
    _
  $region21: #{_forward.18} parent=0 // pred_fallthru
    _

// kernel: _forward.19
$region0: #{_forward.19}
  #allocation0 [shape = 'u32[]', space=smem, size = 0x4, offset = 0x4, fixed_abs, tag = 'smem constant byte address 0x4 - core index']
  #allocation1 [shape = 'u32[144,128]{1,0:T(1,128)}', space=vmem, size = 0x12000, scoped, tag = 'internal scratch']
  %s0 = inlined_call_operand.vmem [shape: bf16[16,256], index: 0, kind: input, shape index: {}]
  %s1 = inlined_call_operand.vmem [shape: bf16[256,128], index: 1, kind: input, shape index: {}]
  %s2 = inlined_call_operand.vmem [shape: f32[16,1], index: 2, kind: input, shape index: {}]
  %s3 = inlined_call_operand.vmem [shape: bf16[16,128], index: 3, kind: output, shape index: {}]
  %s4 = sld [smem:[#allocation0]]
  $region22: #{_forward.19} parent=0
    _
  %s6 = ssub.s32 1, %s4
  %s7 = scalar_select 0, %s6, %s4
  // Predicated region
  $region2: #{_forward.19} parent=0 // pred_check
    _
  $region3: #{_forward.19} parent=0 // pred_check_branch
    %9 = sbr.rel (0) target = $region5
  $region4: #{_forward.19} parent=0 // pred_region
    _
  $region5: #{_forward.19} parent=0 // pred_fallthru
    _
  // Predicated region
  $region6: #{_forward.19} parent=0 // pred_check
    _
  $region7: #{_forward.19} parent=0 // pred_check_branch
    %11 = sbr.rel (0) target = $region9
  $region8: #{_forward.19} parent=0 // pred_region
    _
  $region9: #{_forward.19} parent=0 // pred_fallthru
    _
  // Predicated region
  $region10: #{_forward.19} parent=0 // pred_check
    _
  $region11: #{_forward.19} parent=0 // pred_check_branch
    %13 = sbr.rel (0) target = $region13
  $region12: #{_forward.19} parent=0 // pred_region
    _
  $region13: #{_forward.19} parent=0 // pred_fallthru
    _
  %v15 = vld [vmem:[%s0] sm:$0xff]
  %v16 = vld [vmem:[%s0 + $0x8] sm:$0xff]
  %v17 = vld [vmem:[%s1] sm:$0xf]
  %v18 = vld [vmem:[%s1 + $0x4] sm:$0xf]
  %v19 = vld [vmem:[%s1 + $0x8] sm:$0xf]
  %v20 = vld [vmem:[%s1 + $0xc] sm:$0xf]
  %v21 = vld [vmem:[%s1 + $0x10] sm:$0xf]
  %v22 = vld [vmem:[%s1 + $0x14] sm:$0xf]
  %v23 = vld [vmem:[%s1 + $0x18] sm:$0xf]
  %v24 = vld [vmem:[%s1 + $0x1c] sm:$0xf]
  %v25 = vld [vmem:[%s1 + $0x20] sm:$0xf]
  %v26 = vld [vmem:[%s1 + $0x24] sm:$0xf]
  %v27 = vld [vmem:[%s1 + $0x28] sm:$0xf]
  %v28 = vld [vmem:[%s1 + $0x2c] sm:$0xf]
  %v29 = vld [vmem:[%s1 + $0x30] sm:$0xf]
  %v30 = vld [vmem:[%s1 + $0x34] sm:$0xf]
  %v31 = vld [vmem:[%s1 + $0x38] sm:$0xf]
  %v32 = vld [vmem:[%s1 + $0x3c] sm:$0xf]
  %v33 = vld [vmem:[%s1 + $0x40] sm:$0xf]
  %v34 = vld [vmem:[%s1 + $0x44] sm:$0xf]
  %v35 = vld [vmem:[%s1 + $0x48] sm:$0xf]
  %v36 = vld [vmem:[%s1 + $0x4c] sm:$0xf]
  %v37 = vld [vmem:[%s1 + $0x50] sm:$0xf]
  %v38 = vld [vmem:[%s1 + $0x54] sm:$0xf]
  %v39 = vld [vmem:[%s1 + $0x58] sm:$0xf]
  %v40 = vld [vmem:[%s1 + $0x5c] sm:$0xf]
  %v41 = vld [vmem:[%s1 + $0x60] sm:$0xf]
  %v42 = vld [vmem:[%s1 + $0x64] sm:$0xf]
  %v43 = vld [vmem:[%s1 + $0x68] sm:$0xf]
  %v44 = vld [vmem:[%s1 + $0x6c] sm:$0xf]
  %v45 = vld [vmem:[%s1 + $0x70] sm:$0xf]
  %v46 = vld [vmem:[%s1 + $0x74] sm:$0xf]
  %v47 = vld [vmem:[%s1 + $0x78] sm:$0xf]
  %v48 = vld [vmem:[%s1 + $0x7c] sm:$0xf]
  %v49 = vld [vmem:[%s2] sm:$0xff]
  %v50 = vld [vmem:[%s2 + $0x8] sm:$0xff]
  %52 = vset.pattern.permute.xlu0 0
  %53 = vperm.xlu0 %52, %v49
  %v54 = vpop.permute.xlu0 %53
  %57 = vset.pattern.permute.xlu0 0
  %58 = vperm.xlu0 %57, %v50
  %v59 = vpop.permute.xlu0 %58
  %v63 = vunpack.c.l.b16 %v15
  %v64 = vunpack.c.h.b16 %v15
  %v65 = vunpack.c.l.b16 %v16
  %v66 = vunpack.c.h.b16 %v16
  %v67 = vpack.c.b16 %v65, %v63
  %v68 = vpack.c.b16 %v66, %v64
  %v103 = vunpack.c.l.b16 %v17
  %v104 = vunpack.c.l.b16 %v18
  %v105 = vunpack.c.l.b16 %v19
  %v106 = vunpack.c.l.b16 %v20
  %v107 = vunpack.c.l.b16 %v21
  %v108 = vunpack.c.l.b16 %v22
  %v109 = vunpack.c.l.b16 %v23
  %v110 = vunpack.c.l.b16 %v24
  %v111 = vunpack.c.l.b16 %v25
  %v112 = vunpack.c.l.b16 %v26
  %v113 = vunpack.c.l.b16 %v27
  %v114 = vunpack.c.l.b16 %v28
  %v115 = vunpack.c.l.b16 %v29
  %v116 = vunpack.c.l.b16 %v30
  %v117 = vunpack.c.l.b16 %v31
  %v118 = vunpack.c.l.b16 %v32
  %v119 = vunpack.c.l.b16 %v33
  %v120 = vunpack.c.l.b16 %v34
  %v121 = vunpack.c.l.b16 %v35
  %v122 = vunpack.c.l.b16 %v36
  %v123 = vunpack.c.l.b16 %v37
  %v124 = vunpack.c.l.b16 %v38
  %v125 = vunpack.c.l.b16 %v39
  %v126 = vunpack.c.l.b16 %v40
  %v127 = vunpack.c.l.b16 %v41
  %v128 = vunpack.c.l.b16 %v42
  %v129 = vunpack.c.l.b16 %v43
  %v130 = vunpack.c.l.b16 %v44
  %v131 = vunpack.c.l.b16 %v45
  %v132 = vunpack.c.l.b16 %v46
  %v133 = vunpack.c.l.b16 %v47
  %v134 = vunpack.c.l.b16 %v48
  %v135 = vpack.c.b16 %v104, %v103
  %v136 = vpack.c.b16 %v106, %v105
  %v137 = vpack.c.b16 %v108, %v107
  %v138 = vpack.c.b16 %v110, %v109
  %v139 = vpack.c.b16 %v112, %v111
  %v140 = vpack.c.b16 %v114, %v113
  %v141 = vpack.c.b16 %v116, %v115
  %v142 = vpack.c.b16 %v118, %v117
  %v143 = vpack.c.b16 %v120, %v119
  %v144 = vpack.c.b16 %v122, %v121
  %v145 = vpack.c.b16 %v124, %v123
  %v146 = vpack.c.b16 %v126, %v125
  %v147 = vpack.c.b16 %v128, %v127
  %v148 = vpack.c.b16 %v130, %v129
  %v149 = vpack.c.b16 %v132, %v131
  %v150 = vpack.c.b16 %v134, %v133
  %167 = vmatprep.subr.bf16.mxu0 0
  %168 = vmatpush1.bf16.msra.mxu0 %v142
  %169 = vmatprep.subr.bf16.mxu0 0
  %170 = vmatpush1.bf16.msra.mxu0 %v141
  %171 = vmatprep.subr.bf16.mxu0 0
  %172 = vmatpush1.bf16.msra.mxu0 %v140
  %173 = vmatprep.subr.bf16.mxu0 0
  %174 = vmatpush1.bf16.msra.mxu0 %v139
  %175 = vmatprep.subr.bf16.mxu0 0
  %176 = vmatpush1.bf16.msra.mxu0 %v138
  %177 = vmatprep.subr.bf16.mxu0 0
  %178 = vmatpush1.bf16.msra.mxu0 %v137
  %179 = vmatprep.subr.bf16.mxu0 0
  %180 = vmatpush1.bf16.msra.mxu0 %v136
  %181 = vmatprep.subr.bf16.mxu0 0
  %182 = vmatpush1.bf16.msra.mxu0 %v135
  %183 = vmatprep.subr.bf16.mxu0 0
  %184 = vmatpush2.bf16.msra.mxu0 %v150
  %185 = vmatprep.subr.bf16.mxu0 0
  %186 = vmatpush2.bf16.msra.mxu0 %v149
  %187 = vmatprep.subr.bf16.mxu0 0
  %188 = vmatpush2.bf16.msra.mxu0 %v148
  %189 = vmatprep.subr.bf16.mxu0 0
  %190 = vmatpush2.bf16.msra.mxu0 %v147
  %191 = vmatprep.subr.bf16.mxu0 0
  %192 = vmatpush2.bf16.msra.mxu0 %v146
  %193 = vmatprep.subr.bf16.mxu0 0
  %194 = vmatpush2.bf16.msra.mxu0 %v145
  %195 = vmatprep.subr.bf16.mxu0 0
  %196 = vmatpush2.bf16.msra.mxu0 %v144
  %197 = vmatprep.subr.bf16.mxu0 0
  %198 = vmatpush2.bf16.msra.mxu0 %v143
  %199 = vmatprep.mubr.bf16.mxu0 %v68
  %200 = vmatmul.mubr.bf16.gmra.mxu0 %v67
  %v201 = vpop.f32.mrf.mxu0
  %v202 = vadd.f32 %v54, %v201
  %v203 = vpop.f32.mrf.mxu0
  %v204 = vpop.f32.mrf.mxu0
  %v205 = vadd.f32 %v59, %v204
  %v206 = vpop.f32.mrf.mxu0
  %207 = vdwg.mxu0
  %vm208 = vcmp.gt.f32.partialorder %v202, 0.0
  %vm209 = vcmp.gt.f32.partialorder %v205, 0.0
  %v210 = vmin.f32 %v202, 0.0
  %v211 = vmin.f32 %v205, 0.0
  %v212 = vmul.f32 %v210, 1.442695
  %v213 = vpow.pop %v212
  %v214 = vmul.f32 %v211, 1.442695
  %v215 = vpow.pop %v214
  %v216 = vsub.f32 %v213, 1.0
  %v217 = vsub.f32 %v215, 1.0
  %v218 = vsel %vm208, %v202, %v216
  %v219 = vsel %vm209, %v205, %v217
  %v220 = vpack.c.bf16 %v219, %v218
  %v222 = vunpack.c.l.b16 %v220
  %v223 = vunpack.c.h.b16 %v220
  %v224 = vpack.c.b16 %v222, %v222
  %v225 = vpack.c.b16 %v223, %v223
  %228 = vst [vmem:[%s3] sm:$0xf] %v224
  %229 = vst [vmem:[%s3 + $0x4] sm:$0xf] %v225
  // Predicated region
  $region14: #{_forward.19} parent=0 // pred_check
    _
  $region15: #{_forward.19} parent=0 // pred_check_branch
    %231 = sbr.rel (0) target = $region17
  $region16: #{_forward.19} parent=0 // pred_region
    _
  $region17: #{_forward.19} parent=0 // pred_fallthru
    _
  // Predicated region
  $region18: #{_forward.19} parent=0 // pred_check
    _
  $region19: #{_forward.19} parent=0 // pred_check_branch
    %233 = sbr.rel (0) target = $region21
  $region20: #{_forward.19} parent=0 // pred_region
    _
  $region21: #{_forward.19} parent=0 // pred_fallthru
    _

// kernel: _forward.21
$region0: #{_forward.21}
  #allocation0 [shape = 'u32[]', space=smem, size = 0x4, offset = 0x4, fixed_abs, tag = 'smem constant byte address 0x4 - core index']
  #allocation1 [shape = 'u32[144,128]{1,0:T(1,128)}', space=vmem, size = 0x12000, scoped, tag = 'internal scratch']
  %s0 = inlined_call_operand.vmem [shape: bf16[8,256], index: 0, kind: input, shape index: {}]
  %s1 = inlined_call_operand.vmem [shape: bf16[256,128], index: 1, kind: input, shape index: {}]
  %s2 = inlined_call_operand.vmem [shape: f32[8,1], index: 2, kind: input, shape index: {}]
  %s3 = inlined_call_operand.vmem [shape: bf16[8,128], index: 3, kind: output, shape index: {}]
  %s4 = sld [smem:[#allocation0]]
  $region22: #{_forward.21} parent=0
    _
  %s6 = ssub.s32 1, %s4
  %s7 = scalar_select 0, %s6, %s4
  // Predicated region
  $region2: #{_forward.21} parent=0 // pred_check
    _
  $region3: #{_forward.21} parent=0 // pred_check_branch
    %9 = sbr.rel (0) target = $region5
  $region4: #{_forward.21} parent=0 // pred_region
    _
  $region5: #{_forward.21} parent=0 // pred_fallthru
    _
  // Predicated region
  $region6: #{_forward.21} parent=0 // pred_check
    _
  $region7: #{_forward.21} parent=0 // pred_check_branch
    %11 = sbr.rel (0) target = $region9
  $region8: #{_forward.21} parent=0 // pred_region
    _
  $region9: #{_forward.21} parent=0 // pred_fallthru
    _
  // Predicated region
  $region10: #{_forward.21} parent=0 // pred_check
    _
  $region11: #{_forward.21} parent=0 // pred_check_branch
    %13 = sbr.rel (0) target = $region13
  $region12: #{_forward.21} parent=0 // pred_region
    _
  $region13: #{_forward.21} parent=0 // pred_fallthru
    _
  %v15 = vld [vmem:[%s0] sm:$0xff]
  %v16 = vld [vmem:[%s1] sm:$0xf]
  %v17 = vld [vmem:[%s1 + $0x4] sm:$0xf]
  %v18 = vld [vmem:[%s1 + $0x8] sm:$0xf]
  %v19 = vld [vmem:[%s1 + $0xc] sm:$0xf]
  %v20 = vld [vmem:[%s1 + $0x10] sm:$0xf]
  %v21 = vld [vmem:[%s1 + $0x14] sm:$0xf]
  %v22 = vld [vmem:[%s1 + $0x18] sm:$0xf]
  %v23 = vld [vmem:[%s1 + $0x1c] sm:$0xf]
  %v24 = vld [vmem:[%s1 + $0x20] sm:$0xf]
  %v25 = vld [vmem:[%s1 + $0x24] sm:$0xf]
  %v26 = vld [vmem:[%s1 + $0x28] sm:$0xf]
  %v27 = vld [vmem:[%s1 + $0x2c] sm:$0xf]
  %v28 = vld [vmem:[%s1 + $0x30] sm:$0xf]
  %v29 = vld [vmem:[%s1 + $0x34] sm:$0xf]
  %v30 = vld [vmem:[%s1 + $0x38] sm:$0xf]
  %v31 = vld [vmem:[%s1 + $0x3c] sm:$0xf]
  %v32 = vld [vmem:[%s1 + $0x40] sm:$0xf]
  %v33 = vld [vmem:[%s1 + $0x44] sm:$0xf]
  %v34 = vld [vmem:[%s1 + $0x48] sm:$0xf]
  %v35 = vld [vmem:[%s1 + $0x4c] sm:$0xf]
  %v36 = vld [vmem:[%s1 + $0x50] sm:$0xf]
  %v37 = vld [vmem:[%s1 + $0x54] sm:$0xf]
  %v38 = vld [vmem:[%s1 + $0x58] sm:$0xf]
  %v39 = vld [vmem:[%s1 + $0x5c] sm:$0xf]
  %v40 = vld [vmem:[%s1 + $0x60] sm:$0xf]
  %v41 = vld [vmem:[%s1 + $0x64] sm:$0xf]
  %v42 = vld [vmem:[%s1 + $0x68] sm:$0xf]
  %v43 = vld [vmem:[%s1 + $0x6c] sm:$0xf]
  %v44 = vld [vmem:[%s1 + $0x70] sm:$0xf]
  %v45 = vld [vmem:[%s1 + $0x74] sm:$0xf]
  %v46 = vld [vmem:[%s1 + $0x78] sm:$0xf]
  %v47 = vld [vmem:[%s1 + $0x7c] sm:$0xf]
  %v48 = vld [vmem:[%s2] sm:$0xff]
  %50 = vset.pattern.permute.xlu0 0
  %51 = vperm.xlu0 %50, %v48
  %v52 = vpop.permute.xlu0 %51
  %v55 = vunpack.c.l.b16 %v15
  %v56 = vunpack.c.h.b16 %v15
  %v57 = vpack.c.b16 %v55, %v55
  %v58 = vpack.c.b16 %v56, %v56
  %v93 = vunpack.c.l.b16 %v16
  %v94 = vunpack.c.l.b16 %v17
  %v95 = vunpack.c.l.b16 %v18
  %v96 = vunpack.c.l.b16 %v19
  %v97 = vunpack.c.l.b16 %v20
  %v98 = vunpack.c.l.b16 %v21
  %v99 = vunpack.c.l.b16 %v22
  %v100 = vunpack.c.l.b16 %v23
  %v101 = vunpack.c.l.b16 %v24
  %v102 = vunpack.c.l.b16 %v25
  %v103 = vunpack.c.l.b16 %v26
  %v104 = vunpack.c.l.b16 %v27
  %v105 = vunpack.c.l.b16 %v28
  %v106 = vunpack.c.l.b16 %v29
  %v107 = vunpack.c.l.b16 %v30
  %v108 = vunpack.c.l.b16 %v31
  %v109 = vunpack.c.l.b16 %v32
  %v110 = vunpack.c.l.b16 %v33
  %v111 = vunpack.c.l.b16 %v34
  %v112 = vunpack.c.l.b16 %v35
  %v113 = vunpack.c.l.b16 %v36
  %v114 = vunpack.c.l.b16 %v37
  %v115 = vunpack.c.l.b16 %v38
  %v116 = vunpack.c.l.b16 %v39
  %v117 = vunpack.c.l.b16 %v40
  %v118 = vunpack.c.l.b16 %v41
  %v119 = vunpack.c.l.b16 %v42
  %v120 = vunpack.c.l.b16 %v43
  %v121 = vunpack.c.l.b16 %v44
  %v122 = vunpack.c.l.b16 %v45
  %v123 = vunpack.c.l.b16 %v46
  %v124 = vunpack.c.l.b16 %v47
  %v125 = vpack.c.b16 %v94, %v93
  %v126 = vpack.c.b16 %v96, %v95
  %v127 = vpack.c.b16 %v98, %v97
  %v128 = vpack.c.b16 %v100, %v99
  %v129 = vpack.c.b16 %v102, %v101
  %v130 = vpack.c.b16 %v104, %v103
  %v131 = vpack.c.b16 %v106, %v105
  %v132 = vpack.c.b16 %v108, %v107
  %v133 = vpack.c.b16 %v110, %v109
  %v134 = vpack.c.b16 %v112, %v111
  %v135 = vpack.c.b16 %v114, %v113
  %v136 = vpack.c.b16 %v116, %v115
  %v137 = vpack.c.b16 %v118, %v117
  %v138 = vpack.c.b16 %v120, %v119
  %v139 = vpack.c.b16 %v122, %v121
  %v140 = vpack.c.b16 %v124, %v123
  %157 = vmatprep.subr.bf16.mxu0 0
  %158 = vmatpush1.bf16.msra.mxu0 %v132
  %159 = vmatprep.subr.bf16.mxu0 0
  %160 = vmatpush1.bf16.msra.mxu0 %v131
  %161 = vmatprep.subr.bf16.mxu0 0
  %162 = vmatpush1.bf16.msra.mxu0 %v130
  %163 = vmatprep.subr.bf16.mxu0 0
  %164 = vmatpush1.bf16.msra.mxu0 %v129
  %165 = vmatprep.subr.bf16.mxu0 0
  %166 = vmatpush1.bf16.msra.mxu0 %v128
  %167 = vmatprep.subr.bf16.mxu0 0
  %168 = vmatpush1.bf16.msra.mxu0 %v127
  %169 = vmatprep.subr.bf16.mxu0 0
  %170 = vmatpush1.bf16.msra.mxu0 %v126
  %171 = vmatprep.subr.bf16.mxu0 0
  %172 = vmatpush1.bf16.msra.mxu0 %v125
  %173 = vmatprep.subr.bf16.mxu0 0
  %174 = vmatpush2.bf16.msra.mxu0 %v140
  %175 = vmatprep.subr.bf16.mxu0 0
  %176 = vmatpush2.bf16.msra.mxu0 %v139
  %177 = vmatprep.subr.bf16.mxu0 0
  %178 = vmatpush2.bf16.msra.mxu0 %v138
  %179 = vmatprep.subr.bf16.mxu0 0
  %180 = vmatpush2.bf16.msra.mxu0 %v137
  %181 = vmatprep.subr.bf16.mxu0 0
  %182 = vmatpush2.bf16.msra.mxu0 %v136
  %183 = vmatprep.subr.bf16.mxu0 0
  %184 = vmatpush2.bf16.msra.mxu0 %v135
  %185 = vmatprep.subr.bf16.mxu0 0
  %186 = vmatpush2.bf16.msra.mxu0 %v134
  %187 = vmatprep.subr.bf16.mxu0 0
  %188 = vmatpush2.bf16.msra.mxu0 %v133
  %189 = vmatprep.mubr.bf16.mxu0 %v58
  %190 = vmatmul.mubr.bf16.gmra.mxu0 %v57
  %v191 = vpop.f32.mrf.mxu0
  %v192 = vadd.f32 %v52, %v191
  %v193 = vpop.f32.mrf.mxu0
  %v194 = vpop.f32.mrf.mxu0
  %v195 = vpop.f32.mrf.mxu0
  %196 = vdwg.mxu0
  %vm197 = vcmp.gt.f32.partialorder %v192, 0.0
  %v198 = vmin.f32 %v192, 0.0
  %v199 = vmul.f32 %v198, 1.442695
  %v200 = vpow.pop %v199
  %v201 = vsub.f32 %v200, 1.0
  %v202 = vsel %vm197, %v192, %v201
  %v203 = vpack.c.bf16 %v202, %v202
  %204 = vst [vmem:[%s3] sm:$0xf] %v203
  // Predicated region
  $region14: #{_forward.21} parent=0 // pred_check
    _
  $region15: #{_forward.21} parent=0 // pred_check_branch
    %206 = sbr.rel (0) target = $region17
  $region16: #{_forward.21} parent=0 // pred_region
    _
  $region17: #{_forward.21} parent=0 // pred_fallthru
    _
  // Predicated region
  $region18: #{_forward.21} parent=0 // pred_check
    _
  $region19: #{_forward.21} parent=0 // pred_check_branch
    %208 = sbr.rel (0) target = $region21
  $region20: #{_forward.21} parent=0 // pred_region
    _
  $region21: #{_forward.21} parent=0 // pred_fallthru
    _

// kernel: _forward.20
$region0: #{_forward.20}
  #allocation0 [shape = 'u32[]', space=smem, size = 0x4, offset = 0x4, fixed_abs, tag = 'smem constant byte address 0x4 - core index']
  #allocation1 [shape = 'u32[144,128]{1,0:T(1,128)}', space=vmem, size = 0x12000, scoped, tag = 'internal scratch']
  %s0 = inlined_call_operand.vmem [shape: bf16[8,256], index: 0, kind: input, shape index: {}]
  %s1 = inlined_call_operand.vmem [shape: bf16[256,128], index: 1, kind: input, shape index: {}]
  %s2 = inlined_call_operand.vmem [shape: f32[8,1], index: 2, kind: input, shape index: {}]
  %s3 = inlined_call_operand.vmem [shape: f32[8,128], index: 3, kind: output, shape index: {}]
  %s4 = sld [smem:[#allocation0]]
  $region22: #{_forward.20} parent=0
    _
  %s6 = ssub.s32 1, %s4
  %s7 = scalar_select 0, %s6, %s4
  // Predicated region
  $region2: #{_forward.20} parent=0 // pred_check
    _
  $region3: #{_forward.20} parent=0 // pred_check_branch
    %9 = sbr.rel (0) target = $region5
  $region4: #{_forward.20} parent=0 // pred_region
    _
  $region5: #{_forward.20} parent=0 // pred_fallthru
    _
  // Predicated region
  $region6: #{_forward.20} parent=0 // pred_check
    _
  $region7: #{_forward.20} parent=0 // pred_check_branch
    %11 = sbr.rel (0) target = $region9
  $region8: #{_forward.20} parent=0 // pred_region
    _
  $region9: #{_forward.20} parent=0 // pred_fallthru
    _
  // Predicated region
  $region10: #{_forward.20} parent=0 // pred_check
    _
  $region11: #{_forward.20} parent=0 // pred_check_branch
    %13 = sbr.rel (0) target = $region13
  $region12: #{_forward.20} parent=0 // pred_region
    _
  $region13: #{_forward.20} parent=0 // pred_fallthru
    _
  %v15 = vld [vmem:[%s0] sm:$0xff]
  %v16 = vld [vmem:[%s1] sm:$0xf]
  %v17 = vld [vmem:[%s1 + $0x4] sm:$0xf]
  %v18 = vld [vmem:[%s1 + $0x8] sm:$0xf]
  %v19 = vld [vmem:[%s1 + $0xc] sm:$0xf]
  %v20 = vld [vmem:[%s1 + $0x10] sm:$0xf]
  %v21 = vld [vmem:[%s1 + $0x14] sm:$0xf]
  %v22 = vld [vmem:[%s1 + $0x18] sm:$0xf]
  %v23 = vld [vmem:[%s1 + $0x1c] sm:$0xf]
  %v24 = vld [vmem:[%s1 + $0x20] sm:$0xf]
  %v25 = vld [vmem:[%s1 + $0x24] sm:$0xf]
  %v26 = vld [vmem:[%s1 + $0x28] sm:$0xf]
  %v27 = vld [vmem:[%s1 + $0x2c] sm:$0xf]
  %v28 = vld [vmem:[%s1 + $0x30] sm:$0xf]
  %v29 = vld [vmem:[%s1 + $0x34] sm:$0xf]
  %v30 = vld [vmem:[%s1 + $0x38] sm:$0xf]
  %v31 = vld [vmem:[%s1 + $0x3c] sm:$0xf]
  %v32 = vld [vmem:[%s1 + $0x40] sm:$0xf]
  %v33 = vld [vmem:[%s1 + $0x44] sm:$0xf]
  %v34 = vld [vmem:[%s1 + $0x48] sm:$0xf]
  %v35 = vld [vmem:[%s1 + $0x4c] sm:$0xf]
  %v36 = vld [vmem:[%s1 + $0x50] sm:$0xf]
  %v37 = vld [vmem:[%s1 + $0x54] sm:$0xf]
  %v38 = vld [vmem:[%s1 + $0x58] sm:$0xf]
  %v39 = vld [vmem:[%s1 + $0x5c] sm:$0xf]
  %v40 = vld [vmem:[%s1 + $0x60] sm:$0xf]
  %v41 = vld [vmem:[%s1 + $0x64] sm:$0xf]
  %v42 = vld [vmem:[%s1 + $0x68] sm:$0xf]
  %v43 = vld [vmem:[%s1 + $0x6c] sm:$0xf]
  %v44 = vld [vmem:[%s1 + $0x70] sm:$0xf]
  %v45 = vld [vmem:[%s1 + $0x74] sm:$0xf]
  %v46 = vld [vmem:[%s1 + $0x78] sm:$0xf]
  %v47 = vld [vmem:[%s1 + $0x7c] sm:$0xf]
  %v48 = vld [vmem:[%s2] sm:$0xff]
  %50 = vset.pattern.permute.xlu0 0
  %51 = vperm.xlu0 %50, %v48
  %v52 = vpop.permute.xlu0 %51
  %v55 = vunpack.c.l.b16 %v15
  %v56 = vunpack.c.h.b16 %v15
  %v57 = vpack.c.b16 %v55, %v55
  %v58 = vpack.c.b16 %v56, %v56
  %v93 = vunpack.c.l.b16 %v16
  %v94 = vunpack.c.l.b16 %v17
  %v95 = vunpack.c.l.b16 %v18
  %v96 = vunpack.c.l.b16 %v19
  %v97 = vunpack.c.l.b16 %v20
  %v98 = vunpack.c.l.b16 %v21
  %v99 = vunpack.c.l.b16 %v22
  %v100 = vunpack.c.l.b16 %v23
  %v101 = vunpack.c.l.b16 %v24
  %v102 = vunpack.c.l.b16 %v25
  %v103 = vunpack.c.l.b16 %v26
  %v104 = vunpack.c.l.b16 %v27
  %v105 = vunpack.c.l.b16 %v28
  %v106 = vunpack.c.l.b16 %v29
  %v107 = vunpack.c.l.b16 %v30
  %v108 = vunpack.c.l.b16 %v31
  %v109 = vunpack.c.l.b16 %v32
  %v110 = vunpack.c.l.b16 %v33
  %v111 = vunpack.c.l.b16 %v34
  %v112 = vunpack.c.l.b16 %v35
  %v113 = vunpack.c.l.b16 %v36
  %v114 = vunpack.c.l.b16 %v37
  %v115 = vunpack.c.l.b16 %v38
  %v116 = vunpack.c.l.b16 %v39
  %v117 = vunpack.c.l.b16 %v40
  %v118 = vunpack.c.l.b16 %v41
  %v119 = vunpack.c.l.b16 %v42
  %v120 = vunpack.c.l.b16 %v43
  %v121 = vunpack.c.l.b16 %v44
  %v122 = vunpack.c.l.b16 %v45
  %v123 = vunpack.c.l.b16 %v46
  %v124 = vunpack.c.l.b16 %v47
  %v125 = vpack.c.b16 %v94, %v93
  %v126 = vpack.c.b16 %v96, %v95
  %v127 = vpack.c.b16 %v98, %v97
  %v128 = vpack.c.b16 %v100, %v99
  %v129 = vpack.c.b16 %v102, %v101
  %v130 = vpack.c.b16 %v104, %v103
  %v131 = vpack.c.b16 %v106, %v105
  %v132 = vpack.c.b16 %v108, %v107
  %v133 = vpack.c.b16 %v110, %v109
  %v134 = vpack.c.b16 %v112, %v111
  %v135 = vpack.c.b16 %v114, %v113
  %v136 = vpack.c.b16 %v116, %v115
  %v137 = vpack.c.b16 %v118, %v117
  %v138 = vpack.c.b16 %v120, %v119
  %v139 = vpack.c.b16 %v122, %v121
  %v140 = vpack.c.b16 %v124, %v123
  %157 = vmatprep.subr.bf16.mxu0 0
  %158 = vmatpush1.bf16.msra.mxu0 %v132
  %159 = vmatprep.subr.bf16.mxu0 0
  %160 = vmatpush1.bf16.msra.mxu0 %v131
  %161 = vmatprep.subr.bf16.mxu0 0
  %162 = vmatpush1.bf16.msra.mxu0 %v130
  %163 = vmatprep.subr.bf16.mxu0 0
  %164 = vmatpush1.bf16.msra.mxu0 %v129
  %165 = vmatprep.subr.bf16.mxu0 0
  %166 = vmatpush1.bf16.msra.mxu0 %v128
  %167 = vmatprep.subr.bf16.mxu0 0
  %168 = vmatpush1.bf16.msra.mxu0 %v127
  %169 = vmatprep.subr.bf16.mxu0 0
  %170 = vmatpush1.bf16.msra.mxu0 %v126
  %171 = vmatprep.subr.bf16.mxu0 0
  %172 = vmatpush1.bf16.msra.mxu0 %v125
  %173 = vmatprep.subr.bf16.mxu0 0
  %174 = vmatpush2.bf16.msra.mxu0 %v140
  %175 = vmatprep.subr.bf16.mxu0 0
  %176 = vmatpush2.bf16.msra.mxu0 %v139
  %177 = vmatprep.subr.bf16.mxu0 0
  %178 = vmatpush2.bf16.msra.mxu0 %v138
  %179 = vmatprep.subr.bf16.mxu0 0
  %180 = vmatpush2.bf16.msra.mxu0 %v137
  %181 = vmatprep.subr.bf16.mxu0 0
  %182 = vmatpush2.bf16.msra.mxu0 %v136
  %183 = vmatprep.subr.bf16.mxu0 0
  %184 = vmatpush2.bf16.msra.mxu0 %v135
  %185 = vmatprep.subr.bf16.mxu0 0
  %186 = vmatpush2.bf16.msra.mxu0 %v134
  %187 = vmatprep.subr.bf16.mxu0 0
  %188 = vmatpush2.bf16.msra.mxu0 %v133
  %189 = vmatprep.mubr.bf16.mxu0 %v58
  %190 = vmatmul.mubr.bf16.gmra.mxu0 %v57
  %v191 = vpop.f32.mrf.mxu0
  %v192 = vadd.f32 %v52, %v191
  %v193 = vpop.f32.mrf.mxu0
  %v194 = vpop.f32.mrf.mxu0
  %v195 = vpop.f32.mrf.mxu0
  %196 = vdwg.mxu0
  %v197 = vsub.f32 0.0, %v192
  %v198 = vmul.f32 %v197, 1.442695
  %v199 = vpow.pop %v198
  %v200 = vadd.f32 %v199, 1.0
  %v201 = vrcp.pop %v200
  %v202 = vmul.f32 1.0, %v201
  %203 = vst [vmem:[%s3] sm:$0xff] %v202
  // Predicated region
  $region14: #{_forward.20} parent=0 // pred_check
    _
  $region15: #{_forward.20} parent=0 // pred_check_branch
    %205 = sbr.rel (0) target = $region17
  $region16: #{_forward.20} parent=0 // pred_region
    _
  $region17: #{_forward.20} parent=0 // pred_fallthru
    _
  // Predicated region
  $region18: #{_forward.20} parent=0 // pred_check
    _
  $region19: #{_forward.20} parent=0 // pred_check_branch
    %207 = sbr.rel (0) target = $region21
  $region20: #{_forward.20} parent=0 // pred_region
    _
  $region21: #{_forward.20} parent=0 // pred_fallthru
    _

// kernel: _forward.22
$region0: #{_forward.22}
  #allocation0 [shape = 'u32[]', space=smem, size = 0x4, offset = 0x4, fixed_abs, tag = 'smem constant byte address 0x4 - core index']
  #allocation1 [shape = 'u32[144,128]{1,0:T(1,128)}', space=vmem, size = 0x12000, scoped, tag = 'internal scratch']
  %s0 = inlined_call_operand.vmem [shape: bf16[8,128], index: 0, kind: input, shape index: {}]
  %s1 = inlined_call_operand.vmem [shape: bf16[128,512], index: 1, kind: input, shape index: {}]
  %s2 = inlined_call_operand.vmem [shape: f32[8,1], index: 2, kind: input, shape index: {}]
  %s3 = inlined_call_operand.vmem [shape: bf16[8,512], index: 3, kind: output, shape index: {}]
  %s4 = sld [smem:[#allocation0]]
  $region83: #{_forward.22} parent=0
    _
  %s6 = ssub.s32 1, %s4
  %s7 = scalar_select 0, %s6, %s4
  $region1: #{_forward.22} parent=0
    #allocation2 [shape = 'u8[131072]{0}', space=vmem, size = 0x20000, scoped, tag = 'input window, operand 1']
    loop: start=0, step=1, limit=4
    $region2: #{_forward.22} parent=1 // loop_pre_header
      _
    $region3: #{_forward.22} parent=1 // loop_header
      %s9 = sphi 0, %s13
      %p10 = scmp.ge.s32.totalorder %s9, 4
      %s17 = sphi 0, %s17
      %s19 = sphi 0, %s17
      %s20 = sphi 0, %s19
      %s34 = sphi 0, %s20
      %s40 = sphi 0, %s42
      %s43 = sphi 0, %s40
      %s44 = sphi 0, %s43
      %s60 = sphi 0, %s44
      %s64 = sphi 0, %s64
      %s66 = sphi 0, %s64
      %s67 = sphi 0, %s66
      %s81 = sphi 0, %s67
      %s87 = sphi 0, %s89
      %s90 = sphi 0, %s87
      %s91 = sphi 0, %s90
      %s107 = sphi 0, %s91
    $region4: #{_forward.22} parent=1 // loop_header_branch
      %12 = sbr.rel (%p10) target = $region8
    $region5: #{_forward.22} parent=1 // loop_body
      %s14 = ssub.s32 %s9, 1
      %s15 = ssub.s32 %s9, 2
      %s16 = sadd.s32 %s9, 1
      %s18 = sadd.s32 %s17, 1
      %p21 = scmp.eq.s32.totalorder %s9, 1
      %p22 = scmp.ne.s32.totalorder %s17, %s19
      %p23 = scmp.eq.s32.totalorder %s9, 0
      %p24 = por %p22, %p23
      %p25 = scmp.ne.s32.totalorder %s17, %s19
      %p26 = scmp.eq.s32.totalorder %s14, 1
      %p27 = por %p25, %p26
      %p28 = scmp.ne.s32.totalorder %s19, %s20
      %p29 = scmp.eq.s32.totalorder %s14, 0
      %p30 = por %p28, %p29
      %p31 = scmp.ne.s32.totalorder %s19, %s20
      %p32 = scmp.eq.s32.totalorder %s15, 1
      %p33 = por %p31, %p32
      %p35 = scmp.ne.s32.totalorder %s20, %s34
      %p36 = scmp.eq.s32.totalorder %s15, 0
      %p37 = por %p35, %p36
      %s38 = ssub.s32 %s9, %s16
      %p39 = scmp.eq.s32.totalorder %s38, 0
      %s41 = sadd.s32 %s40, 1
      %s42 = scalar_select %p39, %s40, %s41
      %p45 = pneg %p39
      %p46 = scmp.eq.s32.totalorder %s9, 1
      %p47 = por %p45, %p46
      %p48 = scmp.ne.s32.totalorder %s40, %s43
      %p49 = scmp.eq.s32.totalorder %s9, 0
      %p50 = por %p48, %p49
      %p51 = scmp.ne.s32.totalorder %s40, %s43
      %p52 = scmp.eq.s32.totalorder %s14, 1
      %p53 = por %p51, %p52
      %p54 = scmp.ne.s32.totalorder %s43, %s44
      %p55 = scmp.eq.s32.totalorder %s14, 0
      %p56 = por %p54, %p55
      %p57 = scmp.ne.s32.totalorder %s43, %s44
      %p58 = scmp.eq.s32.totalorder %s15, 1
      %p59 = por %p57, %p58
      %p61 = scmp.ne.s32.totalorder %s44, %s60
      %p62 = scmp.eq.s32.totalorder %s15, 0
      %p63 = por %p61, %p62
      %s65 = sadd.s32 %s64, 1
      %p68 = scmp.eq.s32.totalorder %s9, 1
      %p69 = scmp.ne.s32.totalorder %s64, %s66
      %p70 = scmp.eq.s32.totalorder %s9, 0
      %p71 = por %p69, %p70
      %p72 = scmp.ne.s32.totalorder %s64, %s66
      %p73 = scmp.eq.s32.totalorder %s14, 1
      %p74 = por %p72, %p73
      %p75 = scmp.ne.s32.totalorder %s66, %s67
      %p76 = scmp.eq.s32.totalorder %s14, 0
      %p77 = por %p75, %p76
      %p78 = scmp.ne.s32.totalorder %s66, %s67
      %p79 = scmp.eq.s32.totalorder %s15, 1
      %p80 = por %p78, %p79
      %p82 = scmp.ne.s32.totalorder %s67, %s81
      %p83 = scmp.eq.s32.totalorder %s15, 0
      %p84 = por %p82, %p83
      %s85 = ssub.s32 %s9, %s16
      %p86 = scmp.eq.s32.totalorder %s85, 0
      %s88 = sadd.s32 %s87, 1
      %s89 = scalar_select %p86, %s87, %s88
      %p92 = pneg %p86
      %p93 = scmp.eq.s32.totalorder %s9, 1
      %p94 = por %p92, %p93
      %p95 = scmp.ne.s32.totalorder %s87, %s90
      %p96 = scmp.eq.s32.totalorder %s9, 0
      %p97 = por %p95, %p96
      %p98 = scmp.ne.s32.totalorder %s87, %s90
      %p99 = scmp.eq.s32.totalorder %s14, 1
      %p100 = por %p98, %p99
      %p101 = scmp.ne.s32.totalorder %s90, %s91
      %p102 = scmp.eq.s32.totalorder %s14, 0
      %p103 = por %p101, %p102
      %p104 = scmp.ne.s32.totalorder %s90, %s91
      %p105 = scmp.eq.s32.totalorder %s15, 1
      %p106 = por %p104, %p105
      %p108 = scmp.ne.s32.totalorder %s91, %s107
      %p109 = scmp.eq.s32.totalorder %s15, 0
      %p110 = por %p108, %p109
      %p111 = scmp.le.s32.totalorder 1, %s9
      %p112 = scmp.lt.s32.totalorder %s9, 3
      %p113 = pnand %p111, %p112
      %p114 = pneg %p113
      // Predicated region
      $region9: #{_forward.22} parent=5 // pred_check
        _
      $region10: #{_forward.22} parent=5 // pred_check_branch
        %116 = sbr.rel (%p113) target = $region12
      $region11: #{_forward.22} parent=5 // pred_region
        %s117 = ssub.s32 %s9, 1
        // Predicated region
        $region13: #{_forward.22} parent=11 // pred_check
          %p118 = pneg %p30
        $region14: #{_forward.22} parent=11 // pred_check_branch
          %120 = sbr.rel (%p118) target = $region16
        $region15: #{_forward.22} parent=11 // pred_region
          _
        $region16: #{_forward.22} parent=11 // pred_fallthru
          _
        // Predicated region
        $region17: #{_forward.22} parent=11 // pred_check
          %p121 = pneg %p77
        $region18: #{_forward.22} parent=11 // pred_check_branch
          %123 = sbr.rel (%p121) target = $region20
        $region19: #{_forward.22} parent=11 // pred_region
          _
        $region20: #{_forward.22} parent=11 // pred_fallthru
          _
      $region12: #{_forward.22} parent=5 // pred_fallthru
        _
      %p124 = scmp.lt.s32.totalorder %s9, 2
      // Predicated region
      $region21: #{_forward.22} parent=5 // pred_check
        %p125 = pneg %p124
      $region22: #{_forward.22} parent=5 // pred_check_branch
        %127 = sbr.rel (%p125) target = $region24
      $region23: #{_forward.22} parent=5 // pred_region
        // Predicated region
        $region25: #{_forward.22} parent=23 // pred_check
          %p128 = pneg %p50
        $region26: #{_forward.22} parent=23 // pred_check_branch
          %130 = sbr.rel (%p128) target = $region28
        $region27: #{_forward.22} parent=23 // pred_region
          %s131 = sand.u32 %s40, 1
          %s132 = sand.u32 %s40, 1
          %s133 = smul.addr %s132, 128
          %s134 = scalar_lea.vmem [#allocation2], %s133
          %s135 = smul.u32 2, %s9
          %s136 = smul.addr %s135, 4
          %s137 = scalar_lea.vmem %s1, %s136
          // Predicated region
          $region29: #{_forward.22} parent=27 // pred_check
            _
          $region30: #{_forward.22} parent=27 // pred_check_branch
            %139 = sbr.rel (0) target = $region32
          $region31: #{_forward.22} parent=27 // pred_region
            // Predicated region
            $region33: #{_forward.22} parent=31 // pred_check
              _
            $region34: #{_forward.22} parent=31 // pred_check_branch
              %141 = sbr.rel (0) target = $region36
            $region35: #{_forward.22} parent=31 // pred_region
              // Predicated region
              $region48: #{_forward.22} parent=35 // pred_check
                _
              $region49: #{_forward.22} parent=35 // pred_check_branch
                %187 = sbr.rel (0) target = $region51
              $region50: #{_forward.22} parent=35 // pred_region
                loop: start=0, step=1, limit=1
                $region52: #{_forward.22} parent=50 // loop_pre_header
                  _
                $region53: #{_forward.22} parent=50 // loop_header
                  %s189 = sphi 0, %s193
                  %p190 = scmp.ge.s32.totalorder %s189, 1
                  %s194 = sphi %s137, %s137
                  %s195 = sphi %s134, %s134
                $region54: #{_forward.22} parent=50 // loop_header_branch
                  %192 = sbr.rel (%p190) target = $region58
                $region55: #{_forward.22} parent=50 // loop_body
                  %v196 = vld [vmem:[%s194] sm:$0xff]
                  %197 = vst [vmem:[%s195] sm:$0xff] %v196
                  %v198 = vld [vmem:[%s194 + $0x10] sm:$0xff]
                  %199 = vst [vmem:[%s195 + $0x8] sm:$0xff] %v198
                  %v200 = vld [vmem:[%s194 + $0x20] sm:$0xff]
                  %201 = vst [vmem:[%s195 + $0x10] sm:$0xff] %v200
                  %v202 = vld [vmem:[%s194 + $0x30] sm:$0xff]
                  %203 = vst [vmem:[%s195 + $0x18] sm:$0xff] %v202
                  %v204 = vld [vmem:[%s194 + $0x40] sm:$0xff]
                  %205 = vst [vmem:[%s195 + $0x20] sm:$0xff] %v204
                  %v206 = vld [vmem:[%s194 + $0x50] sm:$0xff]
                  %207 = vst [vmem:[%s195 + $0x28] sm:$0xff] %v206
                  %v208 = vld [vmem:[%s194 + $0x60] sm:$0xff]
                  %209 = vst [vmem:[%s195 + $0x30] sm:$0xff] %v208
                  %v210 = vld [vmem:[%s194 + $0x70] sm:$0xff]
                  %211 = vst [vmem:[%s195 + $0x38] sm:$0xff] %v210
                  %v212 = vld [vmem:[%s194 + $0x80] sm:$0xff]
                  %213 = vst [vmem:[%s195 + $0x40] sm:$0xff] %v212
                  %v214 = vld [vmem:[%s194 + $0x90] sm:$0xff]
                  %215 = vst [vmem:[%s195 + $0x48] sm:$0xff] %v214
                  %v216 = vld [vmem:[%s194 + $0xa0] sm:$0xff]
                  %217 = vst [vmem:[%s195 + $0x50] sm:$0xff] %v216
                  %v218 = vld [vmem:[%s194 + $0xb0] sm:$0xff]
                  %219 = vst [vmem:[%s195 + $0x58] sm:$0xff] %v218
                  %v220 = vld [vmem:[%s194 + $0xc0] sm:$0xff]
                  %221 = vst [vmem:[%s195 + $0x60] sm:$0xff] %v220
                  %v222 = vld [vmem:[%s194 + $0xd0] sm:$0xff]
                  %223 = vst [vmem:[%s195 + $0x68] sm:$0xff] %v222
                  %v224 = vld [vmem:[%s194 + $0xe0] sm:$0xff]
                  %225 = vst [vmem:[%s195 + $0x70] sm:$0xff] %v224
                  %v226 = vld [vmem:[%s194 + $0xf0] sm:$0xff]
                  %227 = vst [vmem:[%s195 + $0x78] sm:$0xff] %v226
                $region56: #{_forward.22} parent=50 // loop_footer
                  %s193 = sadd.s32 1, %s189
                $region57: #{_forward.22} parent=50 // loop_footer_branch
                  %188 = sbr.rel target = $region53
                $region58: #{_forward.22} parent=50 // loop_exit
                  _
              $region51: #{_forward.22} parent=35 // pred_fallthru
                _
              // Predicated region
              $region59: #{_forward.22} parent=35 // pred_check
                _
              $region60: #{_forward.22} parent=35 // pred_check_branch
                %229 = sbr.rel target = $region62
              $region61: #{_forward.22} parent=35 // pred_region
                _
              $region62: #{_forward.22} parent=35 // pred_fallthru
                _
            $region36: #{_forward.22} parent=31 // pred_fallthru
              _
            // Predicated region
            $region37: #{_forward.22} parent=31 // pred_check
              _
            $region38: #{_forward.22} parent=31 // pred_check_branch
              %143 = sbr.rel target = $region40
            $region39: #{_forward.22} parent=31 // pred_region
              %s145 = ssub.s32 256, 1
              loop: start=0, step=1, limit=1
              $region41: #{_forward.22} parent=39 // loop_pre_header
                _
              $region42: #{_forward.22} parent=39 // loop_header
                %s147 = sphi 0, %s151
                %p148 = scmp.ge.s32.totalorder %s147, 1
                %s152 = sphi %s137, %s137
                %s153 = sphi %s134, %s134
              $region43: #{_forward.22} parent=39 // loop_header_branch
                %150 = sbr.rel (%p148) target = $region47
              $region44: #{_forward.22} parent=39 // loop_body
                %v154 = vld [vmem:[%s152] sm:%s145]
                %155 = vst [vmem:[%s153] sm:%s145] %v154
                %v156 = vld [vmem:[%s152 + $0x10] sm:%s145]
                %157 = vst [vmem:[%s153 + $0x8] sm:%s145] %v156
                %v158 = vld [vmem:[%s152 + $0x20] sm:%s145]
                %159 = vst [vmem:[%s153 + $0x10] sm:%s145] %v158
                %v160 = vld [vmem:[%s152 + $0x30] sm:%s145]
                %161 = vst [vmem:[%s153 + $0x18] sm:%s145] %v160
                %v162 = vld [vmem:[%s152 + $0x40] sm:%s145]
                %163 = vst [vmem:[%s153 + $0x20] sm:%s145] %v162
                %v164 = vld [vmem:[%s152 + $0x50] sm:%s145]
                %165 = vst [vmem:[%s153 + $0x28] sm:%s145] %v164
                %v166 = vld [vmem:[%s152 + $0x60] sm:%s145]
                %167 = vst [vmem:[%s153 + $0x30] sm:%s145] %v166
                %v168 = vld [vmem:[%s152 + $0x70] sm:%s145]
                %169 = vst [vmem:[%s153 + $0x38] sm:%s145] %v168
                %v170 = vld [vmem:[%s152 + $0x80] sm:%s145]
                %171 = vst [vmem:[%s153 + $0x40] sm:%s145] %v170
                %v172 = vld [vmem:[%s152 + $0x90] sm:%s145]
                %173 = vst [vmem:[%s153 + $0x48] sm:%s145] %v172
                %v174 = vld [vmem:[%s152 + $0xa0] sm:%s145]
                %175 = vst [vmem:[%s153 + $0x50] sm:%s145] %v174
                %v176 = vld [vmem:[%s152 + $0xb0] sm:%s145]
                %177 = vst [vmem:[%s153 + $0x58] sm:%s145] %v176
                %v178 = vld [vmem:[%s152 + $0xc0] sm:%s145]
                %179 = vst [vmem:[%s153 + $0x60] sm:%s145] %v178
                %v180 = vld [vmem:[%s152 + $0xd0] sm:%s145]
                %181 = vst [vmem:[%s153 + $0x68] sm:%s145] %v180
                %v182 = vld [vmem:[%s152 + $0xe0] sm:%s145]
                %183 = vst [vmem:[%s153 + $0x70] sm:%s145] %v182
                %v184 = vld [vmem:[%s152 + $0xf0] sm:%s145]
                %185 = vst [vmem:[%s153 + $0x78] sm:%s145] %v184
              $region45: #{_forward.22} parent=39 // loop_footer
                %s151 = sadd.s32 1, %s147
              $region46: #{_forward.22} parent=39 // loop_footer_branch
                %146 = sbr.rel target = $region42
              $region47: #{_forward.22} parent=39 // loop_exit
                _
            $region40: #{_forward.22} parent=31 // pred_fallthru
              _
          $region32: #{_forward.22} parent=27 // pred_fallthru
            _
          %230 = vnop
        $region28: #{_forward.22} parent=23 // pred_fallthru
          _
      $region24: #{_forward.22} parent=5 // pred_fallthru
        _
      %p231 = scmp.le.s32.totalorder 1, %s9
      %p232 = scmp.lt.s32.totalorder %s9, 3
      %p233 = pnand %p231, %p232
      %p234 = pneg %p233
      // Predicated region
      $region63: #{_forward.22} parent=5 // pred_check
        _
      $region64: #{_forward.22} parent=5 // pred_check_branch
        %236 = sbr.rel (%p233) target = $region66
      $region65: #{_forward.22} parent=5 // pred_region
        %s237 = ssub.s32 %s9, 1
        %s238 = sand.u32 %s43, 1
        %s239 = sand.u32 %s43, 1
        %s240 = smul.addr %s239, 128
        %s241 = scalar_lea.vmem [#allocation2], %s240
        // Predicated region
        $region67: #{_forward.22} parent=65 // pred_check
          %p242 = pneg %p56
        $region68: #{_forward.22} parent=65 // pred_check_branch
          %244 = sbr.rel (%p242) target = $region70
        $region69: #{_forward.22} parent=65 // pred_region
          _
        $region70: #{_forward.22} parent=65 // pred_fallthru
          _
        %p245 = pneg %p30
        %p246 = pneg %p27
        %s247 = sand.u32 %s43, 1
        %s248 = sand.u32 %s43, 1
        %s249 = smul.addr %s248, 128
        %s250 = scalar_lea.vmem [#allocation2], %s249
        %p251 = pneg %p56
        %p252 = pneg %p53
        %p253 = pneg %p77
        %p254 = pneg %p74
        %p255 = pneg %p103
        %p256 = pneg %p100
        %s257 = smul.u32 2, %s14
        %p258 = scmp.lt.s32.totalorder %s257, 3
        %s259 = scalar_select %p258, %s257, 3
        %s260 = smul.addr %s259, 4
        %s261 = scalar_lea.vmem %s3, %s260
        %s262 = smul.u32 2, %s14
        %s263 = smul.u32 2, %s14
        %p264 = scmp.lt.s32.totalorder %s263, 3
        %s265 = scalar_select %p264, %s263, 3
        %s266 = smul.addr %s265, 4
        %s267 = scalar_lea.vmem %s3, %s266
        %s268 = smul.u32 2, %s14
        %v270 = vld [vmem:[%s0] sm:$0xf]
        %v271 = vld [vmem:[%s241] sm:$0xff]
        %v272 = vld [vmem:[%s241 + $0x8] sm:$0xff]
        %v273 = vld [vmem:[%s241 + $0x10] sm:$0xff]
        %v274 = vld [vmem:[%s241 + $0x18] sm:$0xff]
        %v275 = vld [vmem:[%s241 + $0x20] sm:$0xff]
        %v276 = vld [vmem:[%s241 + $0x28] sm:$0xff]
        %v277 = vld [vmem:[%s241 + $0x30] sm:$0xff]
        %v278 = vld [vmem:[%s241 + $0x38] sm:$0xff]
        %v279 = vld [vmem:[%s241 + $0x40] sm:$0xff]
        %v280 = vld [vmem:[%s241 + $0x48] sm:$0xff]
        %v281 = vld [vmem:[%s241 + $0x50] sm:$0xff]
        %v282 = vld [vmem:[%s241 + $0x58] sm:$0xff]
        %v283 = vld [vmem:[%s241 + $0x60] sm:$0xff]
        %v284 = vld [vmem:[%s241 + $0x68] sm:$0xff]
        %v285 = vld [vmem:[%s241 + $0x70] sm:$0xff]
        %v286 = vld [vmem:[%s241 + $0x78] sm:$0xff]
        %v287 = vld [vmem:[%s2] sm:$0xff]
        %289 = vset.pattern.permute.xlu0 0
        %290 = vperm.xlu0 %289, %v287
        %v291 = vpop.permute.xlu0 %290
        %v309 = vunpack.c.l.b16 %v271
        %v310 = vunpack.c.h.b16 %v271
        %v311 = vunpack.c.l.b16 %v272
        %v312 = vunpack.c.h.b16 %v272
        %v313 = vunpack.c.l.b16 %v273
        %v314 = vunpack.c.h.b16 %v273
        %v315 = vunpack.c.l.b16 %v274
        %v316 = vunpack.c.h.b16 %v274
        %v317 = vunpack.c.l.b16 %v275
        %v318 = vunpack.c.h.b16 %v275
        %v319 = vunpack.c.l.b16 %v276
        %v320 = vunpack.c.h.b16 %v276
        %v321 = vunpack.c.l.b16 %v277
        %v322 = vunpack.c.h.b16 %v277
        %v323 = vunpack.c.l.b16 %v278
        %v324 = vunpack.c.h.b16 %v278
        %v325 = vunpack.c.l.b16 %v279
        %v326 = vunpack.c.h.b16 %v279
        %v327 = vunpack.c.l.b16 %v280
        %v328 = vunpack.c.h.b16 %v280
        %v329 = vunpack.c.l.b16 %v281
        %v330 = vunpack.c.h.b16 %v281
        %v331 = vunpack.c.l.b16 %v282
        %v332 = vunpack.c.h.b16 %v282
        %v333 = vunpack.c.l.b16 %v283
        %v334 = vunpack.c.h.b16 %v283
        %v335 = vunpack.c.l.b16 %v284
        %v336 = vunpack.c.h.b16 %v284
        %v337 = vunpack.c.l.b16 %v285
        %v338 = vunpack.c.h.b16 %v285
        %v339 = vunpack.c.l.b16 %v286
        %v340 = vunpack.c.h.b16 %v286
        %v341 = vpack.c.b16 %v311, %v309
        %v342 = vpack.c.b16 %v312, %v310
        %v343 = vpack.c.b16 %v315, %v313
        %v344 = vpack.c.b16 %v316, %v314
        %v345 = vpack.c.b16 %v319, %v317
        %v346 = vpack.c.b16 %v320, %v318
        %v347 = vpack.c.b16 %v323, %v321
        %v348 = vpack.c.b16 %v324, %v322
        %v349 = vpack.c.b16 %v327, %v325
        %v350 = vpack.c.b16 %v328, %v326
        %v351 = vpack.c.b16 %v331, %v329
        %v352 = vpack.c.b16 %v332, %v330
        %v353 = vpack.c.b16 %v335, %v333
        %v354 = vpack.c.b16 %v336, %v334
        %v355 = vpack.c.b16 %v339, %v337
        %v356 = vpack.c.b16 %v340, %v338
        %373 = vmatprep.subr.bf16.mxu0 %v356
        %374 = vmatpush1.bf16.msra.mxu0 %v355
        %375 = vmatprep.subr.bf16.mxu0 %v354
        %376 = vmatpush1.bf16.msra.mxu0 %v353
        %377 = vmatprep.subr.bf16.mxu0 %v352
        %378 = vmatpush1.bf16.msra.mxu0 %v351
        %379 = vmatprep.subr.bf16.mxu0 %v350
        %380 = vmatpush1.bf16.msra.mxu0 %v349
        %381 = vmatprep.subr.bf16.mxu0 %v348
        %382 = vmatpush1.bf16.msra.mxu0 %v347
        %383 = vmatprep.subr.bf16.mxu0 %v346
        %384 = vmatpush1.bf16.msra.mxu0 %v345
        %385 = vmatprep.subr.bf16.mxu0 %v344
        %386 = vmatpush1.bf16.msra.mxu0 %v343
        %387 = vmatprep.subr.bf16.mxu0 %v342
        %388 = vmatpush1.bf16.msra.mxu0 %v341
        %389 = vmatprep.subr.bf16.mxu0 0
        %390 = vmatpush2.bf16.msra.mxu0 0
        %391 = vmatprep.subr.bf16.mxu0 0
        %392 = vmatpush2.bf16.msra.mxu0 0
        %393 = vmatprep.subr.bf16.mxu0 0
        %394 = vmatpush2.bf16.msra.mxu0 0
        %395 = vmatprep.subr.bf16.mxu0 0
        %396 = vmatpush2.bf16.msra.mxu0 0
        %397 = vmatprep.subr.bf16.mxu0 0
        %398 = vmatpush2.bf16.msra.mxu0 0
        %399 = vmatprep.subr.bf16.mxu0 0
        %400 = vmatpush2.bf16.msra.mxu0 0
        %401 = vmatprep.subr.bf16.mxu0 0
        %402 = vmatpush2.bf16.msra.mxu0 0
        %403 = vmatprep.subr.bf16.mxu0 0
        %404 = vmatpush2.bf16.msra.mxu0 0
        %405 = vmatprep.mubr.bf16.mxu0 0
        %406 = vmatmul.mubr.bf16.gmra.mxu0 %v270
        %v407 = vpop.f32.mrf.mxu0
        %v408 = vadd.f32 %v291, %v407
        %v409 = vpop.f32.mrf.mxu0
        %v410 = vadd.f32 %v291, %v409
        %v411 = vpop.f32.mrf.mxu0
        %v412 = vpop.f32.mrf.mxu0
        %413 = vdwg.mxu0
        %vm414 = vcmp.gt.f32.partialorder %v408, 0.0
        %vm415 = vcmp.gt.f32.partialorder %v410, 0.0
        %v416 = vmin.f32 %v408, 0.0
        %v417 = vmin.f32 %v410, 0.0
        %v418 = vmul.f32 %v416, 1.442695
        %v419 = vpow.pop %v418
        %v420 = vmul.f32 %v417, 1.442695
        %v421 = vpow.pop %v420
        %v422 = vsub.f32 %v419, 1.0
        %v423 = vsub.f32 %v421, 1.0
        %v424 = vsel %vm414, %v408, %v422
        %v425 = vsel %vm415, %v410, %v423
        %v426 = vpack.c.bf16 %v424, %v424
        %v427 = vpack.c.bf16 %v425, %v425
        %v430 = vunpack.c.l.b16 %v426
        %v431 = vunpack.c.l.b16 %v427
        %v432 = vpack.c.b16 %v431, %v430
        %434 = vst [vmem:[%s267] sm:$0xff] %v432
        %s435 = smul.u32 2, %s14
        %p436 = scmp.lt.s32.totalorder %s435, 3
        %s437 = scalar_select %p436, %s435, 3
        %s438 = smul.addr %s437, 4
        %s439 = scalar_lea.vmem %s3, %s438
        // Predicated region
        $region71: #{_forward.22} parent=65 // pred_check
          %p440 = pneg %p100
        $region72: #{_forward.22} parent=65 // pred_check_branch
          %442 = sbr.rel (%p440) target = $region74
        $region73: #{_forward.22} parent=65 // pred_region
          %s443 = smul.u32 2, %s14
        $region74: #{_forward.22} parent=65 // pred_fallthru
          _
      $region66: #{_forward.22} parent=5 // pred_fallthru
        _
      %p444 = scmp.le.s32.totalorder 2, %s9
      // Predicated region
      $region75: #{_forward.22} parent=5 // pred_check
        %p445 = pneg %p444
      $region76: #{_forward.22} parent=5 // pred_check_branch
        %447 = sbr.rel (%p445) target = $region78
      $region77: #{_forward.22} parent=5 // pred_region
        %s448 = ssub.s32 %s9, 2
        // Predicated region
        $region79: #{_forward.22} parent=77 // pred_check
          %p449 = pneg %p106
        $region80: #{_forward.22} parent=77 // pred_check_branch
          %451 = sbr.rel (%p449) target = $region82
        $region81: #{_forward.22} parent=77 // pred_region
          %s452 = smul.u32 2, %s15
          %p453 = scmp.lt.s32.totalorder %s452, 3
          %s454 = scalar_select %p453, %s452, 3
          %s455 = smul.addr %s454, 4
          %s456 = scalar_lea.vmem %s3, %s455
        $region82: #{_forward.22} parent=77 // pred_fallthru
          _
      $region78: #{_forward.22} parent=5 // pred_fallthru
        _
    $region6: #{_forward.22} parent=1 // loop_footer
      %s13 = sadd.s32 1, %s9
    $region7: #{_forward.22} parent=1 // loop_footer_branch
      %8 = sbr.rel target = $region3
    $region8: #{_forward.22} parent=1 // loop_exit
      _

// kernel: _forward.23
$region0: #{_forward.23}
  #allocation0 [shape = 'u32[]', space=smem, size = 0x4, offset = 0x4, fixed_abs, tag = 'smem constant byte address 0x4 - core index']
  #allocation1 [shape = 'u32[144,128]{1,0:T(1,128)}', space=vmem, size = 0x12000, scoped, tag = 'internal scratch']
  %s0 = inlined_call_operand.vmem [shape: bf16[8,128], index: 0, kind: input, shape index: {}]
  %s1 = inlined_call_operand.vmem [shape: bf16[128,512], index: 1, kind: input, shape index: {}]
  %s2 = inlined_call_operand.vmem [shape: f32[8,1], index: 2, kind: input, shape index: {}]
  %s3 = inlined_call_operand.vmem [shape: f32[8,512], index: 3, kind: output, shape index: {}]
  %s4 = sld [smem:[#allocation0]]
  $region83: #{_forward.23} parent=0
    _
  %s6 = ssub.s32 1, %s4
  %s7 = scalar_select 0, %s6, %s4
  $region1: #{_forward.23} parent=0
    #allocation2 [shape = 'u8[131072]{0}', space=vmem, size = 0x20000, scoped, tag = 'input window, operand 1']
    loop: start=0, step=1, limit=4
    $region2: #{_forward.23} parent=1 // loop_pre_header
      _
    $region3: #{_forward.23} parent=1 // loop_header
      %s9 = sphi 0, %s13
      %p10 = scmp.ge.s32.totalorder %s9, 4
      %s17 = sphi 0, %s17
      %s19 = sphi 0, %s17
      %s20 = sphi 0, %s19
      %s34 = sphi 0, %s20
      %s40 = sphi 0, %s42
      %s43 = sphi 0, %s40
      %s44 = sphi 0, %s43
      %s60 = sphi 0, %s44
      %s64 = sphi 0, %s64
      %s66 = sphi 0, %s64
      %s67 = sphi 0, %s66
      %s81 = sphi 0, %s67
      %s87 = sphi 0, %s89
      %s90 = sphi 0, %s87
      %s91 = sphi 0, %s90
      %s107 = sphi 0, %s91
    $region4: #{_forward.23} parent=1 // loop_header_branch
      %12 = sbr.rel (%p10) target = $region8
    $region5: #{_forward.23} parent=1 // loop_body
      %s14 = ssub.s32 %s9, 1
      %s15 = ssub.s32 %s9, 2
      %s16 = sadd.s32 %s9, 1
      %s18 = sadd.s32 %s17, 1
      %p21 = scmp.eq.s32.totalorder %s9, 1
      %p22 = scmp.ne.s32.totalorder %s17, %s19
      %p23 = scmp.eq.s32.totalorder %s9, 0
      %p24 = por %p22, %p23
      %p25 = scmp.ne.s32.totalorder %s17, %s19
      %p26 = scmp.eq.s32.totalorder %s14, 1
      %p27 = por %p25, %p26
      %p28 = scmp.ne.s32.totalorder %s19, %s20
      %p29 = scmp.eq.s32.totalorder %s14, 0
      %p30 = por %p28, %p29
      %p31 = scmp.ne.s32.totalorder %s19, %s20
      %p32 = scmp.eq.s32.totalorder %s15, 1
      %p33 = por %p31, %p32
      %p35 = scmp.ne.s32.totalorder %s20, %s34
      %p36 = scmp.eq.s32.totalorder %s15, 0
      %p37 = por %p35, %p36
      %s38 = ssub.s32 %s9, %s16
      %p39 = scmp.eq.s32.totalorder %s38, 0
      %s41 = sadd.s32 %s40, 1
      %s42 = scalar_select %p39, %s40, %s41
      %p45 = pneg %p39
      %p46 = scmp.eq.s32.totalorder %s9, 1
      %p47 = por %p45, %p46
      %p48 = scmp.ne.s32.totalorder %s40, %s43
      %p49 = scmp.eq.s32.totalorder %s9, 0
      %p50 = por %p48, %p49
      %p51 = scmp.ne.s32.totalorder %s40, %s43
      %p52 = scmp.eq.s32.totalorder %s14, 1
      %p53 = por %p51, %p52
      %p54 = scmp.ne.s32.totalorder %s43, %s44
      %p55 = scmp.eq.s32.totalorder %s14, 0
      %p56 = por %p54, %p55
      %p57 = scmp.ne.s32.totalorder %s43, %s44
      %p58 = scmp.eq.s32.totalorder %s15, 1
      %p59 = por %p57, %p58
      %p61 = scmp.ne.s32.totalorder %s44, %s60
      %p62 = scmp.eq.s32.totalorder %s15, 0
      %p63 = por %p61, %p62
      %s65 = sadd.s32 %s64, 1
      %p68 = scmp.eq.s32.totalorder %s9, 1
      %p69 = scmp.ne.s32.totalorder %s64, %s66
      %p70 = scmp.eq.s32.totalorder %s9, 0
      %p71 = por %p69, %p70
      %p72 = scmp.ne.s32.totalorder %s64, %s66
      %p73 = scmp.eq.s32.totalorder %s14, 1
      %p74 = por %p72, %p73
      %p75 = scmp.ne.s32.totalorder %s66, %s67
      %p76 = scmp.eq.s32.totalorder %s14, 0
      %p77 = por %p75, %p76
      %p78 = scmp.ne.s32.totalorder %s66, %s67
      %p79 = scmp.eq.s32.totalorder %s15, 1
      %p80 = por %p78, %p79
      %p82 = scmp.ne.s32.totalorder %s67, %s81
      %p83 = scmp.eq.s32.totalorder %s15, 0
      %p84 = por %p82, %p83
      %s85 = ssub.s32 %s9, %s16
      %p86 = scmp.eq.s32.totalorder %s85, 0
      %s88 = sadd.s32 %s87, 1
      %s89 = scalar_select %p86, %s87, %s88
      %p92 = pneg %p86
      %p93 = scmp.eq.s32.totalorder %s9, 1
      %p94 = por %p92, %p93
      %p95 = scmp.ne.s32.totalorder %s87, %s90
      %p96 = scmp.eq.s32.totalorder %s9, 0
      %p97 = por %p95, %p96
      %p98 = scmp.ne.s32.totalorder %s87, %s90
      %p99 = scmp.eq.s32.totalorder %s14, 1
      %p100 = por %p98, %p99
      %p101 = scmp.ne.s32.totalorder %s90, %s91
      %p102 = scmp.eq.s32.totalorder %s14, 0
      %p103 = por %p101, %p102
      %p104 = scmp.ne.s32.totalorder %s90, %s91
      %p105 = scmp.eq.s32.totalorder %s15, 1
      %p106 = por %p104, %p105
      %p108 = scmp.ne.s32.totalorder %s91, %s107
      %p109 = scmp.eq.s32.totalorder %s15, 0
      %p110 = por %p108, %p109
      %p111 = scmp.le.s32.totalorder 1, %s9
      %p112 = scmp.lt.s32.totalorder %s9, 3
      %p113 = pnand %p111, %p112
      %p114 = pneg %p113
      // Predicated region
      $region9: #{_forward.23} parent=5 // pred_check
        _
      $region10: #{_forward.23} parent=5 // pred_check_branch
        %116 = sbr.rel (%p113) target = $region12
      $region11: #{_forward.23} parent=5 // pred_region
        %s117 = ssub.s32 %s9, 1
        // Predicated region
        $region13: #{_forward.23} parent=11 // pred_check
          %p118 = pneg %p30
        $region14: #{_forward.23} parent=11 // pred_check_branch
          %120 = sbr.rel (%p118) target = $region16
        $region15: #{_forward.23} parent=11 // pred_region
          _
        $region16: #{_forward.23} parent=11 // pred_fallthru
          _
        // Predicated region
        $region17: #{_forward.23} parent=11 // pred_check
          %p121 = pneg %p77
        $region18: #{_forward.23} parent=11 // pred_check_branch
          %123 = sbr.rel (%p121) target = $region20
        $region19: #{_forward.23} parent=11 // pred_region
          _
        $region20: #{_forward.23} parent=11 // pred_fallthru
          _
      $region12: #{_forward.23} parent=5 // pred_fallthru
        _
      %p124 = scmp.lt.s32.totalorder %s9, 2
      // Predicated region
      $region21: #{_forward.23} parent=5 // pred_check
        %p125 = pneg %p124
      $region22: #{_forward.23} parent=5 // pred_check_branch
        %127 = sbr.rel (%p125) target = $region24
      $region23: #{_forward.23} parent=5 // pred_region
        // Predicated region
        $region25: #{_forward.23} parent=23 // pred_check
          %p128 = pneg %p50
        $region26: #{_forward.23} parent=23 // pred_check_branch
          %130 = sbr.rel (%p128) target = $region28
        $region27: #{_forward.23} parent=23 // pred_region
          %s131 = sand.u32 %s40, 1
          %s132 = sand.u32 %s40, 1
          %s133 = smul.addr %s132, 128
          %s134 = scalar_lea.vmem [#allocation2], %s133
          %s135 = smul.u32 2, %s9
          %s136 = smul.addr %s135, 4
          %s137 = scalar_lea.vmem %s1, %s136
          // Predicated region
          $region29: #{_forward.23} parent=27 // pred_check
            _
          $region30: #{_forward.23} parent=27 // pred_check_branch
            %139 = sbr.rel (0) target = $region32
          $region31: #{_forward.23} parent=27 // pred_region
            // Predicated region
            $region33: #{_forward.23} parent=31 // pred_check
              _
            $region34: #{_forward.23} parent=31 // pred_check_branch
              %141 = sbr.rel (0) target = $region36
            $region35: #{_forward.23} parent=31 // pred_region
              // Predicated region
              $region48: #{_forward.23} parent=35 // pred_check
                _
              $region49: #{_forward.23} parent=35 // pred_check_branch
                %187 = sbr.rel (0) target = $region51
              $region50: #{_forward.23} parent=35 // pred_region
                loop: start=0, step=1, limit=1
                $region52: #{_forward.23} parent=50 // loop_pre_header
                  _
                $region53: #{_forward.23} parent=50 // loop_header
                  %s189 = sphi 0, %s193
                  %p190 = scmp.ge.s32.totalorder %s189, 1
                  %s194 = sphi %s137, %s137
                  %s195 = sphi %s134, %s134
                $region54: #{_forward.23} parent=50 // loop_header_branch
                  %192 = sbr.rel (%p190) target = $region58
                $region55: #{_forward.23} parent=50 // loop_body
                  %v196 = vld [vmem:[%s194] sm:$0xff]
                  %197 = vst [vmem:[%s195] sm:$0xff] %v196
                  %v198 = vld [vmem:[%s194 + $0x10] sm:$0xff]
                  %199 = vst [vmem:[%s195 + $0x8] sm:$0xff] %v198
                  %v200 = vld [vmem:[%s194 + $0x20] sm:$0xff]
                  %201 = vst [vmem:[%s195 + $0x10] sm:$0xff] %v200
                  %v202 = vld [vmem:[%s194 + $0x30] sm:$0xff]
                  %203 = vst [vmem:[%s195 + $0x18] sm:$0xff] %v202
                  %v204 = vld [vmem:[%s194 + $0x40] sm:$0xff]
                  %205 = vst [vmem:[%s195 + $0x20] sm:$0xff] %v204
                  %v206 = vld [vmem:[%s194 + $0x50] sm:$0xff]
                  %207 = vst [vmem:[%s195 + $0x28] sm:$0xff] %v206
                  %v208 = vld [vmem:[%s194 + $0x60] sm:$0xff]
                  %209 = vst [vmem:[%s195 + $0x30] sm:$0xff] %v208
                  %v210 = vld [vmem:[%s194 + $0x70] sm:$0xff]
                  %211 = vst [vmem:[%s195 + $0x38] sm:$0xff] %v210
                  %v212 = vld [vmem:[%s194 + $0x80] sm:$0xff]
                  %213 = vst [vmem:[%s195 + $0x40] sm:$0xff] %v212
                  %v214 = vld [vmem:[%s194 + $0x90] sm:$0xff]
                  %215 = vst [vmem:[%s195 + $0x48] sm:$0xff] %v214
                  %v216 = vld [vmem:[%s194 + $0xa0] sm:$0xff]
                  %217 = vst [vmem:[%s195 + $0x50] sm:$0xff] %v216
                  %v218 = vld [vmem:[%s194 + $0xb0] sm:$0xff]
                  %219 = vst [vmem:[%s195 + $0x58] sm:$0xff] %v218
                  %v220 = vld [vmem:[%s194 + $0xc0] sm:$0xff]
                  %221 = vst [vmem:[%s195 + $0x60] sm:$0xff] %v220
                  %v222 = vld [vmem:[%s194 + $0xd0] sm:$0xff]
                  %223 = vst [vmem:[%s195 + $0x68] sm:$0xff] %v222
                  %v224 = vld [vmem:[%s194 + $0xe0] sm:$0xff]
                  %225 = vst [vmem:[%s195 + $0x70] sm:$0xff] %v224
                  %v226 = vld [vmem:[%s194 + $0xf0] sm:$0xff]
                  %227 = vst [vmem:[%s195 + $0x78] sm:$0xff] %v226
                $region56: #{_forward.23} parent=50 // loop_footer
                  %s193 = sadd.s32 1, %s189
                $region57: #{_forward.23} parent=50 // loop_footer_branch
                  %188 = sbr.rel target = $region53
                $region58: #{_forward.23} parent=50 // loop_exit
                  _
              $region51: #{_forward.23} parent=35 // pred_fallthru
                _
              // Predicated region
              $region59: #{_forward.23} parent=35 // pred_check
                _
              $region60: #{_forward.23} parent=35 // pred_check_branch
                %229 = sbr.rel target = $region62
              $region61: #{_forward.23} parent=35 // pred_region
                _
              $region62: #{_forward.23} parent=35 // pred_fallthru
                _
            $region36: #{_forward.23} parent=31 // pred_fallthru
              _
            // Predicated region
            $region37: #{_forward.23} parent=31 // pred_check
              _
            $region38: #{_forward.23} parent=31 // pred_check_branch
              %143 = sbr.rel target = $region40
            $region39: #{_forward.23} parent=31 // pred_region
              %s145 = ssub.s32 256, 1
              loop: start=0, step=1, limit=1
              $region41: #{_forward.23} parent=39 // loop_pre_header
                _
              $region42: #{_forward.23} parent=39 // loop_header
                %s147 = sphi 0, %s151
                %p148 = scmp.ge.s32.totalorder %s147, 1
                %s152 = sphi %s137, %s137
                %s153 = sphi %s134, %s134
              $region43: #{_forward.23} parent=39 // loop_header_branch
                %150 = sbr.rel (%p148) target = $region47
              $region44: #{_forward.23} parent=39 // loop_body
                %v154 = vld [vmem:[%s152] sm:%s145]
                %155 = vst [vmem:[%s153] sm:%s145] %v154
                %v156 = vld [vmem:[%s152 + $0x10] sm:%s145]
                %157 = vst [vmem:[%s153 + $0x8] sm:%s145] %v156
                %v158 = vld [vmem:[%s152 + $0x20] sm:%s145]
                %159 = vst [vmem:[%s153 + $0x10] sm:%s145] %v158
                %v160 = vld [vmem:[%s152 + $0x30] sm:%s145]
                %161 = vst [vmem:[%s153 + $0x18] sm:%s145] %v160
                %v162 = vld [vmem:[%s152 + $0x40] sm:%s145]
                %163 = vst [vmem:[%s153 + $0x20] sm:%s145] %v162
                %v164 = vld [vmem:[%s152 + $0x50] sm:%s145]
                %165 = vst [vmem:[%s153 + $0x28] sm:%s145] %v164
                %v166 = vld [vmem:[%s152 + $0x60] sm:%s145]
                %167 = vst [vmem:[%s153 + $0x30] sm:%s145] %v166
                %v168 = vld [vmem:[%s152 + $0x70] sm:%s145]
                %169 = vst [vmem:[%s153 + $0x38] sm:%s145] %v168
                %v170 = vld [vmem:[%s152 + $0x80] sm:%s145]
                %171 = vst [vmem:[%s153 + $0x40] sm:%s145] %v170
                %v172 = vld [vmem:[%s152 + $0x90] sm:%s145]
                %173 = vst [vmem:[%s153 + $0x48] sm:%s145] %v172
                %v174 = vld [vmem:[%s152 + $0xa0] sm:%s145]
                %175 = vst [vmem:[%s153 + $0x50] sm:%s145] %v174
                %v176 = vld [vmem:[%s152 + $0xb0] sm:%s145]
                %177 = vst [vmem:[%s153 + $0x58] sm:%s145] %v176
                %v178 = vld [vmem:[%s152 + $0xc0] sm:%s145]
                %179 = vst [vmem:[%s153 + $0x60] sm:%s145] %v178
                %v180 = vld [vmem:[%s152 + $0xd0] sm:%s145]
                %181 = vst [vmem:[%s153 + $0x68] sm:%s145] %v180
                %v182 = vld [vmem:[%s152 + $0xe0] sm:%s145]
                %183 = vst [vmem:[%s153 + $0x70] sm:%s145] %v182
                %v184 = vld [vmem:[%s152 + $0xf0] sm:%s145]
                %185 = vst [vmem:[%s153 + $0x78] sm:%s145] %v184
              $region45: #{_forward.23} parent=39 // loop_footer
                %s151 = sadd.s32 1, %s147
              $region46: #{_forward.23} parent=39 // loop_footer_branch
                %146 = sbr.rel target = $region42
              $region47: #{_forward.23} parent=39 // loop_exit
                _
            $region40: #{_forward.23} parent=31 // pred_fallthru
              _
          $region32: #{_forward.23} parent=27 // pred_fallthru
            _
          %230 = vnop
        $region28: #{_forward.23} parent=23 // pred_fallthru
          _
      $region24: #{_forward.23} parent=5 // pred_fallthru
        _
      %p231 = scmp.le.s32.totalorder 1, %s9
      %p232 = scmp.lt.s32.totalorder %s9, 3
      %p233 = pnand %p231, %p232
      %p234 = pneg %p233
      // Predicated region
      $region63: #{_forward.23} parent=5 // pred_check
        _
      $region64: #{_forward.23} parent=5 // pred_check_branch
        %236 = sbr.rel (%p233) target = $region66
      $region65: #{_forward.23} parent=5 // pred_region
        %s237 = ssub.s32 %s9, 1
        %s238 = sand.u32 %s43, 1
        %s239 = sand.u32 %s43, 1
        %s240 = smul.addr %s239, 128
        %s241 = scalar_lea.vmem [#allocation2], %s240
        // Predicated region
        $region67: #{_forward.23} parent=65 // pred_check
          %p242 = pneg %p56
        $region68: #{_forward.23} parent=65 // pred_check_branch
          %244 = sbr.rel (%p242) target = $region70
        $region69: #{_forward.23} parent=65 // pred_region
          _
        $region70: #{_forward.23} parent=65 // pred_fallthru
          _
        %p245 = pneg %p30
        %p246 = pneg %p27
        %s247 = sand.u32 %s43, 1
        %s248 = sand.u32 %s43, 1
        %s249 = smul.addr %s248, 128
        %s250 = scalar_lea.vmem [#allocation2], %s249
        %p251 = pneg %p56
        %p252 = pneg %p53
        %p253 = pneg %p77
        %p254 = pneg %p74
        %p255 = pneg %p103
        %p256 = pneg %p100
        %s257 = smul.u32 2, %s14
        %p258 = scmp.lt.s32.totalorder %s257, 3
        %s259 = scalar_select %p258, %s257, 3
        %s260 = smul.addr %s259, 8
        %s261 = scalar_lea.vmem %s3, %s260
        %s262 = smul.u32 2, %s14
        %s263 = smul.u32 2, %s14
        %p264 = scmp.lt.s32.totalorder %s263, 3
        %s265 = scalar_select %p264, %s263, 3
        %s266 = smul.addr %s265, 8
        %s267 = scalar_lea.vmem %s3, %s266
        %s268 = smul.u32 2, %s14
        %v270 = vld [vmem:[%s0] sm:$0xf]
        %v271 = vld [vmem:[%s241] sm:$0xff]
        %v272 = vld [vmem:[%s241 + $0x8] sm:$0xff]
        %v273 = vld [vmem:[%s241 + $0x10] sm:$0xff]
        %v274 = vld [vmem:[%s241 + $0x18] sm:$0xff]
        %v275 = vld [vmem:[%s241 + $0x20] sm:$0xff]
        %v276 = vld [vmem:[%s241 + $0x28] sm:$0xff]
        %v277 = vld [vmem:[%s241 + $0x30] sm:$0xff]
        %v278 = vld [vmem:[%s241 + $0x38] sm:$0xff]
        %v279 = vld [vmem:[%s241 + $0x40] sm:$0xff]
        %v280 = vld [vmem:[%s241 + $0x48] sm:$0xff]
        %v281 = vld [vmem:[%s241 + $0x50] sm:$0xff]
        %v282 = vld [vmem:[%s241 + $0x58] sm:$0xff]
        %v283 = vld [vmem:[%s241 + $0x60] sm:$0xff]
        %v284 = vld [vmem:[%s241 + $0x68] sm:$0xff]
        %v285 = vld [vmem:[%s241 + $0x70] sm:$0xff]
        %v286 = vld [vmem:[%s241 + $0x78] sm:$0xff]
        %v287 = vld [vmem:[%s2] sm:$0xff]
        %289 = vset.pattern.permute.xlu0 0
        %290 = vperm.xlu0 %289, %v287
        %v291 = vpop.permute.xlu0 %290
        %v309 = vunpack.c.l.b16 %v271
        %v310 = vunpack.c.h.b16 %v271
        %v311 = vunpack.c.l.b16 %v272
        %v312 = vunpack.c.h.b16 %v272
        %v313 = vunpack.c.l.b16 %v273
        %v314 = vunpack.c.h.b16 %v273
        %v315 = vunpack.c.l.b16 %v274
        %v316 = vunpack.c.h.b16 %v274
        %v317 = vunpack.c.l.b16 %v275
        %v318 = vunpack.c.h.b16 %v275
        %v319 = vunpack.c.l.b16 %v276
        %v320 = vunpack.c.h.b16 %v276
        %v321 = vunpack.c.l.b16 %v277
        %v322 = vunpack.c.h.b16 %v277
        %v323 = vunpack.c.l.b16 %v278
        %v324 = vunpack.c.h.b16 %v278
        %v325 = vunpack.c.l.b16 %v279
        %v326 = vunpack.c.h.b16 %v279
        %v327 = vunpack.c.l.b16 %v280
        %v328 = vunpack.c.h.b16 %v280
        %v329 = vunpack.c.l.b16 %v281
        %v330 = vunpack.c.h.b16 %v281
        %v331 = vunpack.c.l.b16 %v282
        %v332 = vunpack.c.h.b16 %v282
        %v333 = vunpack.c.l.b16 %v283
        %v334 = vunpack.c.h.b16 %v283
        %v335 = vunpack.c.l.b16 %v284
        %v336 = vunpack.c.h.b16 %v284
        %v337 = vunpack.c.l.b16 %v285
        %v338 = vunpack.c.h.b16 %v285
        %v339 = vunpack.c.l.b16 %v286
        %v340 = vunpack.c.h.b16 %v286
        %v341 = vpack.c.b16 %v311, %v309
        %v342 = vpack.c.b16 %v312, %v310
        %v343 = vpack.c.b16 %v315, %v313
        %v344 = vpack.c.b16 %v316, %v314
        %v345 = vpack.c.b16 %v319, %v317
        %v346 = vpack.c.b16 %v320, %v318
        %v347 = vpack.c.b16 %v323, %v321
        %v348 = vpack.c.b16 %v324, %v322
        %v349 = vpack.c.b16 %v327, %v325
        %v350 = vpack.c.b16 %v328, %v326
        %v351 = vpack.c.b16 %v331, %v329
        %v352 = vpack.c.b16 %v332, %v330
        %v353 = vpack.c.b16 %v335, %v333
        %v354 = vpack.c.b16 %v336, %v334
        %v355 = vpack.c.b16 %v339, %v337
        %v356 = vpack.c.b16 %v340, %v338
        %373 = vmatprep.subr.bf16.mxu0 %v356
        %374 = vmatpush1.bf16.msra.mxu0 %v355
        %375 = vmatprep.subr.bf16.mxu0 %v354
        %376 = vmatpush1.bf16.msra.mxu0 %v353
        %377 = vmatprep.subr.bf16.mxu0 %v352
        %378 = vmatpush1.bf16.msra.mxu0 %v351
        %379 = vmatprep.subr.bf16.mxu0 %v350
        %380 = vmatpush1.bf16.msra.mxu0 %v349
        %381 = vmatprep.subr.bf16.mxu0 %v348
        %382 = vmatpush1.bf16.msra.mxu0 %v347
        %383 = vmatprep.subr.bf16.mxu0 %v346
        %384 = vmatpush1.bf16.msra.mxu0 %v345
        %385 = vmatprep.subr.bf16.mxu0 %v344
        %386 = vmatpush1.bf16.msra.mxu0 %v343
        %387 = vmatprep.subr.bf16.mxu0 %v342
        %388 = vmatpush1.bf16.msra.mxu0 %v341
        %389 = vmatprep.subr.bf16.mxu0 0
        %390 = vmatpush2.bf16.msra.mxu0 0
        %391 = vmatprep.subr.bf16.mxu0 0
        %392 = vmatpush2.bf16.msra.mxu0 0
        %393 = vmatprep.subr.bf16.mxu0 0
        %394 = vmatpush2.bf16.msra.mxu0 0
        %395 = vmatprep.subr.bf16.mxu0 0
        %396 = vmatpush2.bf16.msra.mxu0 0
        %397 = vmatprep.subr.bf16.mxu0 0
        %398 = vmatpush2.bf16.msra.mxu0 0
        %399 = vmatprep.subr.bf16.mxu0 0
        %400 = vmatpush2.bf16.msra.mxu0 0
        %401 = vmatprep.subr.bf16.mxu0 0
        %402 = vmatpush2.bf16.msra.mxu0 0
        %403 = vmatprep.subr.bf16.mxu0 0
        %404 = vmatpush2.bf16.msra.mxu0 0
        %405 = vmatprep.mubr.bf16.mxu0 0
        %406 = vmatmul.mubr.bf16.gmra.mxu0 %v270
        %v407 = vpop.f32.mrf.mxu0
        %v408 = vadd.f32 %v291, %v407
        %v409 = vpop.f32.mrf.mxu0
        %v410 = vadd.f32 %v291, %v409
        %v411 = vpop.f32.mrf.mxu0
        %v412 = vpop.f32.mrf.mxu0
        %413 = vdwg.mxu0
        %v414 = vsub.f32 0.0, %v408
        %v415 = vsub.f32 0.0, %v410
        %v416 = vmul.f32 %v414, 1.442695
        %v417 = vpow.pop %v416
        %v418 = vmul.f32 %v415, 1.442695
        %v419 = vpow.pop %v418
        %v420 = vadd.f32 %v417, 1.0
        %v421 = vadd.f32 %v419, 1.0
        %v422 = vrcp.pop %v420
        %v423 = vmul.f32 1.0, %v422
        %v424 = vrcp.pop %v421
        %v425 = vmul.f32 1.0, %v424
        %426 = vst [vmem:[%s267] sm:$0xff] %v423
        %427 = vst [vmem:[%s267 + $0x8] sm:$0xff] %v425
        %s428 = smul.u32 2, %s14
        %p429 = scmp.lt.s32.totalorder %s428, 3
        %s430 = scalar_select %p429, %s428, 3
        %s431 = smul.addr %s430, 8
        %s432 = scalar_lea.vmem %s3, %s431
        // Predicated region
        $region71: #{_forward.23} parent=65 // pred_check
          %p433 = pneg %p100
        $region72: #{_forward.23} parent=65 // pred_check_branch
          %435 = sbr.rel (%p433) target = $region74
        $region73: #{_forward.23} parent=65 // pred_region
          %s436 = smul.u32 2, %s14
        $region74: #{_forward.23} parent=65 // pred_fallthru
          _
      $region66: #{_forward.23} parent=5 // pred_fallthru
        _
      %p437 = scmp.le.s32.totalorder 2, %s9
      // Predicated region
      $region75: #{_forward.23} parent=5 // pred_check
        %p438 = pneg %p437
      $region76: #{_forward.23} parent=5 // pred_check_branch
        %440 = sbr.rel (%p438) target = $region78
      $region77: #{_forward.23} parent=5 // pred_region
        %s441 = ssub.s32 %s9, 2
        // Predicated region
        $region79: #{_forward.23} parent=77 // pred_check
          %p442 = pneg %p106
        $region80: #{_forward.23} parent=77 // pred_check_branch
          %444 = sbr.rel (%p442) target = $region82
        $region81: #{_forward.23} parent=77 // pred_region
          %s445 = smul.u32 2, %s15
          %p446 = scmp.lt.s32.totalorder %s445, 3
          %s447 = scalar_select %p446, %s445, 3
          %s448 = smul.addr %s447, 8
          %s449 = scalar_lea.vmem %s3, %s448
        $region82: #{_forward.23} parent=77 // pred_fallthru
          _
      $region78: #{_forward.23} parent=5 // pred_fallthru
        _
    $region6: #{_forward.23} parent=1 // loop_footer
      %s13 = sadd.s32 1, %s9
    $region7: #{_forward.23} parent=1 // loop_footer_branch
      %8 = sbr.rel target = $region3
    $region8: #{_forward.23} parent=1 // loop_exit
      _

</llo_original>
